<compile_context>
chip_gen: v5e
topology: v5e:2x2
jax: 0.10.0
libtpu: 0.0.40
codegen_flags: <defaults>
</compile_context>

<pallas_src>
import functools
import numpy as np
import jax
import jax.numpy as jnp
from jax import lax
from jax.experimental import pallas as pl
from jax.experimental.pallas import tpu as pltpu


# ----------------------------------------------------------------------------
# helpers (host-side numpy construction of structural matrices)
# ----------------------------------------------------------------------------
def upsample_matrix(n_in, n_out):
    """Bilinear upsample (align_corners=True): out = U @ x, U is (n_out, n_in)."""
    U = np.zeros((n_out, n_in), np.float32)
    if n_out == 1 or n_in == 1:
        U[:, 0] = 1.0
        return U
    for i in range(n_out):
        src = i * (n_in - 1) / (n_out - 1)
        i0 = int(np.floor(src))
        f = src - i0
        if i0 >= n_in - 1:
            U[i, n_in - 1] = 1.0
        else:
            U[i, i0] = 1.0 - f
            U[i, i0 + 1] = f
    return U


def pool_token_matrix(H, W):
    """AvgPool2d(2,2) in token space: x_pool_tok = x_tok @ P, P is (H*W, H2*W2)."""
    H2, W2 = H // 2, W // 2
    P = np.zeros((H * W, H2 * W2), np.float32)
    for h2 in range(H2):
        for w2 in range(W2):
            n = h2 * W2 + w2
            for dh in range(2):
                for dw in range(2):
                    P[(2 * h2 + dh) * W + (2 * w2 + dw), n] = 0.25
    return P


def upsample_token_matrix(H2, W2, H, W):
    """Bilinear x2 upsample in token space: up_tok = p_tok @ U, U is (H2*W2, H*W)."""
    Uh = upsample_matrix(H2, H)          # (H, H2)
    Uw = upsample_matrix(W2, W)          # (W, W2)
    U = np.einsum("ha,wb->abhw", Uh, Uw).reshape(H2 * W2, H * W)
    return U.astype(np.float32)


def shift_token_h(H, W, d):
    """Token-space H shift: (x_tok @ S)[n=h*W+w] = x[h+d, w] (zero pad)."""
    N = H * W
    S = np.zeros((N, N), np.float32)
    for h in range(H):
        for w in range(W):
            hs = h + d
            if 0 <= hs < H:
                S[hs * W + w, h * W + w] = 1.0
    return S


def shift_token_w(H, W, d):
    """Token-space W shift: (x_tok @ S)[n=h*W+w] = x[h, w+d] (zero pad)."""
    N = H * W
    S = np.zeros((N, N), np.float32)
    for h in range(H):
        for w in range(W):
            ws = w + d
            if 0 <= ws < W:
                S[h * W + ws, h * W + w] = 1.0
    return S


def shift_token_hw(H, W, a, b):
    """Token-space (H,W) shift: (x_tok @ S)[n=h*W+w] = x[h+a, w+b] (zero pad)."""
    N = H * W
    S = np.zeros((N, N), np.float32)
    for h in range(H):
        for w in range(W):
            hs, ws = h + a, w + b
            if 0 <= hs < H and 0 <= ws < W:
                S[hs * W + ws, h * W + w] = 1.0
    return S


def _gelu(x):
    # TODO(synk): tanh approximation of GELU (PyTorch default is exact erf).
    c = 0.7978845608028654  # sqrt(2/pi)
    return 0.5 * x * (1.0 + jnp.tanh(c * (x + 0.044715 * x * x * x)))


# column indices into the packed per-channel bias/scale array `bstack` (C, 20)
# 0 bQ, 1 bK, 2 bL, 3 bo, 4 bp,
# 5 bdw_h, 6 b1h, 7 bnh_sc, 8 bnh_sh,
# 9 bdw_v, 10 b1v, 11 bnv_sc, 12 bnv_sh,
# 13 bch, 14 ln_g, 15 ln_b,
# 16 bdw3, 17 bd1, 18 bnd_sc, 19 bnd_sh
#
# indices into stacked (C, C) weights `Wstack` (9, C, C):
# 0 WQ, 1 WK, 2 WL, 3 Wo, 4 Wp, 5 W1h, 6 W1v, 7 Wch, 8 Wd
#
# columns of `taps` (C, 19): 0..4 dw_h taps, 5..9 dw_v taps, 10..18 dw3 (3x3 row-major)


# ----------------------------------------------------------------------------
# the fused kernel (one batch element per grid step)
# ----------------------------------------------------------------------------
def cpgm_kernel(x_ref, poolt_ref, sh_ref, sv_ref, s3_ref, upt_ref,
                w_ref, b_ref, t_ref, o_ref, *, scale):
    f32 = jnp.float32
    X = x_ref[0]                          # (C, Nf)  input tokens
    bvec = b_ref[...]                     # (C, 20)  per-channel biases / BN scale-shift
    tvec = t_ref[...]                     # (C, 19)  depthwise taps

    def col(i):                           # (C, 1) per-channel column, broadcasts over N
        return bvec[:, i:i + 1]

    def tap(i):
        return tvec[:, i:i + 1]

    def dot(a, b):
        return jnp.dot(a, b, preferred_element_type=f32)

    # ---- AvgPool2d(2,2): one token-space matmul, all channels at once -------
    Xp = dot(X, poolt_ref[...])                                  # (C, N)

    # ---- LPG -----------------------------------------------------------------
    gap = jnp.mean(Xp, axis=1, keepdims=True)                    # (C, 1)
    Xg = gap * Xp
    q = dot(w_ref[0], Xg) + col(0)
    k = dot(w_ref[1], Xg) + col(1)
    v = jax.nn.sigmoid(q) * k + Xg
    prompt_l = dot(w_ref[2], v) + col(2)                         # (C, N)

    # ---- HPG -----------------------------------------------------------------
    # depthwise (5,1) along H / (1,5) along W via shared shift matmuls + taps
    acc_h = tap(0) * dot(Xp, sh_ref[0])
    acc_v = tap(5) * dot(Xp, sv_ref[0])
    for kk in range(1, 5):
        acc_h = acc_h + tap(kk) * dot(Xp, sh_ref[kk])
        acc_v = acc_v + tap(5 + kk) * dot(Xp, sv_ref[kk])
    g_h = _gelu(acc_h + col(5))
    g_v = _gelu(acc_v + col(9))
    xh = (dot(w_ref[5], g_h) + col(6)) * col(7) + col(8)         # 1x1 conv + BN(eval)
    xv = (dot(w_ref[6], g_v) + col(10)) * col(11) + col(12)
    prompt_h = dot(w_ref[7], xh + xv) + col(13)                  # conv_h (1x1)

    # ---- PGC: linear_o + attention + linear_p + LayerNorm --------------------
    x_v = dot(w_ref[3], Xp) + col(3)                             # V tokens (C, N)
    q_s = prompt_h * scale                                       # fold scale into Q
    # transposed attention: attn_t[m, n] = sum_c K[c, m] * Qs[c, n]
    attn_t = lax.dot_general(prompt_l, q_s, (((0,), (0,)), ((), ())),
                             preferred_element_type=f32)         # (N, N)
    m = jnp.max(attn_t, axis=0, keepdims=True)                   # (1, N)
    e = jnp.exp(attn_t - m)
    s = jnp.sum(e, axis=0, keepdims=True)                        # (1, N)
    p0 = dot(x_v, e)                                             # (C, N) un-normalized
    prompt = p0 * pl.reciprocal(s, approx=True)                  # deferred softmax norm
    p = dot(w_ref[4], prompt) + col(4) + x_v
    # LayerNorm over channels (axis 0 == last dim of the (B, N, C) view)
    mu = jnp.mean(p, axis=0, keepdims=True)
    var = jnp.mean((p - mu) ** 2, axis=0, keepdims=True)
    pn = (p - mu) * lax.rsqrt(var + 1e-5) * col(14) + col(15)    # (C, N)

    # ---- bilinear x2 upsample + dsc(depthwise3x3, GELU, 1x1, BN) + residual --
    up = dot(pn, upt_ref[...])                                   # (C, Nf)
    acc = tap(10) * dot(up, s3_ref[0])
    for kk in range(1, 9):
        acc = acc + tap(10 + kk) * dot(up, s3_ref[kk])
    g3 = _gelu(acc + col(16))
    d = (dot(w_ref[8], g3) + col(17)) * col(18) + col(19)
    o_ref[0] = d + up                                            # single lane-dense store


# ----------------------------------------------------------------------------
# wrapper
# ----------------------------------------------------------------------------
def cpgm_forward(x, params):
    B, C, H, W = x.shape
    H2, W2 = H // 2, W // 2
    N, Nf = H2 * W2, H * W
    x_tok = x.reshape(B, C, Nf)

    def wspec(shape):
        nd = len(shape)
        return pl.BlockSpec(shape, lambda b, _nd=nd: (0,) * _nd)

    tok_spec = pl.BlockSpec((1, C, Nf), lambda b: (b, 0, 0))

    out_tok = pl.pallas_call(
        functools.partial(cpgm_kernel, scale=C ** (-0.5)),
        out_shape=jax.ShapeDtypeStruct((B, C, Nf), jnp.float32),
        grid=(B,),
        in_specs=[tok_spec,
                  wspec((Nf, N)),          # PoolT
                  wspec((5, N, N)),        # SH  (depthwise (5,1) shifts)
                  wspec((5, N, N)),        # SV  (depthwise (1,5) shifts)
                  wspec((9, Nf, Nf)),      # S3  (depthwise 3x3 shifts)
                  wspec((N, Nf)),          # UpT (bilinear x2)
                  wspec((9, C, C)),        # Wstack
                  wspec((C, 20)),          # bstack
                  wspec((C, 19))],         # taps
        out_specs=tok_spec,
        compiler_params=pltpu.CompilerParams(
            dimension_semantics=("parallel",)),
    )(x_tok, params["PoolT"], params["SH"], params["SV"], params["S3"],
      params["UpT"], params["Wstack"], params["bstack"], params["taps"])

    return out_tok.reshape(B, C, H, W)


# ----------------------------------------------------------------------------
# deterministic synthetic parameters (shapes follow CPGM.__init__)
# ----------------------------------------------------------------------------
def make_params(C, H, W, key):
    H2, W2 = H // 2, W // 2
    ks = iter(jax.random.split(key, 64))

    def w(shape, s=0.3):
        return jax.random.normal(next(ks), shape, dtype=jnp.float32) * s

    def bn_fold():
        gamma = 1.0 + w((C,), 0.1)
        beta = w((C,), 0.1)
        rmean = w((C,), 0.1)
        rvar = 1.0 + jnp.abs(w((C,), 0.1))
        sc = gamma * lax.rsqrt(rvar + 1e-5)
        sh = beta - rmean * sc
        return sc, sh

    WQ, bQ = w((C, C)), w((C,), 0.1)
    WK, bK = w((C, C)), w((C,), 0.1)
    WL, bL = w((C, C)), w((C,), 0.1)
    Wo, bo = w((C, C)), w((C,), 0.1)
    Wp, bp = w((C, C)), w((C,), 0.1)
    ln_g = 1.0 + w((C,), 0.1)
    ln_b = w((C,), 0.1)

    dwh, bdwh = w((C, 5)), w((C,), 0.1)          # sc_h depthwise (5,1)
    W1h, b1h = w((C, C)), w((C,), 0.1)
    bnh_sc, bnh_sh = bn_fold()
    dwv, bdwv = w((C, 5)), w((C,), 0.1)          # sc_v depthwise (1,5)
    W1v, b1v = w((C, C)), w((C,), 0.1)
    bnv_sc, bnv_sh = bn_fold()
    Wch, bch = w((C, C)), w((C,), 0.1)           # conv_h 1x1
    dw3, bdw3 = w((C, 3, 3)), w((C,), 0.1)       # dsc depthwise 3x3
    Wd, bd1 = w((C, C)), w((C,), 0.1)
    bnd_sc, bnd_sh = bn_fold()

    Wstack = jnp.stack([WQ, WK, WL, Wo, Wp, W1h, W1v, Wch, Wd])          # (9, C, C)
    bstack = jnp.stack([bQ, bK, bL, bo, bp,
                        bdwh, b1h, bnh_sc, bnh_sh,
                        bdwv, b1v, bnv_sc, bnv_sh,
                        bch, ln_g, ln_b,
                        bdw3, bd1, bnd_sc, bnd_sh], axis=1)              # (C, 20)
    taps = jnp.concatenate([dwh, dwv, dw3.reshape(C, 9)], axis=1)        # (C, 19)

    PoolT = jnp.asarray(pool_token_matrix(H, W))
    UpT = jnp.asarray(upsample_token_matrix(H2, W2, H, W))
    SH = jnp.asarray(np.stack([shift_token_h(H2, W2, kk - 2) for kk in range(5)]))
    SV = jnp.asarray(np.stack([shift_token_w(H2, W2, kk - 2) for kk in range(5)]))
    S3 = jnp.asarray(np.stack([shift_token_hw(H, W, a - 1, b - 1)
                               for a in range(3) for b in range(3)]))

    raw = dict(WQ=WQ, bQ=bQ, WK=WK, bK=bK, WL=WL, bL=bL, Wo=Wo, bo=bo,
               Wp=Wp, bp=bp, ln_g=ln_g, ln_b=ln_b,
               dwh=dwh, bdwh=bdwh, W1h=W1h, b1h=b1h, bnh_sc=bnh_sc, bnh_sh=bnh_sh,
               dwv=dwv, bdwv=bdwv, W1v=W1v, b1v=b1v, bnv_sc=bnv_sc, bnv_sh=bnv_sh,
               Wch=Wch, bch=bch, dw3=dw3, bdw3=bdw3, Wd=Wd, bd1=bd1,
               bnd_sc=bnd_sc, bnd_sh=bnd_sh)

    return dict(PoolT=PoolT, UpT=UpT, SH=SH, SV=SV, S3=S3,
                Wstack=Wstack, bstack=bstack, taps=taps, raw=raw)


# ----------------------------------------------------------------------------
# pure-JAX reference (mirrors the PyTorch module, eval-mode BN, tanh GELU)
# ----------------------------------------------------------------------------
def cpgm_reference(x, raw):
    B, C, H, W = x.shape
    H2, W2 = H // 2, W // 2
    N = H2 * W2

    xp = x.reshape(B, C, H2, 2, W2, 2).mean(axis=(3, 5))          # AvgPool2d(2,2)

    # LPG
    xf = xp.reshape(B, C, N)
    gap = xf.mean(axis=2, keepdims=True)
    xg_t = jnp.swapaxes(gap * xf, 1, 2)                           # (B, N, C)
    q = xg_t @ raw["WQ"].T + raw["bQ"]
    k = xg_t @ raw["WK"].T + raw["bK"]
    v = jax.nn.sigmoid(q) * k + xg_t
    prompt_l = jnp.swapaxes(v @ raw["WL"].T + raw["bL"], 1, 2)    # (B, C, N)

    # HPG
    def conv1x1(z, Wm, bv):
        return jnp.einsum("oc,bchw->bohw", Wm, z) + bv[None, :, None, None]

    def bn(z, sc, sh):
        return z * sc[None, :, None, None] + sh[None, :, None, None]

    zp = jnp.pad(xp, ((0, 0), (0, 0), (2, 2), (0, 0)))
    dh = sum(raw["dwh"][None, :, kk, None, None] * zp[:, :, kk:kk + H2, :]
             for kk in range(5)) + raw["bdwh"][None, :, None, None]
    zp = jnp.pad(xp, ((0, 0), (0, 0), (0, 0), (2, 2)))
    dv = sum(raw["dwv"][None, :, kk, None, None] * zp[:, :, :, kk:kk + W2]
             for kk in range(5)) + raw["bdwv"][None, :, None, None]
    xh = bn(conv1x1(_gelu(dh), raw["W1h"], raw["b1h"]), raw["bnh_sc"], raw["bnh_sh"])
    xv = bn(conv1x1(_gelu(dv), raw["W1v"], raw["b1v"]), raw["bnv_sc"], raw["bnv_sh"])
    prompt_h = conv1x1(xh + xv, raw["Wch"], raw["bch"]).reshape(B, C, N)

    # PGC
    xV = jnp.swapaxes(xf, 1, 2) @ raw["Wo"].T + raw["bo"]         # (B, N, C)
    xK = jnp.swapaxes(prompt_l, 1, 2)
    xQ = jnp.swapaxes(prompt_h, 1, 2)
    attn = jnp.einsum("bnc,bmc->bnm", xQ, xK) * (C ** (-0.5))
    sm = jax.nn.softmax(attn, axis=-1)
    prompt = jnp.einsum("bnm,bmc->bnc", sm, xV)
    p = prompt @ raw["Wp"].T + raw["bp"] + xV
    mu = p.mean(axis=-1, keepdims=True)
    var = ((p - mu) ** 2).mean(axis=-1, keepdims=True)
    pn = (p - mu) * lax.rsqrt(var + 1e-5) * raw["ln_g"] + raw["ln_b"]
    pn = jnp.swapaxes(pn, 1, 2).reshape(B, C, H2, W2)

    # bilinear x2 upsample (align_corners=True)
    Uh = jnp.asarray(upsample_matrix(H2, H))
    Uw = jnp.asarray(upsample_matrix(W2, W))
    up = jnp.einsum("xcab,wb->xcaw", pn, Uw)
    up = jnp.einsum("xcaw,ha->xchw", up, Uh)                      # (B, C, H, W)

    # dsc
    zp = jnp.pad(up, ((0, 0), (0, 0), (1, 1), (1, 1)))
    d3 = 0.0
    for a in range(3):
        for b in range(3):
            d3 = d3 + raw["dw3"][None, :, a, b, None, None] * zp[:, :, a:a + H, b:b + W]
    d3 = d3 + raw["bdw3"][None, :, None, None]
    d = bn(conv1x1(_gelu(d3), raw["Wd"], raw["bd1"]), raw["bnd_sc"], raw["bnd_sh"])
    return d + up


if __name__ == "__main__":
    B, C, H, W = 2, 4, 16, 16
    x = jax.random.normal(jax.random.PRNGKey(0), (B, C, H, W), dtype=jnp.float32)
    params = make_params(C, H, W, jax.random.PRNGKey(42))

    out = jax.jit(cpgm_forward)(x, params)
    out = jax.block_until_ready(out)

    assert out.shape == (B, C, H, W), out.shape
    assert bool(jnp.all(jnp.isfinite(out)))

    ref = cpgm_reference(x, params["raw"])
    ref = jax.block_until_ready(ref)
    err = float(jnp.max(jnp.abs(out - ref)))
    den = float(jnp.max(jnp.abs(ref))) + 1e-6
    # generous tolerance: only f32 accumulation order and approx reciprocal differ
    assert err <= 2e-2 * den + 2e-3, ("mismatch vs reference", err, den)

    print("KERNEL_OK")
</pallas_src>

<mosaic_0001>
module attributes {stable_mosaic.version = 11 : i64} {
  func.func @cpgm_kernel(%arg0: i32, %arg1: memref<1x4x256xf32, #tpu.memory_space<vmem>>, %arg2: memref<256x64xf32, #tpu.memory_space<vmem>>, %arg3: memref<5x64x64xf32, #tpu.memory_space<vmem>>, %arg4: memref<5x64x64xf32, #tpu.memory_space<vmem>>, %arg5: memref<9x256x256xf32, #tpu.memory_space<vmem>>, %arg6: memref<64x256xf32, #tpu.memory_space<vmem>>, %arg7: memref<9x4x4xf32, #tpu.memory_space<vmem>>, %arg8: memref<4x20xf32, #tpu.memory_space<vmem>>, %arg9: memref<4x19xf32, #tpu.memory_space<vmem>>, %arg10: memref<1x4x256xf32, #tpu.memory_space<vmem>>) attributes {dimension_semantics = [#tpu.dimension_semantics<parallel>], iteration_bounds = array<i64: 2>, scalar_prefetch = 0 : i64, scratch_operands = 0 : i64, tpu.core_type = #tpu.core_type<tc>, window_params = [{transform_indices = @transform_0, window_bounds = array<i64: 1, 4, 256>}, {pipeline_mode = #tpu.pipeline_mode<synchronous>, transform_indices = @transform_1, window_bounds = array<i64: 256, 64>}, {pipeline_mode = #tpu.pipeline_mode<synchronous>, transform_indices = @transform_2, window_bounds = array<i64: 5, 64, 64>}, {pipeline_mode = #tpu.pipeline_mode<synchronous>, transform_indices = @transform_3, window_bounds = array<i64: 5, 64, 64>}, {pipeline_mode = #tpu.pipeline_mode<synchronous>, transform_indices = @transform_4, window_bounds = array<i64: 9, 256, 256>}, {pipeline_mode = #tpu.pipeline_mode<synchronous>, transform_indices = @transform_5, window_bounds = array<i64: 64, 256>}, {pipeline_mode = #tpu.pipeline_mode<synchronous>, transform_indices = @transform_6, window_bounds = array<i64: 9, 4, 4>}, {pipeline_mode = #tpu.pipeline_mode<synchronous>, transform_indices = @transform_7, window_bounds = array<i64: 4, 20>}, {pipeline_mode = #tpu.pipeline_mode<synchronous>, transform_indices = @transform_8, window_bounds = array<i64: 4, 19>}, {transform_indices = @transform_9, window_bounds = array<i64: 1, 4, 256>}]} {
    %c0 = arith.constant 0 : index
    %c0_0 = arith.constant 0 : index
    %c0_1 = arith.constant 0 : index
    %0 = vector.load %arg1[%c0, %c0_0, %c0_1] : memref<1x4x256xf32, #tpu.memory_space<vmem>>, vector<1x4x256xf32>
    %1 = vector.shape_cast %0 : vector<1x4x256xf32> to vector<4x256xf32>
    %c0_2 = arith.constant 0 : index
    %c0_3 = arith.constant 0 : index
    %2 = vector.load %arg8[%c0_2, %c0_3] : memref<4x20xf32, #tpu.memory_space<vmem>>, vector<4x20xf32>
    %c0_4 = arith.constant 0 : index
    %c0_5 = arith.constant 0 : index
    %3 = vector.load %arg9[%c0_4, %c0_5] : memref<4x19xf32, #tpu.memory_space<vmem>>, vector<4x19xf32>
    %c0_6 = arith.constant 0 : index
    %c0_7 = arith.constant 0 : index
    %4 = vector.load %arg2[%c0_6, %c0_7] : memref<256x64xf32, #tpu.memory_space<vmem>>, vector<256x64xf32>
    %cst = arith.constant dense<0.000000e+00> : vector<4x64xf32>
    %5 = tpu.matmul %1, %4, %cst {dimension_numbers = #tpu.dot_dimension_numbers<[1], [0], [0], [1], [0, 0, 1, 1], [], []>} : vector<4x256xf32>, vector<256x64xf32>, vector<4x64xf32> -> vector<4x64xf32>
    %cst_8 = arith.constant dense<0.000000e+00> : vector<4xf32>
    %6 = vector.multi_reduction <add>, %5, %cst_8 [1] : vector<4x64xf32> to vector<4xf32>
    %7 = vector.shape_cast %6 : vector<4xf32> to vector<4x1xf32>
    %cst_9 = arith.constant 6.400000e+01 : f32
    %8 = vector.broadcast %cst_9 : f32 to vector<4x1xf32>
    %9 = arith.divf %7, %8 : vector<4x1xf32>
    %10 = vector.broadcast %9 : vector<4x1xf32> to vector<4x64xf32>
    %11 = arith.mulf %10, %5 : vector<4x64xf32>
    %c0_10 = arith.constant 0 : index
    %c0_11 = arith.constant 0 : index
    %c0_12 = arith.constant 0 : index
    %12 = vector.load %arg7[%c0_10, %c0_11, %c0_12] : memref<9x4x4xf32, #tpu.memory_space<vmem>>, vector<1x4x4xf32>
    %13 = vector.shape_cast %12 : vector<1x4x4xf32> to vector<4x4xf32>
    %cst_13 = arith.constant dense<0.000000e+00> : vector<4x64xf32>
    %14 = tpu.matmul %13, %11, %cst_13 {dimension_numbers = #tpu.dot_dimension_numbers<[1], [0], [0], [1], [0, 0, 1, 1], [], []>} : vector<4x4xf32>, vector<4x64xf32>, vector<4x64xf32> -> vector<4x64xf32>
    %15 = vector.extract_strided_slice %2 {offsets = [0, 0], sizes = [4, 1], strides = [1, 1]} : vector<4x20xf32> to vector<4x1xf32>
    %16 = vector.broadcast %15 : vector<4x1xf32> to vector<4x64xf32>
    %17 = arith.addf %14, %16 : vector<4x64xf32>
    %c1 = arith.constant 1 : index
    %c0_14 = arith.constant 0 : index
    %c0_15 = arith.constant 0 : index
    %18 = vector.load %arg7[%c1, %c0_14, %c0_15] : memref<9x4x4xf32, #tpu.memory_space<vmem>>, vector<1x4x4xf32>
    %19 = vector.shape_cast %18 : vector<1x4x4xf32> to vector<4x4xf32>
    %cst_16 = arith.constant dense<0.000000e+00> : vector<4x64xf32>
    %20 = tpu.matmul %19, %11, %cst_16 {dimension_numbers = #tpu.dot_dimension_numbers<[1], [0], [0], [1], [0, 0, 1, 1], [], []>} : vector<4x4xf32>, vector<4x64xf32>, vector<4x64xf32> -> vector<4x64xf32>
    %21 = vector.extract_strided_slice %2 {offsets = [0, 1], sizes = [4, 1], strides = [1, 1]} : vector<4x20xf32> to vector<4x1xf32>
    %22 = vector.broadcast %21 : vector<4x1xf32> to vector<4x64xf32>
    %23 = arith.addf %20, %22 : vector<4x64xf32>
    %24 = arith.negf %17 : vector<4x64xf32>
    %25 = math.exp %24 : vector<4x64xf32>
    %cst_17 = arith.constant 1.000000e+00 : f32
    %26 = vector.broadcast %cst_17 : f32 to vector<4x64xf32>
    %27 = arith.addf %26, %25 : vector<4x64xf32>
    %28 = arith.divf %26, %27 : vector<4x64xf32>
    %29 = arith.mulf %28, %23 : vector<4x64xf32>
    %30 = arith.addf %29, %11 : vector<4x64xf32>
    %c2 = arith.constant 2 : index
    %c0_18 = arith.constant 0 : index
    %c0_19 = arith.constant 0 : index
    %31 = vector.load %arg7[%c2, %c0_18, %c0_19] : memref<9x4x4xf32, #tpu.memory_space<vmem>>, vector<1x4x4xf32>
    %32 = vector.shape_cast %31 : vector<1x4x4xf32> to vector<4x4xf32>
    %cst_20 = arith.constant dense<0.000000e+00> : vector<4x64xf32>
    %33 = tpu.matmul %32, %30, %cst_20 {dimension_numbers = #tpu.dot_dimension_numbers<[1], [0], [0], [1], [0, 0, 1, 1], [], []>} : vector<4x4xf32>, vector<4x64xf32>, vector<4x64xf32> -> vector<4x64xf32>
    %34 = vector.extract_strided_slice %2 {offsets = [0, 2], sizes = [4, 1], strides = [1, 1]} : vector<4x20xf32> to vector<4x1xf32>
    %35 = vector.broadcast %34 : vector<4x1xf32> to vector<4x64xf32>
    %36 = arith.addf %33, %35 : vector<4x64xf32>
    %37 = vector.extract_strided_slice %3 {offsets = [0, 0], sizes = [4, 1], strides = [1, 1]} : vector<4x19xf32> to vector<4x1xf32>
    %c0_21 = arith.constant 0 : index
    %c0_22 = arith.constant 0 : index
    %c0_23 = arith.constant 0 : index
    %38 = vector.load %arg3[%c0_21, %c0_22, %c0_23] : memref<5x64x64xf32, #tpu.memory_space<vmem>>, vector<1x64x64xf32>
    %39 = vector.shape_cast %38 : vector<1x64x64xf32> to vector<64x64xf32>
    %cst_24 = arith.constant dense<0.000000e+00> : vector<4x64xf32>
    %40 = tpu.matmul %5, %39, %cst_24 {dimension_numbers = #tpu.dot_dimension_numbers<[1], [0], [0], [1], [0, 0, 1, 1], [], []>} : vector<4x64xf32>, vector<64x64xf32>, vector<4x64xf32> -> vector<4x64xf32>
    %41 = vector.broadcast %37 : vector<4x1xf32> to vector<4x64xf32>
    %42 = arith.mulf %41, %40 : vector<4x64xf32>
    %43 = vector.extract_strided_slice %3 {offsets = [0, 5], sizes = [4, 1], strides = [1, 1]} : vector<4x19xf32> to vector<4x1xf32>
    %c0_25 = arith.constant 0 : index
    %c0_26 = arith.constant 0 : index
    %c0_27 = arith.constant 0 : index
    %44 = vector.load %arg4[%c0_25, %c0_26, %c0_27] : memref<5x64x64xf32, #tpu.memory_space<vmem>>, vector<1x64x64xf32>
    %45 = vector.shape_cast %44 : vector<1x64x64xf32> to vector<64x64xf32>
    %cst_28 = arith.constant dense<0.000000e+00> : vector<4x64xf32>
    %46 = tpu.matmul %5, %45, %cst_28 {dimension_numbers = #tpu.dot_dimension_numbers<[1], [0], [0], [1], [0, 0, 1, 1], [], []>} : vector<4x64xf32>, vector<64x64xf32>, vector<4x64xf32> -> vector<4x64xf32>
    %47 = vector.broadcast %43 : vector<4x1xf32> to vector<4x64xf32>
    %48 = arith.mulf %47, %46 : vector<4x64xf32>
    %49 = vector.extract_strided_slice %3 {offsets = [0, 1], sizes = [4, 1], strides = [1, 1]} : vector<4x19xf32> to vector<4x1xf32>
    %c1_29 = arith.constant 1 : index
    %c0_30 = arith.constant 0 : index
    %c0_31 = arith.constant 0 : index
    %50 = vector.load %arg3[%c1_29, %c0_30, %c0_31] : memref<5x64x64xf32, #tpu.memory_space<vmem>>, vector<1x64x64xf32>
    %51 = vector.shape_cast %50 : vector<1x64x64xf32> to vector<64x64xf32>
    %cst_32 = arith.constant dense<0.000000e+00> : vector<4x64xf32>
    %52 = tpu.matmul %5, %51, %cst_32 {dimension_numbers = #tpu.dot_dimension_numbers<[1], [0], [0], [1], [0, 0, 1, 1], [], []>} : vector<4x64xf32>, vector<64x64xf32>, vector<4x64xf32> -> vector<4x64xf32>
    %53 = vector.broadcast %49 : vector<4x1xf32> to vector<4x64xf32>
    %54 = arith.mulf %53, %52 : vector<4x64xf32>
    %55 = arith.addf %42, %54 : vector<4x64xf32>
    %56 = vector.extract_strided_slice %3 {offsets = [0, 6], sizes = [4, 1], strides = [1, 1]} : vector<4x19xf32> to vector<4x1xf32>
    %c1_33 = arith.constant 1 : index
    %c0_34 = arith.constant 0 : index
    %c0_35 = arith.constant 0 : index
    %57 = vector.load %arg4[%c1_33, %c0_34, %c0_35] : memref<5x64x64xf32, #tpu.memory_space<vmem>>, vector<1x64x64xf32>
    %58 = vector.shape_cast %57 : vector<1x64x64xf32> to vector<64x64xf32>
    %cst_36 = arith.constant dense<0.000000e+00> : vector<4x64xf32>
    %59 = tpu.matmul %5, %58, %cst_36 {dimension_numbers = #tpu.dot_dimension_numbers<[1], [0], [0], [1], [0, 0, 1, 1], [], []>} : vector<4x64xf32>, vector<64x64xf32>, vector<4x64xf32> -> vector<4x64xf32>
    %60 = vector.broadcast %56 : vector<4x1xf32> to vector<4x64xf32>
    %61 = arith.mulf %60, %59 : vector<4x64xf32>
    %62 = arith.addf %48, %61 : vector<4x64xf32>
    %63 = vector.extract_strided_slice %3 {offsets = [0, 2], sizes = [4, 1], strides = [1, 1]} : vector<4x19xf32> to vector<4x1xf32>
    %c2_37 = arith.constant 2 : index
    %c0_38 = arith.constant 0 : index
    %c0_39 = arith.constant 0 : index
    %64 = vector.load %arg3[%c2_37, %c0_38, %c0_39] : memref<5x64x64xf32, #tpu.memory_space<vmem>>, vector<1x64x64xf32>
    %65 = vector.shape_cast %64 : vector<1x64x64xf32> to vector<64x64xf32>
    %cst_40 = arith.constant dense<0.000000e+00> : vector<4x64xf32>
    %66 = tpu.matmul %5, %65, %cst_40 {dimension_numbers = #tpu.dot_dimension_numbers<[1], [0], [0], [1], [0, 0, 1, 1], [], []>} : vector<4x64xf32>, vector<64x64xf32>, vector<4x64xf32> -> vector<4x64xf32>
    %67 = vector.broadcast %63 : vector<4x1xf32> to vector<4x64xf32>
    %68 = arith.mulf %67, %66 : vector<4x64xf32>
    %69 = arith.addf %55, %68 : vector<4x64xf32>
    %70 = vector.extract_strided_slice %3 {offsets = [0, 7], sizes = [4, 1], strides = [1, 1]} : vector<4x19xf32> to vector<4x1xf32>
    %c2_41 = arith.constant 2 : index
    %c0_42 = arith.constant 0 : index
    %c0_43 = arith.constant 0 : index
    %71 = vector.load %arg4[%c2_41, %c0_42, %c0_43] : memref<5x64x64xf32, #tpu.memory_space<vmem>>, vector<1x64x64xf32>
    %72 = vector.shape_cast %71 : vector<1x64x64xf32> to vector<64x64xf32>
    %cst_44 = arith.constant dense<0.000000e+00> : vector<4x64xf32>
    %73 = tpu.matmul %5, %72, %cst_44 {dimension_numbers = #tpu.dot_dimension_numbers<[1], [0], [0], [1], [0, 0, 1, 1], [], []>} : vector<4x64xf32>, vector<64x64xf32>, vector<4x64xf32> -> vector<4x64xf32>
    %74 = vector.broadcast %70 : vector<4x1xf32> to vector<4x64xf32>
    %75 = arith.mulf %74, %73 : vector<4x64xf32>
    %76 = arith.addf %62, %75 : vector<4x64xf32>
    %77 = vector.extract_strided_slice %3 {offsets = [0, 3], sizes = [4, 1], strides = [1, 1]} : vector<4x19xf32> to vector<4x1xf32>
    %c3 = arith.constant 3 : index
    %c0_45 = arith.constant 0 : index
    %c0_46 = arith.constant 0 : index
    %78 = vector.load %arg3[%c3, %c0_45, %c0_46] : memref<5x64x64xf32, #tpu.memory_space<vmem>>, vector<1x64x64xf32>
    %79 = vector.shape_cast %78 : vector<1x64x64xf32> to vector<64x64xf32>
    %cst_47 = arith.constant dense<0.000000e+00> : vector<4x64xf32>
    %80 = tpu.matmul %5, %79, %cst_47 {dimension_numbers = #tpu.dot_dimension_numbers<[1], [0], [0], [1], [0, 0, 1, 1], [], []>} : vector<4x64xf32>, vector<64x64xf32>, vector<4x64xf32> -> vector<4x64xf32>
    %81 = vector.broadcast %77 : vector<4x1xf32> to vector<4x64xf32>
    %82 = arith.mulf %81, %80 : vector<4x64xf32>
    %83 = arith.addf %69, %82 : vector<4x64xf32>
    %84 = vector.extract_strided_slice %3 {offsets = [0, 8], sizes = [4, 1], strides = [1, 1]} : vector<4x19xf32> to vector<4x1xf32>
    %c3_48 = arith.constant 3 : index
    %c0_49 = arith.constant 0 : index
    %c0_50 = arith.constant 0 : index
    %85 = vector.load %arg4[%c3_48, %c0_49, %c0_50] : memref<5x64x64xf32, #tpu.memory_space<vmem>>, vector<1x64x64xf32>
    %86 = vector.shape_cast %85 : vector<1x64x64xf32> to vector<64x64xf32>
    %cst_51 = arith.constant dense<0.000000e+00> : vector<4x64xf32>
    %87 = tpu.matmul %5, %86, %cst_51 {dimension_numbers = #tpu.dot_dimension_numbers<[1], [0], [0], [1], [0, 0, 1, 1], [], []>} : vector<4x64xf32>, vector<64x64xf32>, vector<4x64xf32> -> vector<4x64xf32>
    %88 = vector.broadcast %84 : vector<4x1xf32> to vector<4x64xf32>
    %89 = arith.mulf %88, %87 : vector<4x64xf32>
    %90 = arith.addf %76, %89 : vector<4x64xf32>
    %91 = vector.extract_strided_slice %3 {offsets = [0, 4], sizes = [4, 1], strides = [1, 1]} : vector<4x19xf32> to vector<4x1xf32>
    %c4 = arith.constant 4 : index
    %c0_52 = arith.constant 0 : index
    %c0_53 = arith.constant 0 : index
    %92 = vector.load %arg3[%c4, %c0_52, %c0_53] : memref<5x64x64xf32, #tpu.memory_space<vmem>>, vector<1x64x64xf32>
    %93 = vector.shape_cast %92 : vector<1x64x64xf32> to vector<64x64xf32>
    %cst_54 = arith.constant dense<0.000000e+00> : vector<4x64xf32>
    %94 = tpu.matmul %5, %93, %cst_54 {dimension_numbers = #tpu.dot_dimension_numbers<[1], [0], [0], [1], [0, 0, 1, 1], [], []>} : vector<4x64xf32>, vector<64x64xf32>, vector<4x64xf32> -> vector<4x64xf32>
    %95 = vector.broadcast %91 : vector<4x1xf32> to vector<4x64xf32>
    %96 = arith.mulf %95, %94 : vector<4x64xf32>
    %97 = arith.addf %83, %96 : vector<4x64xf32>
    %98 = vector.extract_strided_slice %3 {offsets = [0, 9], sizes = [4, 1], strides = [1, 1]} : vector<4x19xf32> to vector<4x1xf32>
    %c4_55 = arith.constant 4 : index
    %c0_56 = arith.constant 0 : index
    %c0_57 = arith.constant 0 : index
    %99 = vector.load %arg4[%c4_55, %c0_56, %c0_57] : memref<5x64x64xf32, #tpu.memory_space<vmem>>, vector<1x64x64xf32>
    %100 = vector.shape_cast %99 : vector<1x64x64xf32> to vector<64x64xf32>
    %cst_58 = arith.constant dense<0.000000e+00> : vector<4x64xf32>
    %101 = tpu.matmul %5, %100, %cst_58 {dimension_numbers = #tpu.dot_dimension_numbers<[1], [0], [0], [1], [0, 0, 1, 1], [], []>} : vector<4x64xf32>, vector<64x64xf32>, vector<4x64xf32> -> vector<4x64xf32>
    %102 = vector.broadcast %98 : vector<4x1xf32> to vector<4x64xf32>
    %103 = arith.mulf %102, %101 : vector<4x64xf32>
    %104 = arith.addf %90, %103 : vector<4x64xf32>
    %105 = vector.extract_strided_slice %2 {offsets = [0, 5], sizes = [4, 1], strides = [1, 1]} : vector<4x20xf32> to vector<4x1xf32>
    %106 = vector.broadcast %105 : vector<4x1xf32> to vector<4x64xf32>
    %107 = arith.addf %97, %106 : vector<4x64xf32>
    %cst_59 = arith.constant 5.000000e-01 : f32
    %108 = vector.broadcast %cst_59 : f32 to vector<4x64xf32>
    %109 = arith.mulf %108, %107 : vector<4x64xf32>
    %cst_60 = arith.constant 4.471500e-02 : f32
    %110 = vector.broadcast %cst_60 : f32 to vector<4x64xf32>
    %111 = arith.mulf %110, %107 : vector<4x64xf32>
    %112 = arith.mulf %111, %107 : vector<4x64xf32>
    %113 = arith.mulf %112, %107 : vector<4x64xf32>
    %114 = arith.addf %107, %113 : vector<4x64xf32>
    %cst_61 = arith.constant 0.797884583 : f32
    %115 = vector.broadcast %cst_61 : f32 to vector<4x64xf32>
    %116 = arith.mulf %115, %114 : vector<4x64xf32>
    %117 = math.tanh %116 : vector<4x64xf32>
    %cst_62 = arith.constant 1.000000e+00 : f32
    %118 = vector.broadcast %cst_62 : f32 to vector<4x64xf32>
    %119 = arith.addf %118, %117 : vector<4x64xf32>
    %120 = arith.mulf %109, %119 : vector<4x64xf32>
    %121 = vector.extract_strided_slice %2 {offsets = [0, 9], sizes = [4, 1], strides = [1, 1]} : vector<4x20xf32> to vector<4x1xf32>
    %122 = vector.broadcast %121 : vector<4x1xf32> to vector<4x64xf32>
    %123 = arith.addf %104, %122 : vector<4x64xf32>
    %cst_63 = arith.constant 5.000000e-01 : f32
    %124 = vector.broadcast %cst_63 : f32 to vector<4x64xf32>
    %125 = arith.mulf %124, %123 : vector<4x64xf32>
    %cst_64 = arith.constant 4.471500e-02 : f32
    %126 = vector.broadcast %cst_64 : f32 to vector<4x64xf32>
    %127 = arith.mulf %126, %123 : vector<4x64xf32>
    %128 = arith.mulf %127, %123 : vector<4x64xf32>
    %129 = arith.mulf %128, %123 : vector<4x64xf32>
    %130 = arith.addf %123, %129 : vector<4x64xf32>
    %cst_65 = arith.constant 0.797884583 : f32
    %131 = vector.broadcast %cst_65 : f32 to vector<4x64xf32>
    %132 = arith.mulf %131, %130 : vector<4x64xf32>
    %133 = math.tanh %132 : vector<4x64xf32>
    %cst_66 = arith.constant 1.000000e+00 : f32
    %134 = vector.broadcast %cst_66 : f32 to vector<4x64xf32>
    %135 = arith.addf %134, %133 : vector<4x64xf32>
    %136 = arith.mulf %125, %135 : vector<4x64xf32>
    %c5 = arith.constant 5 : index
    %c0_67 = arith.constant 0 : index
    %c0_68 = arith.constant 0 : index
    %137 = vector.load %arg7[%c5, %c0_67, %c0_68] : memref<9x4x4xf32, #tpu.memory_space<vmem>>, vector<1x4x4xf32>
    %138 = vector.shape_cast %137 : vector<1x4x4xf32> to vector<4x4xf32>
    %cst_69 = arith.constant dense<0.000000e+00> : vector<4x64xf32>
    %139 = tpu.matmul %138, %120, %cst_69 {dimension_numbers = #tpu.dot_dimension_numbers<[1], [0], [0], [1], [0, 0, 1, 1], [], []>} : vector<4x4xf32>, vector<4x64xf32>, vector<4x64xf32> -> vector<4x64xf32>
    %140 = vector.extract_strided_slice %2 {offsets = [0, 6], sizes = [4, 1], strides = [1, 1]} : vector<4x20xf32> to vector<4x1xf32>
    %141 = vector.broadcast %140 : vector<4x1xf32> to vector<4x64xf32>
    %142 = arith.addf %139, %141 : vector<4x64xf32>
    %143 = vector.extract_strided_slice %2 {offsets = [0, 7], sizes = [4, 1], strides = [1, 1]} : vector<4x20xf32> to vector<4x1xf32>
    %144 = vector.broadcast %143 : vector<4x1xf32> to vector<4x64xf32>
    %145 = arith.mulf %142, %144 : vector<4x64xf32>
    %146 = vector.extract_strided_slice %2 {offsets = [0, 8], sizes = [4, 1], strides = [1, 1]} : vector<4x20xf32> to vector<4x1xf32>
    %147 = vector.broadcast %146 : vector<4x1xf32> to vector<4x64xf32>
    %148 = arith.addf %145, %147 : vector<4x64xf32>
    %c6 = arith.constant 6 : index
    %c0_70 = arith.constant 0 : index
    %c0_71 = arith.constant 0 : index
    %149 = vector.load %arg7[%c6, %c0_70, %c0_71] : memref<9x4x4xf32, #tpu.memory_space<vmem>>, vector<1x4x4xf32>
    %150 = vector.shape_cast %149 : vector<1x4x4xf32> to vector<4x4xf32>
    %cst_72 = arith.constant dense<0.000000e+00> : vector<4x64xf32>
    %151 = tpu.matmul %150, %136, %cst_72 {dimension_numbers = #tpu.dot_dimension_numbers<[1], [0], [0], [1], [0, 0, 1, 1], [], []>} : vector<4x4xf32>, vector<4x64xf32>, vector<4x64xf32> -> vector<4x64xf32>
    %152 = vector.extract_strided_slice %2 {offsets = [0, 10], sizes = [4, 1], strides = [1, 1]} : vector<4x20xf32> to vector<4x1xf32>
    %153 = vector.broadcast %152 : vector<4x1xf32> to vector<4x64xf32>
    %154 = arith.addf %151, %153 : vector<4x64xf32>
    %155 = vector.extract_strided_slice %2 {offsets = [0, 11], sizes = [4, 1], strides = [1, 1]} : vector<4x20xf32> to vector<4x1xf32>
    %156 = vector.broadcast %155 : vector<4x1xf32> to vector<4x64xf32>
    %157 = arith.mulf %154, %156 : vector<4x64xf32>
    %158 = vector.extract_strided_slice %2 {offsets = [0, 12], sizes = [4, 1], strides = [1, 1]} : vector<4x20xf32> to vector<4x1xf32>
    %159 = vector.broadcast %158 : vector<4x1xf32> to vector<4x64xf32>
    %160 = arith.addf %157, %159 : vector<4x64xf32>
    %c7 = arith.constant 7 : index
    %c0_73 = arith.constant 0 : index
    %c0_74 = arith.constant 0 : index
    %161 = vector.load %arg7[%c7, %c0_73, %c0_74] : memref<9x4x4xf32, #tpu.memory_space<vmem>>, vector<1x4x4xf32>
    %162 = vector.shape_cast %161 : vector<1x4x4xf32> to vector<4x4xf32>
    %163 = arith.addf %148, %160 : vector<4x64xf32>
    %cst_75 = arith.constant dense<0.000000e+00> : vector<4x64xf32>
    %164 = tpu.matmul %162, %163, %cst_75 {dimension_numbers = #tpu.dot_dimension_numbers<[1], [0], [0], [1], [0, 0, 1, 1], [], []>} : vector<4x4xf32>, vector<4x64xf32>, vector<4x64xf32> -> vector<4x64xf32>
    %165 = vector.extract_strided_slice %2 {offsets = [0, 13], sizes = [4, 1], strides = [1, 1]} : vector<4x20xf32> to vector<4x1xf32>
    %166 = vector.broadcast %165 : vector<4x1xf32> to vector<4x64xf32>
    %167 = arith.addf %164, %166 : vector<4x64xf32>
    %c3_76 = arith.constant 3 : index
    %c0_77 = arith.constant 0 : index
    %c0_78 = arith.constant 0 : index
    %168 = vector.load %arg7[%c3_76, %c0_77, %c0_78] : memref<9x4x4xf32, #tpu.memory_space<vmem>>, vector<1x4x4xf32>
    %169 = vector.shape_cast %168 : vector<1x4x4xf32> to vector<4x4xf32>
    %cst_79 = arith.constant dense<0.000000e+00> : vector<4x64xf32>
    %170 = tpu.matmul %169, %5, %cst_79 {dimension_numbers = #tpu.dot_dimension_numbers<[1], [0], [0], [1], [0, 0, 1, 1], [], []>} : vector<4x4xf32>, vector<4x64xf32>, vector<4x64xf32> -> vector<4x64xf32>
    %171 = vector.extract_strided_slice %2 {offsets = [0, 3], sizes = [4, 1], strides = [1, 1]} : vector<4x20xf32> to vector<4x1xf32>
    %172 = vector.broadcast %171 : vector<4x1xf32> to vector<4x64xf32>
    %173 = arith.addf %170, %172 : vector<4x64xf32>
    %cst_80 = arith.constant 5.000000e-01 : f32
    %174 = vector.broadcast %cst_80 : f32 to vector<4x64xf32>
    %175 = arith.mulf %167, %174 : vector<4x64xf32>
    %cst_81 = arith.constant dense<0.000000e+00> : vector<64x64xf32>
    %176 = tpu.matmul %36, %175, %cst_81 {dimension_numbers = #tpu.dot_dimension_numbers<[0], [0], [1], [1], [0, 1, 1, 1], [], []>} : vector<4x64xf32>, vector<4x64xf32>, vector<64x64xf32> -> vector<64x64xf32>
    %cst_82 = arith.constant dense<0xFF800000> : vector<64xf32>
    %177 = vector.multi_reduction <maximumf>, %176, %cst_82 [0] : vector<64x64xf32> to vector<64xf32>
    %178 = vector.shape_cast %177 : vector<64xf32> to vector<1x64xf32>
    %179 = vector.broadcast %178 : vector<1x64xf32> to vector<64x64xf32>
    %180 = arith.subf %176, %179 : vector<64x64xf32>
    %181 = math.exp %180 : vector<64x64xf32>
    %cst_83 = arith.constant dense<0.000000e+00> : vector<64xf32>
    %182 = vector.multi_reduction <add>, %181, %cst_83 [0] : vector<64x64xf32> to vector<64xf32>
    %183 = vector.shape_cast %182 : vector<64xf32> to vector<1x64xf32>
    %cst_84 = arith.constant dense<0.000000e+00> : vector<4x64xf32>
    %184 = tpu.matmul %173, %181, %cst_84 {dimension_numbers = #tpu.dot_dimension_numbers<[1], [0], [0], [1], [0, 0, 1, 1], [], []>} : vector<4x64xf32>, vector<64x64xf32>, vector<4x64xf32> -> vector<4x64xf32>
    %185 = tpu.reciprocal %183 {approx = true} : vector<1x64xf32> -> vector<1x64xf32>
    %186 = vector.broadcast %185 : vector<1x64xf32> to vector<4x64xf32>
    %187 = arith.mulf %184, %186 : vector<4x64xf32>
    %c4_85 = arith.constant 4 : index
    %c0_86 = arith.constant 0 : index
    %c0_87 = arith.constant 0 : index
    %188 = vector.load %arg7[%c4_85, %c0_86, %c0_87] : memref<9x4x4xf32, #tpu.memory_space<vmem>>, vector<1x4x4xf32>
    %189 = vector.shape_cast %188 : vector<1x4x4xf32> to vector<4x4xf32>
    %cst_88 = arith.constant dense<0.000000e+00> : vector<4x64xf32>
    %190 = tpu.matmul %189, %187, %cst_88 {dimension_numbers = #tpu.dot_dimension_numbers<[1], [0], [0], [1], [0, 0, 1, 1], [], []>} : vector<4x4xf32>, vector<4x64xf32>, vector<4x64xf32> -> vector<4x64xf32>
    %191 = vector.extract_strided_slice %2 {offsets = [0, 4], sizes = [4, 1], strides = [1, 1]} : vector<4x20xf32> to vector<4x1xf32>
    %192 = vector.broadcast %191 : vector<4x1xf32> to vector<4x64xf32>
    %193 = arith.addf %190, %192 : vector<4x64xf32>
    %194 = arith.addf %193, %173 : vector<4x64xf32>
    %cst_89 = arith.constant dense<0.000000e+00> : vector<64xf32>
    %195 = vector.multi_reduction <add>, %194, %cst_89 [0] : vector<4x64xf32> to vector<64xf32>
    %196 = vector.shape_cast %195 : vector<64xf32> to vector<1x64xf32>
    %cst_90 = arith.constant 4.000000e+00 : f32
    %197 = vector.broadcast %cst_90 : f32 to vector<1x64xf32>
    %198 = arith.divf %196, %197 : vector<1x64xf32>
    %199 = vector.broadcast %198 : vector<1x64xf32> to vector<4x64xf32>
    %200 = arith.subf %194, %199 : vector<4x64xf32>
    %201 = arith.mulf %200, %200 : vector<4x64xf32>
    %cst_91 = arith.constant dense<0.000000e+00> : vector<64xf32>
    %202 = vector.multi_reduction <add>, %201, %cst_91 [0] : vector<4x64xf32> to vector<64xf32>
    %203 = vector.shape_cast %202 : vector<64xf32> to vector<1x64xf32>
    %cst_92 = arith.constant 4.000000e+00 : f32
    %204 = vector.broadcast %cst_92 : f32 to vector<1x64xf32>
    %205 = arith.divf %203, %204 : vector<1x64xf32>
    %206 = vector.broadcast %198 : vector<1x64xf32> to vector<4x64xf32>
    %207 = arith.subf %194, %206 : vector<4x64xf32>
    %cst_93 = arith.constant 9.99999974E-6 : f32
    %208 = vector.broadcast %cst_93 : f32 to vector<1x64xf32>
    %209 = arith.addf %205, %208 : vector<1x64xf32>
    %210 = math.rsqrt %209 : vector<1x64xf32>
    %211 = vector.broadcast %210 : vector<1x64xf32> to vector<4x64xf32>
    %212 = arith.mulf %207, %211 : vector<4x64xf32>
    %213 = vector.extract_strided_slice %2 {offsets = [0, 14], sizes = [4, 1], strides = [1, 1]} : vector<4x20xf32> to vector<4x1xf32>
    %214 = vector.broadcast %213 : vector<4x1xf32> to vector<4x64xf32>
    %215 = arith.mulf %212, %214 : vector<4x64xf32>
    %216 = vector.extract_strided_slice %2 {offsets = [0, 15], sizes = [4, 1], strides = [1, 1]} : vector<4x20xf32> to vector<4x1xf32>
    %217 = vector.broadcast %216 : vector<4x1xf32> to vector<4x64xf32>
    %218 = arith.addf %215, %217 : vector<4x64xf32>
    %c0_94 = arith.constant 0 : index
    %c0_95 = arith.constant 0 : index
    %219 = vector.load %arg6[%c0_94, %c0_95] : memref<64x256xf32, #tpu.memory_space<vmem>>, vector<64x256xf32>
    %cst_96 = arith.constant dense<0.000000e+00> : vector<4x256xf32>
    %220 = tpu.matmul %218, %219, %cst_96 {dimension_numbers = #tpu.dot_dimension_numbers<[1], [0], [0], [1], [0, 0, 1, 1], [], []>} : vector<4x64xf32>, vector<64x256xf32>, vector<4x256xf32> -> vector<4x256xf32>
    %221 = vector.extract_strided_slice %3 {offsets = [0, 10], sizes = [4, 1], strides = [1, 1]} : vector<4x19xf32> to vector<4x1xf32>
    %c0_97 = arith.constant 0 : index
    %c0_98 = arith.constant 0 : index
    %c0_99 = arith.constant 0 : index
    %222 = vector.load %arg5[%c0_97, %c0_98, %c0_99] : memref<9x256x256xf32, #tpu.memory_space<vmem>>, vector<1x256x256xf32>
    %223 = vector.shape_cast %222 : vector<1x256x256xf32> to vector<256x256xf32>
    %cst_100 = arith.constant dense<0.000000e+00> : vector<4x256xf32>
    %224 = tpu.matmul %220, %223, %cst_100 {dimension_numbers = #tpu.dot_dimension_numbers<[1], [0], [0], [1], [0, 0, 1, 1], [], []>} : vector<4x256xf32>, vector<256x256xf32>, vector<4x256xf32> -> vector<4x256xf32>
    %225 = vector.broadcast %221 : vector<4x1xf32> to vector<4x256xf32>
    %226 = arith.mulf %225, %224 : vector<4x256xf32>
    %227 = vector.extract_strided_slice %3 {offsets = [0, 11], sizes = [4, 1], strides = [1, 1]} : vector<4x19xf32> to vector<4x1xf32>
    %c1_101 = arith.constant 1 : index
    %c0_102 = arith.constant 0 : index
    %c0_103 = arith.constant 0 : index
    %228 = vector.load %arg5[%c1_101, %c0_102, %c0_103] : memref<9x256x256xf32, #tpu.memory_space<vmem>>, vector<1x256x256xf32>
    %229 = vector.shape_cast %228 : vector<1x256x256xf32> to vector<256x256xf32>
    %cst_104 = arith.constant dense<0.000000e+00> : vector<4x256xf32>
    %230 = tpu.matmul %220, %229, %cst_104 {dimension_numbers = #tpu.dot_dimension_numbers<[1], [0], [0], [1], [0, 0, 1, 1], [], []>} : vector<4x256xf32>, vector<256x256xf32>, vector<4x256xf32> -> vector<4x256xf32>
    %231 = vector.broadcast %227 : vector<4x1xf32> to vector<4x256xf32>
    %232 = arith.mulf %231, %230 : vector<4x256xf32>
    %233 = arith.addf %226, %232 : vector<4x256xf32>
    %234 = vector.extract_strided_slice %3 {offsets = [0, 12], sizes = [4, 1], strides = [1, 1]} : vector<4x19xf32> to vector<4x1xf32>
    %c2_105 = arith.constant 2 : index
    %c0_106 = arith.constant 0 : index
    %c0_107 = arith.constant 0 : index
    %235 = vector.load %arg5[%c2_105, %c0_106, %c0_107] : memref<9x256x256xf32, #tpu.memory_space<vmem>>, vector<1x256x256xf32>
    %236 = vector.shape_cast %235 : vector<1x256x256xf32> to vector<256x256xf32>
    %cst_108 = arith.constant dense<0.000000e+00> : vector<4x256xf32>
    %237 = tpu.matmul %220, %236, %cst_108 {dimension_numbers = #tpu.dot_dimension_numbers<[1], [0], [0], [1], [0, 0, 1, 1], [], []>} : vector<4x256xf32>, vector<256x256xf32>, vector<4x256xf32> -> vector<4x256xf32>
    %238 = vector.broadcast %234 : vector<4x1xf32> to vector<4x256xf32>
    %239 = arith.mulf %238, %237 : vector<4x256xf32>
    %240 = arith.addf %233, %239 : vector<4x256xf32>
    %241 = vector.extract_strided_slice %3 {offsets = [0, 13], sizes = [4, 1], strides = [1, 1]} : vector<4x19xf32> to vector<4x1xf32>
    %c3_109 = arith.constant 3 : index
    %c0_110 = arith.constant 0 : index
    %c0_111 = arith.constant 0 : index
    %242 = vector.load %arg5[%c3_109, %c0_110, %c0_111] : memref<9x256x256xf32, #tpu.memory_space<vmem>>, vector<1x256x256xf32>
    %243 = vector.shape_cast %242 : vector<1x256x256xf32> to vector<256x256xf32>
    %cst_112 = arith.constant dense<0.000000e+00> : vector<4x256xf32>
    %244 = tpu.matmul %220, %243, %cst_112 {dimension_numbers = #tpu.dot_dimension_numbers<[1], [0], [0], [1], [0, 0, 1, 1], [], []>} : vector<4x256xf32>, vector<256x256xf32>, vector<4x256xf32> -> vector<4x256xf32>
    %245 = vector.broadcast %241 : vector<4x1xf32> to vector<4x256xf32>
    %246 = arith.mulf %245, %244 : vector<4x256xf32>
    %247 = arith.addf %240, %246 : vector<4x256xf32>
    %248 = vector.extract_strided_slice %3 {offsets = [0, 14], sizes = [4, 1], strides = [1, 1]} : vector<4x19xf32> to vector<4x1xf32>
    %c4_113 = arith.constant 4 : index
    %c0_114 = arith.constant 0 : index
    %c0_115 = arith.constant 0 : index
    %249 = vector.load %arg5[%c4_113, %c0_114, %c0_115] : memref<9x256x256xf32, #tpu.memory_space<vmem>>, vector<1x256x256xf32>
    %250 = vector.shape_cast %249 : vector<1x256x256xf32> to vector<256x256xf32>
    %cst_116 = arith.constant dense<0.000000e+00> : vector<4x256xf32>
    %251 = tpu.matmul %220, %250, %cst_116 {dimension_numbers = #tpu.dot_dimension_numbers<[1], [0], [0], [1], [0, 0, 1, 1], [], []>} : vector<4x256xf32>, vector<256x256xf32>, vector<4x256xf32> -> vector<4x256xf32>
    %252 = vector.broadcast %248 : vector<4x1xf32> to vector<4x256xf32>
    %253 = arith.mulf %252, %251 : vector<4x256xf32>
    %254 = arith.addf %247, %253 : vector<4x256xf32>
    %255 = vector.extract_strided_slice %3 {offsets = [0, 15], sizes = [4, 1], strides = [1, 1]} : vector<4x19xf32> to vector<4x1xf32>
    %c5_117 = arith.constant 5 : index
    %c0_118 = arith.constant 0 : index
    %c0_119 = arith.constant 0 : index
    %256 = vector.load %arg5[%c5_117, %c0_118, %c0_119] : memref<9x256x256xf32, #tpu.memory_space<vmem>>, vector<1x256x256xf32>
    %257 = vector.shape_cast %256 : vector<1x256x256xf32> to vector<256x256xf32>
    %cst_120 = arith.constant dense<0.000000e+00> : vector<4x256xf32>
    %258 = tpu.matmul %220, %257, %cst_120 {dimension_numbers = #tpu.dot_dimension_numbers<[1], [0], [0], [1], [0, 0, 1, 1], [], []>} : vector<4x256xf32>, vector<256x256xf32>, vector<4x256xf32> -> vector<4x256xf32>
    %259 = vector.broadcast %255 : vector<4x1xf32> to vector<4x256xf32>
    %260 = arith.mulf %259, %258 : vector<4x256xf32>
    %261 = arith.addf %254, %260 : vector<4x256xf32>
    %262 = vector.extract_strided_slice %3 {offsets = [0, 16], sizes = [4, 1], strides = [1, 1]} : vector<4x19xf32> to vector<4x1xf32>
    %c6_121 = arith.constant 6 : index
    %c0_122 = arith.constant 0 : index
    %c0_123 = arith.constant 0 : index
    %263 = vector.load %arg5[%c6_121, %c0_122, %c0_123] : memref<9x256x256xf32, #tpu.memory_space<vmem>>, vector<1x256x256xf32>
    %264 = vector.shape_cast %263 : vector<1x256x256xf32> to vector<256x256xf32>
    %cst_124 = arith.constant dense<0.000000e+00> : vector<4x256xf32>
    %265 = tpu.matmul %220, %264, %cst_124 {dimension_numbers = #tpu.dot_dimension_numbers<[1], [0], [0], [1], [0, 0, 1, 1], [], []>} : vector<4x256xf32>, vector<256x256xf32>, vector<4x256xf32> -> vector<4x256xf32>
    %266 = vector.broadcast %262 : vector<4x1xf32> to vector<4x256xf32>
    %267 = arith.mulf %266, %265 : vector<4x256xf32>
    %268 = arith.addf %261, %267 : vector<4x256xf32>
    %269 = vector.extract_strided_slice %3 {offsets = [0, 17], sizes = [4, 1], strides = [1, 1]} : vector<4x19xf32> to vector<4x1xf32>
    %c7_125 = arith.constant 7 : index
    %c0_126 = arith.constant 0 : index
    %c0_127 = arith.constant 0 : index
    %270 = vector.load %arg5[%c7_125, %c0_126, %c0_127] : memref<9x256x256xf32, #tpu.memory_space<vmem>>, vector<1x256x256xf32>
    %271 = vector.shape_cast %270 : vector<1x256x256xf32> to vector<256x256xf32>
    %cst_128 = arith.constant dense<0.000000e+00> : vector<4x256xf32>
    %272 = tpu.matmul %220, %271, %cst_128 {dimension_numbers = #tpu.dot_dimension_numbers<[1], [0], [0], [1], [0, 0, 1, 1], [], []>} : vector<4x256xf32>, vector<256x256xf32>, vector<4x256xf32> -> vector<4x256xf32>
    %273 = vector.broadcast %269 : vector<4x1xf32> to vector<4x256xf32>
    %274 = arith.mulf %273, %272 : vector<4x256xf32>
    %275 = arith.addf %268, %274 : vector<4x256xf32>
    %276 = vector.extract_strided_slice %3 {offsets = [0, 18], sizes = [4, 1], strides = [1, 1]} : vector<4x19xf32> to vector<4x1xf32>
    %c8 = arith.constant 8 : index
    %c0_129 = arith.constant 0 : index
    %c0_130 = arith.constant 0 : index
    %277 = vector.load %arg5[%c8, %c0_129, %c0_130] : memref<9x256x256xf32, #tpu.memory_space<vmem>>, vector<1x256x256xf32>
    %278 = vector.shape_cast %277 : vector<1x256x256xf32> to vector<256x256xf32>
    %cst_131 = arith.constant dense<0.000000e+00> : vector<4x256xf32>
    %279 = tpu.matmul %220, %278, %cst_131 {dimension_numbers = #tpu.dot_dimension_numbers<[1], [0], [0], [1], [0, 0, 1, 1], [], []>} : vector<4x256xf32>, vector<256x256xf32>, vector<4x256xf32> -> vector<4x256xf32>
    %280 = vector.broadcast %276 : vector<4x1xf32> to vector<4x256xf32>
    %281 = arith.mulf %280, %279 : vector<4x256xf32>
    %282 = arith.addf %275, %281 : vector<4x256xf32>
    %283 = vector.extract_strided_slice %2 {offsets = [0, 16], sizes = [4, 1], strides = [1, 1]} : vector<4x20xf32> to vector<4x1xf32>
    %284 = vector.broadcast %283 : vector<4x1xf32> to vector<4x256xf32>
    %285 = arith.addf %282, %284 : vector<4x256xf32>
    %cst_132 = arith.constant 5.000000e-01 : f32
    %286 = vector.broadcast %cst_132 : f32 to vector<4x256xf32>
    %287 = arith.mulf %286, %285 : vector<4x256xf32>
    %cst_133 = arith.constant 4.471500e-02 : f32
    %288 = vector.broadcast %cst_133 : f32 to vector<4x256xf32>
    %289 = arith.mulf %288, %285 : vector<4x256xf32>
    %290 = arith.mulf %289, %285 : vector<4x256xf32>
    %291 = arith.mulf %290, %285 : vector<4x256xf32>
    %292 = arith.addf %285, %291 : vector<4x256xf32>
    %cst_134 = arith.constant 0.797884583 : f32
    %293 = vector.broadcast %cst_134 : f32 to vector<4x256xf32>
    %294 = arith.mulf %293, %292 : vector<4x256xf32>
    %295 = math.tanh %294 : vector<4x256xf32>
    %cst_135 = arith.constant 1.000000e+00 : f32
    %296 = vector.broadcast %cst_135 : f32 to vector<4x256xf32>
    %297 = arith.addf %296, %295 : vector<4x256xf32>
    %298 = arith.mulf %287, %297 : vector<4x256xf32>
    %c8_136 = arith.constant 8 : index
    %c0_137 = arith.constant 0 : index
    %c0_138 = arith.constant 0 : index
    %299 = vector.load %arg7[%c8_136, %c0_137, %c0_138] : memref<9x4x4xf32, #tpu.memory_space<vmem>>, vector<1x4x4xf32>
    %300 = vector.shape_cast %299 : vector<1x4x4xf32> to vector<4x4xf32>
    %cst_139 = arith.constant dense<0.000000e+00> : vector<4x256xf32>
    %301 = tpu.matmul %300, %298, %cst_139 {dimension_numbers = #tpu.dot_dimension_numbers<[1], [0], [0], [1], [0, 0, 1, 1], [], []>} : vector<4x4xf32>, vector<4x256xf32>, vector<4x256xf32> -> vector<4x256xf32>
    %302 = vector.extract_strided_slice %2 {offsets = [0, 17], sizes = [4, 1], strides = [1, 1]} : vector<4x20xf32> to vector<4x1xf32>
    %303 = vector.broadcast %302 : vector<4x1xf32> to vector<4x256xf32>
    %304 = arith.addf %301, %303 : vector<4x256xf32>
    %305 = vector.extract_strided_slice %2 {offsets = [0, 18], sizes = [4, 1], strides = [1, 1]} : vector<4x20xf32> to vector<4x1xf32>
    %306 = vector.broadcast %305 : vector<4x1xf32> to vector<4x256xf32>
    %307 = arith.mulf %304, %306 : vector<4x256xf32>
    %308 = vector.extract_strided_slice %2 {offsets = [0, 19], sizes = [4, 1], strides = [1, 1]} : vector<4x20xf32> to vector<4x1xf32>
    %309 = vector.broadcast %308 : vector<4x1xf32> to vector<4x256xf32>
    %310 = arith.addf %307, %309 : vector<4x256xf32>
    %311 = arith.addf %310, %220 : vector<4x256xf32>
    %c0_140 = arith.constant 0 : index
    %c0_141 = arith.constant 0 : index
    %c0_142 = arith.constant 0 : index
    %312 = vector.load %arg10[%c0_140, %c0_141, %c0_142] : memref<1x4x256xf32, #tpu.memory_space<vmem>>, vector<1x4x256xf32>
    %313 = vector.shape_cast %312 : vector<1x4x256xf32> to vector<4x256xf32>
    %314 = vector.shape_cast %311 : vector<4x256xf32> to vector<1x4x256xf32>
    tpu.vector_store %arg10[%c0_140, %c0_141, %c0_142], %314 {strides = array<i32>} : memref<1x4x256xf32, #tpu.memory_space<vmem>>, vector<1x4x256xf32>,
    return
  }
  func.func @transform_0(%arg0: i32) -> (i32, i32, i32) {
    %c0_i32 = arith.constant 0 : i32
    %c0_i32_0 = arith.constant 0 : i32
    %c0_i32_1 = arith.constant 0 : i32
    return %arg0, %c0_i32, %c0_i32_0 : i32, i32, i32
  }
  func.func @transform_1(%arg0: i32) -> (i32, i32) {
    %c0_i32 = arith.constant 0 : i32
    %c0_i32_0 = arith.constant 0 : i32
    %c0_i32_1 = arith.constant 0 : i32
    return %c0_i32, %c0_i32_0 : i32, i32
  }
  func.func @transform_2(%arg0: i32) -> (i32, i32, i32) {
    %c0_i32 = arith.constant 0 : i32
    %c0_i32_0 = arith.constant 0 : i32
    %c0_i32_1 = arith.constant 0 : i32
    %c0_i32_2 = arith.constant 0 : i32
    return %c0_i32, %c0_i32_0, %c0_i32_1 : i32, i32, i32
  }
  func.func @transform_3(%arg0: i32) -> (i32, i32, i32) {
    %c0_i32 = arith.constant 0 : i32
    %c0_i32_0 = arith.constant 0 : i32
    %c0_i32_1 = arith.constant 0 : i32
    %c0_i32_2 = arith.constant 0 : i32
    return %c0_i32, %c0_i32_0, %c0_i32_1 : i32, i32, i32
  }
  func.func @transform_4(%arg0: i32) -> (i32, i32, i32) {
    %c0_i32 = arith.constant 0 : i32
    %c0_i32_0 = arith.constant 0 : i32
    %c0_i32_1 = arith.constant 0 : i32
    %c0_i32_2 = arith.constant 0 : i32
    return %c0_i32, %c0_i32_0, %c0_i32_1 : i32, i32, i32
  }
  func.func @transform_5(%arg0: i32) -> (i32, i32) {
    %c0_i32 = arith.constant 0 : i32
    %c0_i32_0 = arith.constant 0 : i32
    %c0_i32_1 = arith.constant 0 : i32
    return %c0_i32, %c0_i32_0 : i32, i32
  }
  func.func @transform_6(%arg0: i32) -> (i32, i32, i32) {
    %c0_i32 = arith.constant 0 : i32
    %c0_i32_0 = arith.constant 0 : i32
    %c0_i32_1 = arith.constant 0 : i32
    %c0_i32_2 = arith.constant 0 : i32
    return %c0_i32, %c0_i32_0, %c0_i32_1 : i32, i32, i32
  }
  func.func @transform_7(%arg0: i32) -> (i32, i32) {
    %c0_i32 = arith.constant 0 : i32
    %c0_i32_0 = arith.constant 0 : i32
    %c0_i32_1 = arith.constant 0 : i32
    return %c0_i32, %c0_i32_0 : i32, i32
  }
  func.func @transform_8(%arg0: i32) -> (i32, i32) {
    %c0_i32 = arith.constant 0 : i32
    %c0_i32_0 = arith.constant 0 : i32
    %c0_i32_1 = arith.constant 0 : i32
    return %c0_i32, %c0_i32_0 : i32, i32
  }
  func.func @transform_9(%arg0: i32) -> (i32, i32, i32) {
    %c0_i32 = arith.constant 0 : i32
    %c0_i32_0 = arith.constant 0 : i32
    %c0_i32_1 = arith.constant 0 : i32
    return %arg0, %c0_i32, %c0_i32_0 : i32, i32, i32
  }
}

</mosaic_0001>

<llo_original>
// kernel: cpgm_forward.1
$region0: #{cpgm_forward.1}
  #allocation0 [shape = 'u32[]', space=smem, size = 0x4, offset = 0x4, fixed_abs, tag = 'smem constant byte address 0x4 - core index']
  #allocation1 [shape = 'u32[72,128]{1,0:T(1,128)}', space=vmem, size = 0x9000, scoped, tag = 'internal scratch']
  %s0 = inlined_call_operand.vmem [shape: f32[2,4,256], index: 0, kind: input, shape index: {}]
  %s1 = inlined_call_operand.vmem [shape: f32[256,64], index: 1, kind: input, shape index: {}]
  %s2 = inlined_call_operand.hbm [shape: f32[5,64,64], index: 2, kind: input, shape index: {}]
  %s3 = inlined_call_operand.hbm [shape: f32[5,64,64], index: 3, kind: input, shape index: {}]
  %s4 = inlined_call_operand.hbm [shape: f32[9,256,256], index: 4, kind: input, shape index: {}]
  %s5 = inlined_call_operand.hbm [shape: f32[64,256], index: 5, kind: input, shape index: {}]
  %s6 = inlined_call_operand.vmem [shape: f32[9,4,4], index: 6, kind: input, shape index: {}]
  %s7 = inlined_call_operand.hbm [shape: f32[4,20], index: 7, kind: input, shape index: {}]
  %s8 = inlined_call_operand.hbm [shape: f32[4,19], index: 8, kind: input, shape index: {}]
  %s9 = inlined_call_operand.vmem [shape: f32[2,4,256], index: 9, kind: output, shape index: {}]
  %s10 = sld [smem:[#allocation0]]
  $region93: #{cpgm_forward.1} parent=0
    _
  %s12 = ssub.s32 1, %s10
  %s13 = scalar_select 0, %s12, %s10
  $region1: #{cpgm_forward.1} parent=0
    #allocation2 [shape = 'u8[163840]{0}', space=vmem, size = 0x28000, scoped, tag = 'input window, operand 2, single buffered']
    #allocation3 [shape = 's32[2]{0}', space=sflag, size = 0x8, scoped, tag = 'scoped memory for cpgm_forward.1']
    #allocation4 [shape = 'u8[163840]{0}', space=vmem, size = 0x28000, scoped, tag = 'input window, operand 3, single buffered']
    #allocation5 [shape = 's32[1]{0}', space=sflag, size = 0x4, scoped, tag = 'scoped memory for cpgm_forward.1']
    #allocation6 [shape = 'u8[2359296]{0}', space=vmem, size = 0x240000, scoped, tag = 'input window, operand 4, single buffered']
    #allocation7 [shape = 'u8[65536]{0}', space=vmem, size = 0x10000, scoped, tag = 'input window, operand 5, single buffered']
    #allocation8 [shape = 's32[1]{0}', space=sflag, size = 0x4, scoped, tag = 'scoped memory for cpgm_forward.1']
    #allocation9 [shape = 'u8[2048]{0}', space=vmem, size = 0x800, scoped, tag = 'input window, operand 7, single buffered']
    #allocation10 [shape = 'u8[2048]{0}', space=vmem, size = 0x800, scoped, tag = 'input window, operand 8, single buffered']
    #allocation11 [shape = 's32[1]{0}', space=sflag, size = 0x4, scoped, tag = 'scoped memory for cpgm_forward.1']
    %14 = vsyncpa [#allocation3], 0
    %15 = vsyncpa [#allocation5], 0
    %16 = vsyncpa [#allocation8], 0
    %17 = vsyncpa [#allocation11], 0
    loop: start=0, step=1, limit=4
    $region2: #{cpgm_forward.1} parent=1 // loop_pre_header
      _
    $region3: #{cpgm_forward.1} parent=1 // loop_header
      %s19 = sphi 0, %s23
      %p20 = scmp.ge.s32.totalorder %s19, 4
      %s29 = sphi 0, %s31
      %s32 = sphi 0, %s29
      %s33 = sphi 0, %s32
      %s49 = sphi 0, %s33
      %s53 = sphi 0, %s53
      %s55 = sphi 0, %s53
      %s56 = sphi 0, %s55
      %s70 = sphi 0, %s56
      %s74 = sphi 0, %s74
      %s76 = sphi 0, %s74
      %s77 = sphi 0, %s76
      %s91 = sphi 0, %s77
      %s95 = sphi 0, %s95
      %s97 = sphi 0, %s95
      %s98 = sphi 0, %s97
      %s112 = sphi 0, %s98
      %s116 = sphi 0, %s116
      %s118 = sphi 0, %s116
      %s119 = sphi 0, %s118
      %s133 = sphi 0, %s119
      %s137 = sphi 0, %s137
      %s139 = sphi 0, %s137
      %s140 = sphi 0, %s139
      %s154 = sphi 0, %s140
      %s158 = sphi 0, %s158
      %s160 = sphi 0, %s158
      %s161 = sphi 0, %s160
      %s175 = sphi 0, %s161
      %s179 = sphi 0, %s179
      %s181 = sphi 0, %s179
      %s182 = sphi 0, %s181
      %s196 = sphi 0, %s182
      %s200 = sphi 0, %s200
      %s202 = sphi 0, %s200
      %s203 = sphi 0, %s202
      %s217 = sphi 0, %s203
      %s223 = sphi 0, %s225
      %s226 = sphi 0, %s223
      %s227 = sphi 0, %s226
      %s243 = sphi 0, %s227
    $region4: #{cpgm_forward.1} parent=1 // loop_header_branch
      %22 = sbr.rel (%p20) target = $region8
    $region5: #{cpgm_forward.1} parent=1 // loop_body
      %s24 = ssub.s32 %s19, 1
      %s25 = ssub.s32 %s19, 2
      %s26 = sadd.s32 %s19, 1
      %s27 = ssub.s32 %s19, %s26
      %p28 = scmp.eq.s32.totalorder %s27, 0
      %s30 = sadd.s32 %s29, 1
      %s31 = scalar_select %p28, %s29, %s30
      %p34 = pneg %p28
      %p35 = scmp.eq.s32.totalorder %s19, 1
      %p36 = por %p34, %p35
      %p37 = scmp.ne.s32.totalorder %s29, %s32
      %p38 = scmp.eq.s32.totalorder %s19, 0
      %p39 = por %p37, %p38
      %p40 = scmp.ne.s32.totalorder %s29, %s32
      %p41 = scmp.eq.s32.totalorder %s24, 1
      %p42 = por %p40, %p41
      %p43 = scmp.ne.s32.totalorder %s32, %s33
      %p44 = scmp.eq.s32.totalorder %s24, 0
      %p45 = por %p43, %p44
      %p46 = scmp.ne.s32.totalorder %s32, %s33
      %p47 = scmp.eq.s32.totalorder %s25, 1
      %p48 = por %p46, %p47
      %p50 = scmp.ne.s32.totalorder %s33, %s49
      %p51 = scmp.eq.s32.totalorder %s25, 0
      %p52 = por %p50, %p51
      %s54 = sadd.s32 %s53, 1
      %p57 = scmp.eq.s32.totalorder %s19, 1
      %p58 = scmp.ne.s32.totalorder %s53, %s55
      %p59 = scmp.eq.s32.totalorder %s19, 0
      %p60 = por %p58, %p59
      %p61 = scmp.ne.s32.totalorder %s53, %s55
      %p62 = scmp.eq.s32.totalorder %s24, 1
      %p63 = por %p61, %p62
      %p64 = scmp.ne.s32.totalorder %s55, %s56
      %p65 = scmp.eq.s32.totalorder %s24, 0
      %p66 = por %p64, %p65
      %p67 = scmp.ne.s32.totalorder %s55, %s56
      %p68 = scmp.eq.s32.totalorder %s25, 1
      %p69 = por %p67, %p68
      %p71 = scmp.ne.s32.totalorder %s56, %s70
      %p72 = scmp.eq.s32.totalorder %s25, 0
      %p73 = por %p71, %p72
      %s75 = sadd.s32 %s74, 1
      %p78 = scmp.eq.s32.totalorder %s19, 1
      %p79 = scmp.ne.s32.totalorder %s74, %s76
      %p80 = scmp.eq.s32.totalorder %s19, 0
      %p81 = por %p79, %p80
      %p82 = scmp.ne.s32.totalorder %s74, %s76
      %p83 = scmp.eq.s32.totalorder %s24, 1
      %p84 = por %p82, %p83
      %p85 = scmp.ne.s32.totalorder %s76, %s77
      %p86 = scmp.eq.s32.totalorder %s24, 0
      %p87 = por %p85, %p86
      %p88 = scmp.ne.s32.totalorder %s76, %s77
      %p89 = scmp.eq.s32.totalorder %s25, 1
      %p90 = por %p88, %p89
      %p92 = scmp.ne.s32.totalorder %s77, %s91
      %p93 = scmp.eq.s32.totalorder %s25, 0
      %p94 = por %p92, %p93
      %s96 = sadd.s32 %s95, 1
      %p99 = scmp.eq.s32.totalorder %s19, 1
      %p100 = scmp.ne.s32.totalorder %s95, %s97
      %p101 = scmp.eq.s32.totalorder %s19, 0
      %p102 = por %p100, %p101
      %p103 = scmp.ne.s32.totalorder %s95, %s97
      %p104 = scmp.eq.s32.totalorder %s24, 1
      %p105 = por %p103, %p104
      %p106 = scmp.ne.s32.totalorder %s97, %s98
      %p107 = scmp.eq.s32.totalorder %s24, 0
      %p108 = por %p106, %p107
      %p109 = scmp.ne.s32.totalorder %s97, %s98
      %p110 = scmp.eq.s32.totalorder %s25, 1
      %p111 = por %p109, %p110
      %p113 = scmp.ne.s32.totalorder %s98, %s112
      %p114 = scmp.eq.s32.totalorder %s25, 0
      %p115 = por %p113, %p114
      %s117 = sadd.s32 %s116, 1
      %p120 = scmp.eq.s32.totalorder %s19, 1
      %p121 = scmp.ne.s32.totalorder %s116, %s118
      %p122 = scmp.eq.s32.totalorder %s19, 0
      %p123 = por %p121, %p122
      %p124 = scmp.ne.s32.totalorder %s116, %s118
      %p125 = scmp.eq.s32.totalorder %s24, 1
      %p126 = por %p124, %p125
      %p127 = scmp.ne.s32.totalorder %s118, %s119
      %p128 = scmp.eq.s32.totalorder %s24, 0
      %p129 = por %p127, %p128
      %p130 = scmp.ne.s32.totalorder %s118, %s119
      %p131 = scmp.eq.s32.totalorder %s25, 1
      %p132 = por %p130, %p131
      %p134 = scmp.ne.s32.totalorder %s119, %s133
      %p135 = scmp.eq.s32.totalorder %s25, 0
      %p136 = por %p134, %p135
      %s138 = sadd.s32 %s137, 1
      %p141 = scmp.eq.s32.totalorder %s19, 1
      %p142 = scmp.ne.s32.totalorder %s137, %s139
      %p143 = scmp.eq.s32.totalorder %s19, 0
      %p144 = por %p142, %p143
      %p145 = scmp.ne.s32.totalorder %s137, %s139
      %p146 = scmp.eq.s32.totalorder %s24, 1
      %p147 = por %p145, %p146
      %p148 = scmp.ne.s32.totalorder %s139, %s140
      %p149 = scmp.eq.s32.totalorder %s24, 0
      %p150 = por %p148, %p149
      %p151 = scmp.ne.s32.totalorder %s139, %s140
      %p152 = scmp.eq.s32.totalorder %s25, 1
      %p153 = por %p151, %p152
      %p155 = scmp.ne.s32.totalorder %s140, %s154
      %p156 = scmp.eq.s32.totalorder %s25, 0
      %p157 = por %p155, %p156
      %s159 = sadd.s32 %s158, 1
      %p162 = scmp.eq.s32.totalorder %s19, 1
      %p163 = scmp.ne.s32.totalorder %s158, %s160
      %p164 = scmp.eq.s32.totalorder %s19, 0
      %p165 = por %p163, %p164
      %p166 = scmp.ne.s32.totalorder %s158, %s160
      %p167 = scmp.eq.s32.totalorder %s24, 1
      %p168 = por %p166, %p167
      %p169 = scmp.ne.s32.totalorder %s160, %s161
      %p170 = scmp.eq.s32.totalorder %s24, 0
      %p171 = por %p169, %p170
      %p172 = scmp.ne.s32.totalorder %s160, %s161
      %p173 = scmp.eq.s32.totalorder %s25, 1
      %p174 = por %p172, %p173
      %p176 = scmp.ne.s32.totalorder %s161, %s175
      %p177 = scmp.eq.s32.totalorder %s25, 0
      %p178 = por %p176, %p177
      %s180 = sadd.s32 %s179, 1
      %p183 = scmp.eq.s32.totalorder %s19, 1
      %p184 = scmp.ne.s32.totalorder %s179, %s181
      %p185 = scmp.eq.s32.totalorder %s19, 0
      %p186 = por %p184, %p185
      %p187 = scmp.ne.s32.totalorder %s179, %s181
      %p188 = scmp.eq.s32.totalorder %s24, 1
      %p189 = por %p187, %p188
      %p190 = scmp.ne.s32.totalorder %s181, %s182
      %p191 = scmp.eq.s32.totalorder %s24, 0
      %p192 = por %p190, %p191
      %p193 = scmp.ne.s32.totalorder %s181, %s182
      %p194 = scmp.eq.s32.totalorder %s25, 1
      %p195 = por %p193, %p194
      %p197 = scmp.ne.s32.totalorder %s182, %s196
      %p198 = scmp.eq.s32.totalorder %s25, 0
      %p199 = por %p197, %p198
      %s201 = sadd.s32 %s200, 1
      %p204 = scmp.eq.s32.totalorder %s19, 1
      %p205 = scmp.ne.s32.totalorder %s200, %s202
      %p206 = scmp.eq.s32.totalorder %s19, 0
      %p207 = por %p205, %p206
      %p208 = scmp.ne.s32.totalorder %s200, %s202
      %p209 = scmp.eq.s32.totalorder %s24, 1
      %p210 = por %p208, %p209
      %p211 = scmp.ne.s32.totalorder %s202, %s203
      %p212 = scmp.eq.s32.totalorder %s24, 0
      %p213 = por %p211, %p212
      %p214 = scmp.ne.s32.totalorder %s202, %s203
      %p215 = scmp.eq.s32.totalorder %s25, 1
      %p216 = por %p214, %p215
      %p218 = scmp.ne.s32.totalorder %s203, %s217
      %p219 = scmp.eq.s32.totalorder %s25, 0
      %p220 = por %p218, %p219
      %s221 = ssub.s32 %s19, %s26
      %p222 = scmp.eq.s32.totalorder %s221, 0
      %s224 = sadd.s32 %s223, 1
      %s225 = scalar_select %p222, %s223, %s224
      %p228 = pneg %p222
      %p229 = scmp.eq.s32.totalorder %s19, 1
      %p230 = por %p228, %p229
      %p231 = scmp.ne.s32.totalorder %s223, %s226
      %p232 = scmp.eq.s32.totalorder %s19, 0
      %p233 = por %p231, %p232
      %p234 = scmp.ne.s32.totalorder %s223, %s226
      %p235 = scmp.eq.s32.totalorder %s24, 1
      %p236 = por %p234, %p235
      %p237 = scmp.ne.s32.totalorder %s226, %s227
      %p238 = scmp.eq.s32.totalorder %s24, 0
      %p239 = por %p237, %p238
      %p240 = scmp.ne.s32.totalorder %s226, %s227
      %p241 = scmp.eq.s32.totalorder %s25, 1
      %p242 = por %p240, %p241
      %p244 = scmp.ne.s32.totalorder %s227, %s243
      %p245 = scmp.eq.s32.totalorder %s25, 0
      %p246 = por %p244, %p245
      %p247 = scmp.le.s32.totalorder 1, %s19
      %p248 = scmp.lt.s32.totalorder %s19, 3
      %p249 = pnand %p247, %p248
      %p250 = pneg %p249
      // Predicated region
      $region9: #{cpgm_forward.1} parent=5 // pred_check
        _
      $region10: #{cpgm_forward.1} parent=5 // pred_check_branch
        %252 = sbr.rel (%p249) target = $region12
      $region11: #{cpgm_forward.1} parent=5 // pred_region
        %s253 = ssub.s32 %s19, 1
        // Predicated region
        $region13: #{cpgm_forward.1} parent=11 // pred_check
          %p254 = pneg %p66
        $region14: #{cpgm_forward.1} parent=11 // pred_check_branch
          %256 = sbr.rel (%p254) target = $region16
        $region15: #{cpgm_forward.1} parent=11 // pred_region
          _
        $region16: #{cpgm_forward.1} parent=11 // pred_fallthru
          _
        // Predicated region
        $region17: #{cpgm_forward.1} parent=11 // pred_check
          %p257 = pneg %p87
        $region18: #{cpgm_forward.1} parent=11 // pred_check_branch
          %259 = sbr.rel (%p257) target = $region20
        $region19: #{cpgm_forward.1} parent=11 // pred_region
          %261 = vsyncadd [#allocation3], 0
          %s262 = sshll.u32 %s2, 4
          %s263 = int_to_ptr.hbm [resolvable:$true] %s262
          %s264 = sshll.u32 [#allocation2], 4
          %s265 = int_to_ptr.vmem [resolvable:$true] %s264
          %270 = dma.hbm_to_vmem [thread:$0]  %s263, 5120, %s265, [#allocation3], 128, 128, 8
        $region20: #{cpgm_forward.1} parent=11 // pred_fallthru
          _
        // Predicated region
        $region21: #{cpgm_forward.1} parent=11 // pred_check
          %p271 = pneg %p108
        $region22: #{cpgm_forward.1} parent=11 // pred_check_branch
          %273 = sbr.rel (%p271) target = $region24
        $region23: #{cpgm_forward.1} parent=11 // pred_region
          %275 = vsyncadd [#allocation5], 0
          %s276 = sshll.u32 %s3, 4
          %s277 = int_to_ptr.hbm [resolvable:$true] %s276
          %s278 = sshll.u32 [#allocation4], 4
          %s279 = int_to_ptr.vmem [resolvable:$true] %s278
          %284 = dma.hbm_to_vmem [thread:$0]  %s277, 5120, %s279, [#allocation5], 128, 128, 8
        $region24: #{cpgm_forward.1} parent=11 // pred_fallthru
          _
        // Predicated region
        $region25: #{cpgm_forward.1} parent=11 // pred_check
          %p285 = pneg %p129
        $region26: #{cpgm_forward.1} parent=11 // pred_check_branch
          %287 = sbr.rel (%p285) target = $region28
        $region27: #{cpgm_forward.1} parent=11 // pred_region
          %289 = vsyncadd [#allocation5], 0
          %s290 = sshll.u32 %s4, 4
          %s291 = int_to_ptr.hbm [resolvable:$true] %s290
          %s292 = sshll.u32 [#allocation6], 4
          %s293 = int_to_ptr.vmem [resolvable:$true] %s292
          %298 = dma.hbm_to_vmem [thread:$0]  %s291, 73728, %s293, [#allocation5], 256, 256, 16
        $region28: #{cpgm_forward.1} parent=11 // pred_fallthru
          _
        // Predicated region
        $region29: #{cpgm_forward.1} parent=11 // pred_check
          %p299 = pneg %p150
        $region30: #{cpgm_forward.1} parent=11 // pred_check_branch
          %301 = sbr.rel (%p299) target = $region32
        $region31: #{cpgm_forward.1} parent=11 // pred_region
          %303 = vsyncadd [#allocation8], 0
          %s304 = sshll.u32 %s5, 4
          %s305 = int_to_ptr.hbm [resolvable:$true] %s304
          %s306 = sshll.u32 [#allocation7], 4
          %s307 = int_to_ptr.vmem [resolvable:$true] %s306
          %312 = dma.hbm_to_vmem [thread:$0]  %s305, 2048, %s307, [#allocation8], 256, 256, 16
        $region32: #{cpgm_forward.1} parent=11 // pred_fallthru
          _
        // Predicated region
        $region33: #{cpgm_forward.1} parent=11 // pred_check
          %p313 = pneg %p171
        $region34: #{cpgm_forward.1} parent=11 // pred_check_branch
          %315 = sbr.rel (%p313) target = $region36
        $region35: #{cpgm_forward.1} parent=11 // pred_region
          _
        $region36: #{cpgm_forward.1} parent=11 // pred_fallthru
          _
        // Predicated region
        $region37: #{cpgm_forward.1} parent=11 // pred_check
          %p316 = pneg %p192
        $region38: #{cpgm_forward.1} parent=11 // pred_check_branch
          %318 = sbr.rel (%p316) target = $region40
        $region39: #{cpgm_forward.1} parent=11 // pred_region
          %320 = vsyncadd [#allocation8], 0
          %s322 = sshll.u32 %s7, 4
          %s323 = int_to_ptr.hbm [resolvable:$true] %s322
          %s324 = sshll.u32 [#allocation9], 4
          %s325 = int_to_ptr.vmem [resolvable:$true] %s324
          %327 = dma.hbm_to_vmem [thread:$0]  %s323, 64, %s325, [#allocation8]
        $region40: #{cpgm_forward.1} parent=11 // pred_fallthru
          _
        // Predicated region
        $region41: #{cpgm_forward.1} parent=11 // pred_check
          %p328 = pneg %p213
        $region42: #{cpgm_forward.1} parent=11 // pred_check_branch
          %330 = sbr.rel (%p328) target = $region44
        $region43: #{cpgm_forward.1} parent=11 // pred_region
          %332 = vsyncadd [#allocation11], 0
          %s334 = sshll.u32 %s8, 4
          %s335 = int_to_ptr.hbm [resolvable:$true] %s334
          %s336 = sshll.u32 [#allocation10], 4
          %s337 = int_to_ptr.vmem [resolvable:$true] %s336
          %339 = dma.hbm_to_vmem [thread:$0]  %s335, 64, %s337, [#allocation11]
        $region44: #{cpgm_forward.1} parent=11 // pred_fallthru
          _
      $region12: #{cpgm_forward.1} parent=5 // pred_fallthru
        _
      %p340 = scmp.lt.s32.totalorder %s19, 2
      // Predicated region
      $region45: #{cpgm_forward.1} parent=5 // pred_check
        %p341 = pneg %p340
      $region46: #{cpgm_forward.1} parent=5 // pred_check_branch
        %343 = sbr.rel (%p341) target = $region48
      $region47: #{cpgm_forward.1} parent=5 // pred_region
        // Predicated region
        $region49: #{cpgm_forward.1} parent=47 // pred_check
          %p344 = pneg %p39
        $region50: #{cpgm_forward.1} parent=47 // pred_check_branch
          %346 = sbr.rel (%p344) target = $region52
        $region51: #{cpgm_forward.1} parent=47 // pred_region
          %p347 = scmp.lt.s32.totalorder %s19, 1
          %s348 = scalar_select %p347, %s19, 1
          %s349 = smul.addr %s348, 2
          %s350 = smul.addr %s349, 4
          %s351 = scalar_lea.vmem %s0, %s350
        $region52: #{cpgm_forward.1} parent=47 // pred_fallthru
          _
      $region48: #{cpgm_forward.1} parent=5 // pred_fallthru
        _
      %p352 = scmp.le.s32.totalorder 1, %s19
      %p353 = scmp.lt.s32.totalorder %s19, 3
      %p354 = pnand %p352, %p353
      %p355 = pneg %p354
      // Predicated region
      $region53: #{cpgm_forward.1} parent=5 // pred_check
        _
      $region54: #{cpgm_forward.1} parent=5 // pred_check_branch
        %357 = sbr.rel (%p354) target = $region56
      $region55: #{cpgm_forward.1} parent=5 // pred_region
        %s358 = ssub.s32 %s19, 1
        // Predicated region
        $region57: #{cpgm_forward.1} parent=55 // pred_check
          %p359 = pneg %p87
        $region58: #{cpgm_forward.1} parent=55 // pred_check_branch
          %361 = sbr.rel (%p359) target = $region60
        $region59: #{cpgm_forward.1} parent=55 // pred_region
          %363 = dma.done [#allocation3], 5120
        $region60: #{cpgm_forward.1} parent=55 // pred_fallthru
          _
        // Predicated region
        $region61: #{cpgm_forward.1} parent=55 // pred_check
          %p364 = pneg %p108
        $region62: #{cpgm_forward.1} parent=55 // pred_check_branch
          %366 = sbr.rel (%p364) target = $region64
        $region63: #{cpgm_forward.1} parent=55 // pred_region
          %368 = dma.done [#allocation5], 5120
        $region64: #{cpgm_forward.1} parent=55 // pred_fallthru
          _
        // Predicated region
        $region65: #{cpgm_forward.1} parent=55 // pred_check
          %p369 = pneg %p129
        $region66: #{cpgm_forward.1} parent=55 // pred_check_branch
          %371 = sbr.rel (%p369) target = $region68
        $region67: #{cpgm_forward.1} parent=55 // pred_region
          %373 = dma.done [#allocation5], 73728
        $region68: #{cpgm_forward.1} parent=55 // pred_fallthru
          _
        // Predicated region
        $region69: #{cpgm_forward.1} parent=55 // pred_check
          %p374 = pneg %p150
        $region70: #{cpgm_forward.1} parent=55 // pred_check_branch
          %376 = sbr.rel (%p374) target = $region72
        $region71: #{cpgm_forward.1} parent=55 // pred_region
          %378 = dma.done [#allocation8], 2048
        $region72: #{cpgm_forward.1} parent=55 // pred_fallthru
          _
        // Predicated region
        $region73: #{cpgm_forward.1} parent=55 // pred_check
          %p379 = pneg %p192
        $region74: #{cpgm_forward.1} parent=55 // pred_check_branch
          %381 = sbr.rel (%p379) target = $region76
        $region75: #{cpgm_forward.1} parent=55 // pred_region
          %383 = dma.done [#allocation8], 64
        $region76: #{cpgm_forward.1} parent=55 // pred_fallthru
          _
        // Predicated region
        $region77: #{cpgm_forward.1} parent=55 // pred_check
          %p384 = pneg %p213
        $region78: #{cpgm_forward.1} parent=55 // pred_check_branch
          %386 = sbr.rel (%p384) target = $region80
        $region79: #{cpgm_forward.1} parent=55 // pred_region
          %388 = dma.done [#allocation11], 64
        $region80: #{cpgm_forward.1} parent=55 // pred_fallthru
          _
        %p389 = scmp.lt.s32.totalorder %s24, 1
        %s390 = scalar_select %p389, %s24, 1
        %s391 = smul.addr %s390, 2
        %s392 = smul.addr %s391, 4
        %s393 = scalar_lea.vmem %s0, %s392
        %p394 = pneg %p45
        %p395 = pneg %p42
        %p396 = pneg %p66
        %p397 = pneg %p63
        %p398 = pneg %p87
        %p399 = pneg %p84
        %p400 = pneg %p108
        %p401 = pneg %p105
        %p402 = pneg %p129
        %p403 = pneg %p126
        %p404 = pneg %p150
        %p405 = pneg %p147
        %p406 = pneg %p171
        %p407 = pneg %p168
        %p408 = pneg %p192
        %p409 = pneg %p189
        %p410 = pneg %p213
        %p411 = pneg %p210
        %p412 = pneg %p239
        %p413 = pneg %p236
        %p414 = scmp.lt.s32.totalorder %s24, 1
        %s415 = scalar_select %p414, %s24, 1
        %s416 = smul.addr %s415, 2
        %s417 = smul.addr %s416, 4
        %s418 = scalar_lea.vmem %s9, %s417
        %p419 = scmp.lt.s32.totalorder %s24, 1
        %s420 = scalar_select %p419, %s24, 1
        %s421 = smul.addr %s420, 2
        %s422 = smul.addr %s421, 4
        %s423 = scalar_lea.vmem %s0, %s422
        %p424 = scmp.lt.s32.totalorder %s24, 1
        %s425 = scalar_select %p424, %s24, 1
        %s426 = smul.addr %s425, 2
        %s427 = smul.addr %s426, 4
        %s428 = scalar_lea.vmem %s9, %s427
        %v429 = vld [vmem:[%s423] sm:$0xff]
        %v430 = vld [vmem:[#allocation9] sm:$0xf]
        %v431 = vld [vmem:[#allocation10] sm:$0xf]
        %v432 = vld [vmem:[%s1] sm:$0xff]
        %v433 = vld [vmem:[%s1 + $0x8] sm:$0xff]
        %v434 = vld [vmem:[%s1 + $0x10] sm:$0xff]
        %v435 = vld [vmem:[%s1 + $0x18] sm:$0xff]
        %v436 = vld [vmem:[%s1 + $0x20] sm:$0xff]
        %v437 = vld [vmem:[%s1 + $0x28] sm:$0xff]
        %v438 = vld [vmem:[%s1 + $0x30] sm:$0xff]
        %v439 = vld [vmem:[%s1 + $0x38] sm:$0xff]
        %v440 = vld [vmem:[%s1 + $0x40] sm:$0xff]
        %v441 = vld [vmem:[%s1 + $0x48] sm:$0xff]
        %v442 = vld [vmem:[%s1 + $0x50] sm:$0xff]
        %v443 = vld [vmem:[%s1 + $0x58] sm:$0xff]
        %v444 = vld [vmem:[%s1 + $0x60] sm:$0xff]
        %v445 = vld [vmem:[%s1 + $0x68] sm:$0xff]
        %v446 = vld [vmem:[%s1 + $0x70] sm:$0xff]
        %v447 = vld [vmem:[%s1 + $0x78] sm:$0xff]
        %v448 = vld [vmem:[%s1 + $0x80] sm:$0xff]
        %v449 = vld [vmem:[%s1 + $0x88] sm:$0xff]
        %v450 = vld [vmem:[%s1 + $0x90] sm:$0xff]
        %v451 = vld [vmem:[%s1 + $0x98] sm:$0xff]
        %v452 = vld [vmem:[%s1 + $0xa0] sm:$0xff]
        %v453 = vld [vmem:[%s1 + $0xa8] sm:$0xff]
        %v454 = vld [vmem:[%s1 + $0xb0] sm:$0xff]
        %v455 = vld [vmem:[%s1 + $0xb8] sm:$0xff]
        %v456 = vld [vmem:[%s1 + $0xc0] sm:$0xff]
        %v457 = vld [vmem:[%s1 + $0xc8] sm:$0xff]
        %v458 = vld [vmem:[%s1 + $0xd0] sm:$0xff]
        %v459 = vld [vmem:[%s1 + $0xd8] sm:$0xff]
        %v460 = vld [vmem:[%s1 + $0xe0] sm:$0xff]
        %v461 = vld [vmem:[%s1 + $0xe8] sm:$0xff]
        %v462 = vld [vmem:[%s1 + $0xf0] sm:$0xff]
        %v463 = vld [vmem:[%s1 + $0xf8] sm:$0xff]
        %465 = vst [vmem:[#allocation1] ss:$2 sm:$0xff] %v429
        %v466 = vld.sshfl [vmem:[#allocation1] sm:$0xff pattern:$0x75316420]
        %v467 = vld.sshfl [vmem:[#allocation1 + $0x8] sm:$0xff pattern:$0x75316420]
        %470 = vmatpush.msra.mxu0 %v447
        %471 = vmatpush.msra.mxu0 %v446
        %472 = vmatpush.msra.mxu0 %v445
        %473 = vmatpush.msra.mxu0 %v444
        %474 = vmatpush.msra.mxu0 %v443
        %475 = vmatpush.msra.mxu0 %v442
        %476 = vmatpush.msra.mxu0 %v441
        %477 = vmatpush.msra.mxu0 %v440
        %478 = vmatpush.msra.mxu0 %v439
        %479 = vmatpush.msra.mxu0 %v438
        %480 = vmatpush.msra.mxu0 %v437
        %481 = vmatpush.msra.mxu0 %v436
        %482 = vmatpush.msra.mxu0 %v435
        %483 = vmatpush.msra.mxu0 %v434
        %484 = vmatpush.msra.mxu0 %v433
        %485 = vmatpush.msra.mxu0 %v432
        %486 = vmatmul.f32.gmra.mxu0 %v466
        %v487 = vpop.f32.mrf.mxu0
        %v488 = vadd.f32 0.0, %v487
        %489 = vdwg.mxu0
        %490 = vmatpush.msra.mxu0 %v463
        %491 = vmatpush.msra.mxu0 %v462
        %492 = vmatpush.msra.mxu0 %v461
        %493 = vmatpush.msra.mxu0 %v460
        %494 = vmatpush.msra.mxu0 %v459
        %495 = vmatpush.msra.mxu0 %v458
        %496 = vmatpush.msra.mxu0 %v457
        %497 = vmatpush.msra.mxu0 %v456
        %498 = vmatpush.msra.mxu0 %v455
        %499 = vmatpush.msra.mxu0 %v454
        %500 = vmatpush.msra.mxu0 %v453
        %501 = vmatpush.msra.mxu0 %v452
        %502 = vmatpush.msra.mxu0 %v451
        %503 = vmatpush.msra.mxu0 %v450
        %504 = vmatpush.msra.mxu0 %v449
        %505 = vmatpush.msra.mxu0 %v448
        %506 = vmatmul.f32.gmra.mxu0 %v467
        %v507 = vpop.f32.mrf.mxu0
        %v508 = vadd.f32 %v488, %v507
        %509 = vdwg.mxu0
        %vm510 = vcmask 519168
        %v511 = vsel %vm510, %v508, 0.0
        %512 = vadd.xlane.f32.xlu0 %v511
        %v513 = vpop.xlane.xlu0 %512
        %v514 = vrcp.pop 64.0
        %v515 = vmul.f32 64.0, %v514
        %v516 = vsub.f32 1.0, %v515
        %v517 = vmul.f32 %v514, %v516
        %v518 = vadd.f32 %v514, %v517
        %vm519 = vweird.f32 %v514
        %v520 = vsel %vm519, %v514, %v518
        %v521 = vmul.f32 %v513, %v520
        %v522 = vmul.f32 %v521, %v508
        %v523 = vld [vmem:[%s6] sm:$0xf]
        %525 = vset.pattern.permute.xlu0 0
        %526 = vperm.xlu0 %525, %v430
        %v527 = vpop.permute.xlu0 %526
        %vm529 = vcmask 31744
        %v531 = vsel %vm529, %v523, 0
        %vm533 = vcmask 1043456
        %v535 = vsel %vm533, %v522, 0
        %537 = vmatpush.msra.mxu0 0.0
        %538 = vmatpush.msra.mxu0 0.0
        %539 = vmatpush.msra.mxu0 0.0
        %540 = vmatpush.msra.mxu0 0.0
        %541 = vmatpush.msra.mxu0 0.0
        %542 = vmatpush.msra.mxu0 0.0
        %543 = vmatpush.msra.mxu0 0.0
        %544 = vmatpush.msra.mxu0 0.0
        %545 = vmatpush.msra.mxu0 0.0
        %546 = vmatpush.msra.mxu0 0.0
        %547 = vmatpush.msra.mxu0 0.0
        %548 = vmatpush.msra.mxu0 0.0
        %549 = vmatpush.msra.mxu0 0.0
        %550 = vmatpush.msra.mxu0 0.0
        %551 = vmatpush.msra.mxu0 0.0
        %552 = vmatpush.msra.mxu0 %v535
        %553 = vmatmul.f32.gmra.mxu0 %v531
        %v554 = vpop.f32.mrf.mxu0
        %v555 = vadd.f32 %v527, %v554
        %556 = vdwg.mxu0
        %s557 = scalar_lea.vmem %s6, 4
        %v558 = vld [vmem:[%s557] sm:$0xf]
        %559 = vset.pattern.permute.xlu0 1
        %560 = vperm.xlu0 %559, %v430
        %v561 = vpop.permute.xlu0 %560
        %v564 = vsel %vm529, %v558, 0
        %566 = vmatpush.msra.mxu0 0.0
        %567 = vmatpush.msra.mxu0 0.0
        %568 = vmatpush.msra.mxu0 0.0
        %569 = vmatpush.msra.mxu0 0.0
        %570 = vmatpush.msra.mxu0 0.0
        %571 = vmatpush.msra.mxu0 0.0
        %572 = vmatpush.msra.mxu0 0.0
        %573 = vmatpush.msra.mxu0 0.0
        %574 = vmatpush.msra.mxu0 0.0
        %575 = vmatpush.msra.mxu0 0.0
        %576 = vmatpush.msra.mxu0 0.0
        %577 = vmatpush.msra.mxu0 0.0
        %578 = vmatpush.msra.mxu0 0.0
        %579 = vmatpush.msra.mxu0 0.0
        %580 = vmatpush.msra.mxu0 0.0
        %581 = vmatpush.msra.mxu0 %v535
        %582 = vmatmul.f32.gmra.mxu0 %v564
        %v583 = vpop.f32.mrf.mxu0
        %v584 = vadd.f32 %v561, %v583
        %585 = vdwg.mxu0
        %v586 = vxor.u32 %v555, 2147483648
        %v587 = vmul.f32 %v586, 1.442695
        %v588 = vpow.pop %v587
        %v589 = vadd.f32 %v588, 1.0
        %v590 = vrcp.pop %v589
        %v591 = vmul.f32 %v589, %v590
        %v592 = vsub.f32 1.0, %v591
        %v593 = vmul.f32 %v590, %v592
        %v594 = vadd.f32 %v590, %v593
        %vm595 = vweird.f32 %v589
        %vm596 = vweird.f32 %v590
        %vm597 = vmor %vm595, %vm596
        %v598 = vsel %vm597, %v590, %v594
        %v599 = vand.u32 2147483647, %v589
        %vm600 = vcmp.eq.f32.partialorder %v599, 8.507059e+37
        %v601 = vand.u32 %v589, 2147483648
        %v602 = vor.u32 1.1754944e-38, %v601
        %v603 = vsel %vm600, %v602, %v598
        %v604 = vmul.f32 1.0, %v603
        %v605 = vmul.f32 %v604, %v584
        %v606 = vadd.f32 %v605, %v522
        %s607 = scalar_lea.vmem %s6, 8
        %v608 = vld [vmem:[%s607] sm:$0xf]
        %609 = vset.pattern.permute.xlu0 2
        %610 = vperm.xlu0 %609, %v430
        %v611 = vpop.permute.xlu0 %610
        %v614 = vsel %vm529, %v608, 0
        %v617 = vsel %vm533, %v606, 0
        %619 = vmatpush.msra.mxu0 0.0
        %620 = vmatpush.msra.mxu0 0.0
        %621 = vmatpush.msra.mxu0 0.0
        %622 = vmatpush.msra.mxu0 0.0
        %623 = vmatpush.msra.mxu0 0.0
        %624 = vmatpush.msra.mxu0 0.0
        %625 = vmatpush.msra.mxu0 0.0
        %626 = vmatpush.msra.mxu0 0.0
        %627 = vmatpush.msra.mxu0 0.0
        %628 = vmatpush.msra.mxu0 0.0
        %629 = vmatpush.msra.mxu0 0.0
        %630 = vmatpush.msra.mxu0 0.0
        %631 = vmatpush.msra.mxu0 0.0
        %632 = vmatpush.msra.mxu0 0.0
        %633 = vmatpush.msra.mxu0 0.0
        %634 = vmatpush.msra.mxu0 %v617
        %635 = vmatmul.f32.gmra.mxu0 %v614
        %v636 = vpop.f32.mrf.mxu0
        %v637 = vadd.f32 %v611, %v636
        %638 = vdwg.mxu0
        %v639 = vld [vmem:[#allocation2] sm:$0xff]
        %v640 = vld [vmem:[#allocation2 + $0x8] sm:$0xff]
        %v641 = vld [vmem:[#allocation2 + $0x10] sm:$0xff]
        %v642 = vld [vmem:[#allocation2 + $0x18] sm:$0xff]
        %v643 = vld [vmem:[#allocation2 + $0x20] sm:$0xff]
        %v644 = vld [vmem:[#allocation2 + $0x28] sm:$0xff]
        %v645 = vld [vmem:[#allocation2 + $0x30] sm:$0xff]
        %v646 = vld [vmem:[#allocation2 + $0x38] sm:$0xff]
        %vm647 = vcmask 523264
        %v649 = vsel %vm647, %v508, 0
        %651 = vmatpush.msra.mxu0 0.0
        %652 = vmatpush.msra.mxu0 0.0
        %653 = vmatpush.msra.mxu0 0.0
        %654 = vmatpush.msra.mxu0 0.0
        %655 = vmatpush.msra.mxu0 0.0
        %656 = vmatpush.msra.mxu0 0.0
        %657 = vmatpush.msra.mxu0 0.0
        %658 = vmatpush.msra.mxu0 0.0
        %659 = vmatpush.msra.mxu0 %v646
        %660 = vmatpush.msra.mxu0 %v645
        %661 = vmatpush.msra.mxu0 %v644
        %662 = vmatpush.msra.mxu0 %v643
        %663 = vmatpush.msra.mxu0 %v642
        %664 = vmatpush.msra.mxu0 %v641
        %665 = vmatpush.msra.mxu0 %v640
        %666 = vmatpush.msra.mxu0 %v639
        %667 = vmatmul.f32.gmra.mxu0 %v649
        %v668 = vpop.f32.mrf.mxu0
        %v669 = vadd.f32 0.0, %v668
        %670 = vdwg.mxu0
        %672 = vset.pattern.permute.xlu0 0
        %673 = vperm.xlu0 %672, %v431
        %v674 = vpop.permute.xlu0 %673
        %v676 = vmul.f32 %v674, %v669
        %v677 = vld [vmem:[#allocation4] sm:$0xff]
        %v678 = vld [vmem:[#allocation4 + $0x8] sm:$0xff]
        %v679 = vld [vmem:[#allocation4 + $0x10] sm:$0xff]
        %v680 = vld [vmem:[#allocation4 + $0x18] sm:$0xff]
        %v681 = vld [vmem:[#allocation4 + $0x20] sm:$0xff]
        %v682 = vld [vmem:[#allocation4 + $0x28] sm:$0xff]
        %v683 = vld [vmem:[#allocation4 + $0x30] sm:$0xff]
        %v684 = vld [vmem:[#allocation4 + $0x38] sm:$0xff]
        %685 = vmatpush.msra.mxu0 0.0
        %686 = vmatpush.msra.mxu0 0.0
        %687 = vmatpush.msra.mxu0 0.0
        %688 = vmatpush.msra.mxu0 0.0
        %689 = vmatpush.msra.mxu0 0.0
        %690 = vmatpush.msra.mxu0 0.0
        %691 = vmatpush.msra.mxu0 0.0
        %692 = vmatpush.msra.mxu0 0.0
        %693 = vmatpush.msra.mxu0 %v684
        %694 = vmatpush.msra.mxu0 %v683
        %695 = vmatpush.msra.mxu0 %v682
        %696 = vmatpush.msra.mxu0 %v681
        %697 = vmatpush.msra.mxu0 %v680
        %698 = vmatpush.msra.mxu0 %v679
        %699 = vmatpush.msra.mxu0 %v678
        %700 = vmatpush.msra.mxu0 %v677
        %701 = vmatmul.f32.gmra.mxu0 %v649
        %v702 = vpop.f32.mrf.mxu0
        %v703 = vadd.f32 0.0, %v702
        %704 = vdwg.mxu0
        %705 = vset.pattern.permute.xlu0 5
        %706 = vperm.xlu0 %705, %v431
        %v707 = vpop.permute.xlu0 %706
        %v709 = vmul.f32 %v707, %v703
        %s710 = scalar_lea.vmem [#allocation2], 64
        %v711 = vld [vmem:[%s710] sm:$0xff]
        %v712 = vld [vmem:[%s710 + $0x8] sm:$0xff]
        %v713 = vld [vmem:[%s710 + $0x10] sm:$0xff]
        %v714 = vld [vmem:[%s710 + $0x18] sm:$0xff]
        %v715 = vld [vmem:[%s710 + $0x20] sm:$0xff]
        %v716 = vld [vmem:[%s710 + $0x28] sm:$0xff]
        %v717 = vld [vmem:[%s710 + $0x30] sm:$0xff]
        %v718 = vld [vmem:[%s710 + $0x38] sm:$0xff]
        %719 = vmatpush.msra.mxu0 0.0
        %720 = vmatpush.msra.mxu0 0.0
        %721 = vmatpush.msra.mxu0 0.0
        %722 = vmatpush.msra.mxu0 0.0
        %723 = vmatpush.msra.mxu0 0.0
        %724 = vmatpush.msra.mxu0 0.0
        %725 = vmatpush.msra.mxu0 0.0
        %726 = vmatpush.msra.mxu0 0.0
        %727 = vmatpush.msra.mxu0 %v718
        %728 = vmatpush.msra.mxu0 %v717
        %729 = vmatpush.msra.mxu0 %v716
        %730 = vmatpush.msra.mxu0 %v715
        %731 = vmatpush.msra.mxu0 %v714
        %732 = vmatpush.msra.mxu0 %v713
        %733 = vmatpush.msra.mxu0 %v712
        %734 = vmatpush.msra.mxu0 %v711
        %735 = vmatmul.f32.gmra.mxu0 %v649
        %v736 = vpop.f32.mrf.mxu0
        %v737 = vadd.f32 0.0, %v736
        %738 = vdwg.mxu0
        %739 = vset.pattern.permute.xlu0 1
        %740 = vperm.xlu0 %739, %v431
        %v741 = vpop.permute.xlu0 %740
        %v743 = vmul.f32 %v741, %v737
        %v744 = vadd.f32 %v676, %v743
        %s745 = scalar_lea.vmem [#allocation4], 64
        %v746 = vld [vmem:[%s745] sm:$0xff]
        %v747 = vld [vmem:[%s745 + $0x8] sm:$0xff]
        %v748 = vld [vmem:[%s745 + $0x10] sm:$0xff]
        %v749 = vld [vmem:[%s745 + $0x18] sm:$0xff]
        %v750 = vld [vmem:[%s745 + $0x20] sm:$0xff]
        %v751 = vld [vmem:[%s745 + $0x28] sm:$0xff]
        %v752 = vld [vmem:[%s745 + $0x30] sm:$0xff]
        %v753 = vld [vmem:[%s745 + $0x38] sm:$0xff]
        %754 = vmatpush.msra.mxu0 0.0
        %755 = vmatpush.msra.mxu0 0.0
        %756 = vmatpush.msra.mxu0 0.0
        %757 = vmatpush.msra.mxu0 0.0
        %758 = vmatpush.msra.mxu0 0.0
        %759 = vmatpush.msra.mxu0 0.0
        %760 = vmatpush.msra.mxu0 0.0
        %761 = vmatpush.msra.mxu0 0.0
        %762 = vmatpush.msra.mxu0 %v753
        %763 = vmatpush.msra.mxu0 %v752
        %764 = vmatpush.msra.mxu0 %v751
        %765 = vmatpush.msra.mxu0 %v750
        %766 = vmatpush.msra.mxu0 %v749
        %767 = vmatpush.msra.mxu0 %v748
        %768 = vmatpush.msra.mxu0 %v747
        %769 = vmatpush.msra.mxu0 %v746
        %770 = vmatmul.f32.gmra.mxu0 %v649
        %v771 = vpop.f32.mrf.mxu0
        %v772 = vadd.f32 0.0, %v771
        %773 = vdwg.mxu0
        %774 = vset.pattern.permute.xlu0 6
        %775 = vperm.xlu0 %774, %v431
        %v776 = vpop.permute.xlu0 %775
        %v778 = vmul.f32 %v776, %v772
        %v779 = vadd.f32 %v709, %v778
        %s780 = scalar_lea.vmem [#allocation2], 128
        %v781 = vld [vmem:[%s780] sm:$0xff]
        %v782 = vld [vmem:[%s780 + $0x8] sm:$0xff]
        %v783 = vld [vmem:[%s780 + $0x10] sm:$0xff]
        %v784 = vld [vmem:[%s780 + $0x18] sm:$0xff]
        %v785 = vld [vmem:[%s780 + $0x20] sm:$0xff]
        %v786 = vld [vmem:[%s780 + $0x28] sm:$0xff]
        %v787 = vld [vmem:[%s780 + $0x30] sm:$0xff]
        %v788 = vld [vmem:[%s780 + $0x38] sm:$0xff]
        %789 = vmatpush.msra.mxu0 0.0
        %790 = vmatpush.msra.mxu0 0.0
        %791 = vmatpush.msra.mxu0 0.0
        %792 = vmatpush.msra.mxu0 0.0
        %793 = vmatpush.msra.mxu0 0.0
        %794 = vmatpush.msra.mxu0 0.0
        %795 = vmatpush.msra.mxu0 0.0
        %796 = vmatpush.msra.mxu0 0.0
        %797 = vmatpush.msra.mxu0 %v788
        %798 = vmatpush.msra.mxu0 %v787
        %799 = vmatpush.msra.mxu0 %v786
        %800 = vmatpush.msra.mxu0 %v785
        %801 = vmatpush.msra.mxu0 %v784
        %802 = vmatpush.msra.mxu0 %v783
        %803 = vmatpush.msra.mxu0 %v782
        %804 = vmatpush.msra.mxu0 %v781
        %805 = vmatmul.f32.gmra.mxu0 %v649
        %v806 = vpop.f32.mrf.mxu0
        %v807 = vadd.f32 0.0, %v806
        %808 = vdwg.mxu0
        %809 = vset.pattern.permute.xlu0 2
        %810 = vperm.xlu0 %809, %v431
        %v811 = vpop.permute.xlu0 %810
        %v813 = vmul.f32 %v811, %v807
        %v814 = vadd.f32 %v744, %v813
        %s815 = scalar_lea.vmem [#allocation4], 128
        %v816 = vld [vmem:[%s815] sm:$0xff]
        %v817 = vld [vmem:[%s815 + $0x8] sm:$0xff]
        %v818 = vld [vmem:[%s815 + $0x10] sm:$0xff]
        %v819 = vld [vmem:[%s815 + $0x18] sm:$0xff]
        %v820 = vld [vmem:[%s815 + $0x20] sm:$0xff]
        %v821 = vld [vmem:[%s815 + $0x28] sm:$0xff]
        %v822 = vld [vmem:[%s815 + $0x30] sm:$0xff]
        %v823 = vld [vmem:[%s815 + $0x38] sm:$0xff]
        %824 = vmatpush.msra.mxu0 0.0
        %825 = vmatpush.msra.mxu0 0.0
        %826 = vmatpush.msra.mxu0 0.0
        %827 = vmatpush.msra.mxu0 0.0
        %828 = vmatpush.msra.mxu0 0.0
        %829 = vmatpush.msra.mxu0 0.0
        %830 = vmatpush.msra.mxu0 0.0
        %831 = vmatpush.msra.mxu0 0.0
        %832 = vmatpush.msra.mxu0 %v823
        %833 = vmatpush.msra.mxu0 %v822
        %834 = vmatpush.msra.mxu0 %v821
        %835 = vmatpush.msra.mxu0 %v820
        %836 = vmatpush.msra.mxu0 %v819
        %837 = vmatpush.msra.mxu0 %v818
        %838 = vmatpush.msra.mxu0 %v817
        %839 = vmatpush.msra.mxu0 %v816
        %840 = vmatmul.f32.gmra.mxu0 %v649
        %v841 = vpop.f32.mrf.mxu0
        %v842 = vadd.f32 0.0, %v841
        %843 = vdwg.mxu0
        %844 = vset.pattern.permute.xlu0 7
        %845 = vperm.xlu0 %844, %v431
        %v846 = vpop.permute.xlu0 %845
        %v848 = vmul.f32 %v846, %v842
        %v849 = vadd.f32 %v779, %v848
        %s850 = scalar_lea.vmem [#allocation2], 192
        %v851 = vld [vmem:[%s850] sm:$0xff]
        %v852 = vld [vmem:[%s850 + $0x8] sm:$0xff]
        %v853 = vld [vmem:[%s850 + $0x10] sm:$0xff]
        %v854 = vld [vmem:[%s850 + $0x18] sm:$0xff]
        %v855 = vld [vmem:[%s850 + $0x20] sm:$0xff]
        %v856 = vld [vmem:[%s850 + $0x28] sm:$0xff]
        %v857 = vld [vmem:[%s850 + $0x30] sm:$0xff]
        %v858 = vld [vmem:[%s850 + $0x38] sm:$0xff]
        %859 = vmatpush.msra.mxu0 0.0
        %860 = vmatpush.msra.mxu0 0.0
        %861 = vmatpush.msra.mxu0 0.0
        %862 = vmatpush.msra.mxu0 0.0
        %863 = vmatpush.msra.mxu0 0.0
        %864 = vmatpush.msra.mxu0 0.0
        %865 = vmatpush.msra.mxu0 0.0
        %866 = vmatpush.msra.mxu0 0.0
        %867 = vmatpush.msra.mxu0 %v858
        %868 = vmatpush.msra.mxu0 %v857
        %869 = vmatpush.msra.mxu0 %v856
        %870 = vmatpush.msra.mxu0 %v855
        %871 = vmatpush.msra.mxu0 %v854
        %872 = vmatpush.msra.mxu0 %v853
        %873 = vmatpush.msra.mxu0 %v852
        %874 = vmatpush.msra.mxu0 %v851
        %875 = vmatmul.f32.gmra.mxu0 %v649
        %v876 = vpop.f32.mrf.mxu0
        %v877 = vadd.f32 0.0, %v876
        %878 = vdwg.mxu0
        %879 = vset.pattern.permute.xlu0 3
        %880 = vperm.xlu0 %879, %v431
        %v881 = vpop.permute.xlu0 %880
        %v883 = vmul.f32 %v881, %v877
        %v884 = vadd.f32 %v814, %v883
        %s885 = scalar_lea.vmem [#allocation4], 192
        %v886 = vld [vmem:[%s885] sm:$0xff]
        %v887 = vld [vmem:[%s885 + $0x8] sm:$0xff]
        %v888 = vld [vmem:[%s885 + $0x10] sm:$0xff]
        %v889 = vld [vmem:[%s885 + $0x18] sm:$0xff]
        %v890 = vld [vmem:[%s885 + $0x20] sm:$0xff]
        %v891 = vld [vmem:[%s885 + $0x28] sm:$0xff]
        %v892 = vld [vmem:[%s885 + $0x30] sm:$0xff]
        %v893 = vld [vmem:[%s885 + $0x38] sm:$0xff]
        %894 = vmatpush.msra.mxu0 0.0
        %895 = vmatpush.msra.mxu0 0.0
        %896 = vmatpush.msra.mxu0 0.0
        %897 = vmatpush.msra.mxu0 0.0
        %898 = vmatpush.msra.mxu0 0.0
        %899 = vmatpush.msra.mxu0 0.0
        %900 = vmatpush.msra.mxu0 0.0
        %901 = vmatpush.msra.mxu0 0.0
        %902 = vmatpush.msra.mxu0 %v893
        %903 = vmatpush.msra.mxu0 %v892
        %904 = vmatpush.msra.mxu0 %v891
        %905 = vmatpush.msra.mxu0 %v890
        %906 = vmatpush.msra.mxu0 %v889
        %907 = vmatpush.msra.mxu0 %v888
        %908 = vmatpush.msra.mxu0 %v887
        %909 = vmatpush.msra.mxu0 %v886
        %910 = vmatmul.f32.gmra.mxu0 %v649
        %v911 = vpop.f32.mrf.mxu0
        %v912 = vadd.f32 0.0, %v911
        %913 = vdwg.mxu0
        %914 = vset.pattern.permute.xlu0 8
        %915 = vperm.xlu0 %914, %v431
        %v916 = vpop.permute.xlu0 %915
        %v918 = vmul.f32 %v916, %v912
        %v919 = vadd.f32 %v849, %v918
        %s920 = scalar_lea.vmem [#allocation2], 256
        %v921 = vld [vmem:[%s920] sm:$0xff]
        %v922 = vld [vmem:[%s920 + $0x8] sm:$0xff]
        %v923 = vld [vmem:[%s920 + $0x10] sm:$0xff]
        %v924 = vld [vmem:[%s920 + $0x18] sm:$0xff]
        %v925 = vld [vmem:[%s920 + $0x20] sm:$0xff]
        %v926 = vld [vmem:[%s920 + $0x28] sm:$0xff]
        %v927 = vld [vmem:[%s920 + $0x30] sm:$0xff]
        %v928 = vld [vmem:[%s920 + $0x38] sm:$0xff]
        %929 = vmatpush.msra.mxu0 0.0
        %930 = vmatpush.msra.mxu0 0.0
        %931 = vmatpush.msra.mxu0 0.0
        %932 = vmatpush.msra.mxu0 0.0
        %933 = vmatpush.msra.mxu0 0.0
        %934 = vmatpush.msra.mxu0 0.0
        %935 = vmatpush.msra.mxu0 0.0
        %936 = vmatpush.msra.mxu0 0.0
        %937 = vmatpush.msra.mxu0 %v928
        %938 = vmatpush.msra.mxu0 %v927
        %939 = vmatpush.msra.mxu0 %v926
        %940 = vmatpush.msra.mxu0 %v925
        %941 = vmatpush.msra.mxu0 %v924
        %942 = vmatpush.msra.mxu0 %v923
        %943 = vmatpush.msra.mxu0 %v922
        %944 = vmatpush.msra.mxu0 %v921
        %945 = vmatmul.f32.gmra.mxu0 %v649
        %v946 = vpop.f32.mrf.mxu0
        %v947 = vadd.f32 0.0, %v946
        %948 = vdwg.mxu0
        %949 = vset.pattern.permute.xlu0 4
        %950 = vperm.xlu0 %949, %v431
        %v951 = vpop.permute.xlu0 %950
        %v953 = vmul.f32 %v951, %v947
        %v954 = vadd.f32 %v884, %v953
        %s955 = scalar_lea.vmem [#allocation4], 256
        %v956 = vld [vmem:[%s955] sm:$0xff]
        %v957 = vld [vmem:[%s955 + $0x8] sm:$0xff]
        %v958 = vld [vmem:[%s955 + $0x10] sm:$0xff]
        %v959 = vld [vmem:[%s955 + $0x18] sm:$0xff]
        %v960 = vld [vmem:[%s955 + $0x20] sm:$0xff]
        %v961 = vld [vmem:[%s955 + $0x28] sm:$0xff]
        %v962 = vld [vmem:[%s955 + $0x30] sm:$0xff]
        %v963 = vld [vmem:[%s955 + $0x38] sm:$0xff]
        %964 = vmatpush.msra.mxu0 0.0
        %965 = vmatpush.msra.mxu0 0.0
        %966 = vmatpush.msra.mxu0 0.0
        %967 = vmatpush.msra.mxu0 0.0
        %968 = vmatpush.msra.mxu0 0.0
        %969 = vmatpush.msra.mxu0 0.0
        %970 = vmatpush.msra.mxu0 0.0
        %971 = vmatpush.msra.mxu0 0.0
        %972 = vmatpush.msra.mxu0 %v963
        %973 = vmatpush.msra.mxu0 %v962
        %974 = vmatpush.msra.mxu0 %v961
        %975 = vmatpush.msra.mxu0 %v960
        %976 = vmatpush.msra.mxu0 %v959
        %977 = vmatpush.msra.mxu0 %v958
        %978 = vmatpush.msra.mxu0 %v957
        %979 = vmatpush.msra.mxu0 %v956
        %980 = vmatmul.f32.gmra.mxu0 %v649
        %v981 = vpop.f32.mrf.mxu0
        %v982 = vadd.f32 0.0, %v981
        %983 = vdwg.mxu0
        %984 = vset.pattern.permute.xlu0 9
        %985 = vperm.xlu0 %984, %v431
        %v986 = vpop.permute.xlu0 %985
        %v988 = vmul.f32 %v986, %v982
        %v989 = vadd.f32 %v919, %v988
        %990 = vset.pattern.permute.xlu0 5
        %991 = vperm.xlu0 %990, %v430
        %v992 = vpop.permute.xlu0 %991
        %v994 = vadd.f32 %v954, %v992
        %v995 = vmul.f32 %v994, 0.5
        %v996 = vmul.f32 %v994, 0.044715
        %v997 = vmul.f32 %v996, %v994
        %v998 = vmul.f32 %v997, %v994
        %v999 = vadd.f32 %v994, %v998
        %v1000 = vmul.f32 %v999, 0.7978846
        %v1001 = vtanh.pop %v1000
        %v1002 = vadd.f32 %v1001, 1.0
        %v1003 = vmul.f32 %v995, %v1002
        %1004 = vset.pattern.permute.xlu0 9
        %1005 = vperm.xlu0 %1004, %v430
        %v1006 = vpop.permute.xlu0 %1005
        %v1008 = vadd.f32 %v989, %v1006
        %v1009 = vmul.f32 %v1008, 0.5
        %v1010 = vmul.f32 %v1008, 0.044715
        %v1011 = vmul.f32 %v1010, %v1008
        %v1012 = vmul.f32 %v1011, %v1008
        %v1013 = vadd.f32 %v1008, %v1012
        %v1014 = vmul.f32 %v1013, 0.7978846
        %v1015 = vtanh.pop %v1014
        %v1016 = vadd.f32 %v1015, 1.0
        %v1017 = vmul.f32 %v1009, %v1016
        %s1018 = scalar_lea.vmem %s6, 20
        %v1019 = vld [vmem:[%s1018] sm:$0xf]
        %1020 = vset.pattern.permute.xlu0 6
        %1021 = vperm.xlu0 %1020, %v430
        %v1022 = vpop.permute.xlu0 %1021
        %v1025 = vsel %vm529, %v1019, 0
        %v1028 = vsel %vm533, %v1003, 0
        %1030 = vmatpush.msra.mxu0 0.0
        %1031 = vmatpush.msra.mxu0 0.0
        %1032 = vmatpush.msra.mxu0 0.0
        %1033 = vmatpush.msra.mxu0 0.0
        %1034 = vmatpush.msra.mxu0 0.0
        %1035 = vmatpush.msra.mxu0 0.0
        %1036 = vmatpush.msra.mxu0 0.0
        %1037 = vmatpush.msra.mxu0 0.0
        %1038 = vmatpush.msra.mxu0 0.0
        %1039 = vmatpush.msra.mxu0 0.0
        %1040 = vmatpush.msra.mxu0 0.0
        %1041 = vmatpush.msra.mxu0 0.0
        %1042 = vmatpush.msra.mxu0 0.0
        %1043 = vmatpush.msra.mxu0 0.0
        %1044 = vmatpush.msra.mxu0 0.0
        %1045 = vmatpush.msra.mxu0 %v1028
        %1046 = vmatmul.f32.gmra.mxu0 %v1025
        %v1047 = vpop.f32.mrf.mxu0
        %v1048 = vadd.f32 %v1022, %v1047
        %1049 = vdwg.mxu0
        %1050 = vset.pattern.permute.xlu0 7
        %1051 = vperm.xlu0 %1050, %v430
        %v1052 = vpop.permute.xlu0 %1051
        %v1054 = vmul.f32 %v1048, %v1052
        %1055 = vset.pattern.permute.xlu0 8
        %1056 = vperm.xlu0 %1055, %v430
        %v1057 = vpop.permute.xlu0 %1056
        %v1059 = vadd.f32 %v1054, %v1057
        %s1060 = scalar_lea.vmem %s6, 24
        %v1061 = vld [vmem:[%s1060] sm:$0xf]
        %1062 = vset.pattern.permute.xlu0 10
        %1063 = vperm.xlu0 %1062, %v430
        %v1064 = vpop.permute.xlu0 %1063
        %v1067 = vsel %vm529, %v1061, 0
        %v1070 = vsel %vm533, %v1017, 0
        %1072 = vmatpush.msra.mxu0 0.0
        %1073 = vmatpush.msra.mxu0 0.0
        %1074 = vmatpush.msra.mxu0 0.0
        %1075 = vmatpush.msra.mxu0 0.0
        %1076 = vmatpush.msra.mxu0 0.0
        %1077 = vmatpush.msra.mxu0 0.0
        %1078 = vmatpush.msra.mxu0 0.0
        %1079 = vmatpush.msra.mxu0 0.0
        %1080 = vmatpush.msra.mxu0 0.0
        %1081 = vmatpush.msra.mxu0 0.0
        %1082 = vmatpush.msra.mxu0 0.0
        %1083 = vmatpush.msra.mxu0 0.0
        %1084 = vmatpush.msra.mxu0 0.0
        %1085 = vmatpush.msra.mxu0 0.0
        %1086 = vmatpush.msra.mxu0 0.0
        %1087 = vmatpush.msra.mxu0 %v1070
        %1088 = vmatmul.f32.gmra.mxu0 %v1067
        %v1089 = vpop.f32.mrf.mxu0
        %v1090 = vadd.f32 %v1064, %v1089
        %1091 = vdwg.mxu0
        %1092 = vset.pattern.permute.xlu0 11
        %1093 = vperm.xlu0 %1092, %v430
        %v1094 = vpop.permute.xlu0 %1093
        %v1096 = vmul.f32 %v1090, %v1094
        %1097 = vset.pattern.permute.xlu0 12
        %1098 = vperm.xlu0 %1097, %v430
        %v1099 = vpop.permute.xlu0 %1098
        %v1101 = vadd.f32 %v1096, %v1099
        %s1102 = scalar_lea.vmem %s6, 28
        %v1103 = vld [vmem:[%s1102] sm:$0xf]
        %v1104 = vadd.f32 %v1059, %v1101
        %1105 = vset.pattern.permute.xlu0 13
        %1106 = vperm.xlu0 %1105, %v430
        %v1107 = vpop.permute.xlu0 %1106
        %v1110 = vsel %vm529, %v1103, 0
        %v1113 = vsel %vm533, %v1104, 0
        %1115 = vmatpush.msra.mxu0 0.0
        %1116 = vmatpush.msra.mxu0 0.0
        %1117 = vmatpush.msra.mxu0 0.0
        %1118 = vmatpush.msra.mxu0 0.0
        %1119 = vmatpush.msra.mxu0 0.0
        %1120 = vmatpush.msra.mxu0 0.0
        %1121 = vmatpush.msra.mxu0 0.0
        %1122 = vmatpush.msra.mxu0 0.0
        %1123 = vmatpush.msra.mxu0 0.0
        %1124 = vmatpush.msra.mxu0 0.0
        %1125 = vmatpush.msra.mxu0 0.0
        %1126 = vmatpush.msra.mxu0 0.0
        %1127 = vmatpush.msra.mxu0 0.0
        %1128 = vmatpush.msra.mxu0 0.0
        %1129 = vmatpush.msra.mxu0 0.0
        %1130 = vmatpush.msra.mxu0 %v1113
        %1131 = vmatmul.f32.gmra.mxu0 %v1110
        %v1132 = vpop.f32.mrf.mxu0
        %v1133 = vadd.f32 %v1107, %v1132
        %1134 = vdwg.mxu0
        %s1135 = scalar_lea.vmem %s6, 12
        %v1136 = vld [vmem:[%s1135] sm:$0xf]
        %1137 = vset.pattern.permute.xlu0 3
        %1138 = vperm.xlu0 %1137, %v430
        %v1139 = vpop.permute.xlu0 %1138
        %v1142 = vsel %vm529, %v1136, 0
        %v1144 = vsel %vm533, %v508, 0
        %1146 = vmatpush.msra.mxu0 0.0
        %1147 = vmatpush.msra.mxu0 0.0
        %1148 = vmatpush.msra.mxu0 0.0
        %1149 = vmatpush.msra.mxu0 0.0
        %1150 = vmatpush.msra.mxu0 0.0
        %1151 = vmatpush.msra.mxu0 0.0
        %1152 = vmatpush.msra.mxu0 0.0
        %1153 = vmatpush.msra.mxu0 0.0
        %1154 = vmatpush.msra.mxu0 0.0
        %1155 = vmatpush.msra.mxu0 0.0
        %1156 = vmatpush.msra.mxu0 0.0
        %1157 = vmatpush.msra.mxu0 0.0
        %1158 = vmatpush.msra.mxu0 0.0
        %1159 = vmatpush.msra.mxu0 0.0
        %1160 = vmatpush.msra.mxu0 0.0
        %1161 = vmatpush.msra.mxu0 %v1144
        %1162 = vmatmul.f32.gmra.mxu0 %v1142
        %v1163 = vpop.f32.mrf.mxu0
        %v1164 = vadd.f32 %v1139, %v1163
        %1165 = vdwg.mxu0
        %v1166 = vmul.f32 %v1133, 0.5
        %1167 = vxpose.xlu0.b32.start [1/16] %v637, 128
        %1168 = vxpose.xlu0.b32.cont [2/16] 0.0, 128
        %1169 = vxpose.xlu0.b32.cont [3/16] 0.0, 128
        %1170 = vxpose.xlu0.b32.cont [4/16] 0.0, 128
        %1171 = vxpose.xlu0.b32.cont [5/16] 0.0, 128
        %1172 = vxpose.xlu0.b32.cont [6/16] 0.0, 128
        %1173 = vxpose.xlu0.b32.cont [7/16] 0.0, 128
        %1174 = vxpose.xlu0.b32.cont [8/16] 0.0, 128
        %1175 = vxpose.xlu0.b32.cont [9/16] 0.0, 128
        %1176 = vxpose.xlu0.b32.cont [10/16] 0.0, 128
        %1177 = vxpose.xlu0.b32.cont [11/16] 0.0, 128
        %1178 = vxpose.xlu0.b32.cont [12/16] 0.0, 128
        %1179 = vxpose.xlu0.b32.cont [13/16] 0.0, 128
        %1180 = vxpose.xlu0.b32.cont [14/16] 0.0, 128
        %1181 = vxpose.xlu0.b32.cont [15/16] 0.0, 128
        %1182 = vxpose.xlu0.b32.end [16/16] 0.0, 128
        %v1183 = vpop.trf.xlu0
        %v1184 = vpop.trf.xlu0
        %v1185 = vpop.trf.xlu0
        %v1186 = vpop.trf.xlu0
        %v1187 = vpop.trf.xlu0
        %v1188 = vpop.trf.xlu0
        %v1189 = vpop.trf.xlu0
        %v1190 = vpop.trf.xlu0
        %v1191 = vpop.trf.xlu0
        %v1192 = vpop.trf.xlu0
        %v1193 = vpop.trf.xlu0
        %v1194 = vpop.trf.xlu0
        %v1195 = vpop.trf.xlu0
        %v1196 = vpop.trf.xlu0
        %v1197 = vpop.trf.xlu0
        %v1198 = vpop.trf.xlu0
        %v1200 = vsel %vm529, %v1183, 0
        %v1203 = vsel %vm529, %v1184, 0
        %v1206 = vsel %vm529, %v1185, 0
        %v1209 = vsel %vm529, %v1186, 0
        %v1212 = vsel %vm529, %v1187, 0
        %v1215 = vsel %vm529, %v1188, 0
        %v1218 = vsel %vm529, %v1189, 0
        %v1221 = vsel %vm529, %v1190, 0
        %v1224 = vsel %vm533, %v1166, 0
        %1226 = vmatpush.msra.mxu0 0.0
        %1227 = vmatpush.msra.mxu0 0.0
        %1228 = vmatpush.msra.mxu0 0.0
        %1229 = vmatpush.msra.mxu0 0.0
        %1230 = vmatpush.msra.mxu0 0.0
        %1231 = vmatpush.msra.mxu0 0.0
        %1232 = vmatpush.msra.mxu0 0.0
        %1233 = vmatpush.msra.mxu0 0.0
        %1234 = vmatpush.msra.mxu0 0.0
        %1235 = vmatpush.msra.mxu0 0.0
        %1236 = vmatpush.msra.mxu0 0.0
        %1237 = vmatpush.msra.mxu0 0.0
        %1238 = vmatpush.msra.mxu0 0.0
        %1239 = vmatpush.msra.mxu0 0.0
        %1240 = vmatpush.msra.mxu0 0.0
        %1241 = vmatpush.msra.mxu0 %v1224
        %1242 = vmatmul.f32.gmra.mxu0 %v1200
        %v1243 = vpop.f32.mrf.mxu0
        %v1244 = vadd.f32 0.0, %v1243
        %1245 = vmatmul.f32.gmra.mxu0 %v1203
        %v1246 = vpop.f32.mrf.mxu0
        %v1247 = vadd.f32 0.0, %v1246
        %1248 = vmatmul.f32.gmra.mxu0 %v1206
        %v1249 = vpop.f32.mrf.mxu0
        %v1250 = vadd.f32 0.0, %v1249
        %1251 = vmatmul.f32.gmra.mxu0 %v1209
        %v1252 = vpop.f32.mrf.mxu0
        %v1253 = vadd.f32 0.0, %v1252
        %1254 = vmatmul.f32.gmra.mxu0 %v1212
        %v1255 = vpop.f32.mrf.mxu0
        %v1256 = vadd.f32 0.0, %v1255
        %1257 = vmatmul.f32.gmra.mxu0 %v1215
        %v1258 = vpop.f32.mrf.mxu0
        %v1259 = vadd.f32 0.0, %v1258
        %1260 = vmatmul.f32.gmra.mxu0 %v1218
        %v1261 = vpop.f32.mrf.mxu0
        %v1262 = vadd.f32 0.0, %v1261
        %1263 = vmatmul.f32.gmra.mxu0 %v1221
        %v1264 = vpop.f32.mrf.mxu0
        %v1265 = vadd.f32 0.0, %v1264
        %1266 = vdwg.mxu0
        %v1267 = vsel %vm647, %v1244, -inf
        %v1268 = vsel %vm647, %v1247, -inf
        %v1269 = vsel %vm647, %v1250, -inf
        %v1270 = vsel %vm647, %v1253, -inf
        %v1271 = vsel %vm647, %v1256, -inf
        %v1272 = vmax.f32 %v1267, %v1271
        %v1273 = vsel %vm647, %v1259, -inf
        %v1274 = vmax.f32 %v1268, %v1273
        %v1275 = vsel %vm647, %v1262, -inf
        %v1276 = vmax.f32 %v1269, %v1275
        %v1277 = vsel %vm647, %v1265, -inf
        %v1278 = vmax.f32 %v1270, %v1277
        %v1279 = vmax.f32 %v1272, %v1274
        %v1280 = vmax.f32 %v1276, %v1278
        %v1281 = vmax.f32 %v1279, %v1280
        %v1282 = vrot.slane %v1281, 4
        %v1283 = vmax.f32 %v1281, %v1282
        %v1284 = vrot.slane %v1283, 2
        %v1285 = vmax.f32 %v1283, %v1284
        %v1286 = vrot.slane %v1285, 1
        %v1287 = vmax.f32 %v1285, %v1286
        %v1288 = vsub.f32 %v1244, %v1287
        %v1289 = vsub.f32 %v1247, %v1287
        %v1290 = vsub.f32 %v1250, %v1287
        %v1291 = vsub.f32 %v1253, %v1287
        %v1292 = vsub.f32 %v1256, %v1287
        %v1293 = vsub.f32 %v1259, %v1287
        %v1294 = vsub.f32 %v1262, %v1287
        %v1295 = vsub.f32 %v1265, %v1287
        %v1296 = vmul.f32 %v1288, 1.442695
        %v1297 = vpow.pop %v1296
        %v1298 = vmul.f32 %v1289, 1.442695
        %v1299 = vpow.pop %v1298
        %v1300 = vmul.f32 %v1290, 1.442695
        %v1301 = vpow.pop %v1300
        %v1302 = vmul.f32 %v1291, 1.442695
        %v1303 = vpow.pop %v1302
        %v1304 = vmul.f32 %v1292, 1.442695
        %v1305 = vpow.pop %v1304
        %v1306 = vmul.f32 %v1293, 1.442695
        %v1307 = vpow.pop %v1306
        %v1308 = vmul.f32 %v1294, 1.442695
        %v1309 = vpow.pop %v1308
        %v1310 = vmul.f32 %v1295, 1.442695
        %v1311 = vpow.pop %v1310
        %v1312 = vsel %vm647, %v1297, 0.0
        %v1313 = vsel %vm647, %v1299, 0.0
        %v1314 = vadd.f32 %v1312, %v1313
        %v1315 = vsel %vm647, %v1301, 0.0
        %v1316 = vadd.f32 %v1314, %v1315
        %v1317 = vsel %vm647, %v1303, 0.0
        %v1318 = vadd.f32 %v1316, %v1317
        %v1319 = vsel %vm647, %v1305, 0.0
        %v1320 = vadd.f32 %v1318, %v1319
        %v1321 = vsel %vm647, %v1307, 0.0
        %v1322 = vadd.f32 %v1320, %v1321
        %v1323 = vsel %vm647, %v1309, 0.0
        %v1324 = vadd.f32 %v1322, %v1323
        %v1325 = vsel %vm647, %v1311, 0.0
        %v1326 = vadd.f32 %v1324, %v1325
        %v1327 = vrot.slane %v1326, 4
        %v1328 = vadd.f32 %v1326, %v1327
        %v1329 = vrot.slane %v1328, 2
        %v1330 = vadd.f32 %v1328, %v1329
        %v1331 = vrot.slane %v1330, 1
        %v1332 = vadd.f32 %v1330, %v1331
        %v1334 = vsel %vm647, %v1164, 0
        %1336 = vmatpush.msra.mxu0 0.0
        %1337 = vmatpush.msra.mxu0 0.0
        %1338 = vmatpush.msra.mxu0 0.0
        %1339 = vmatpush.msra.mxu0 0.0
        %1340 = vmatpush.msra.mxu0 0.0
        %1341 = vmatpush.msra.mxu0 0.0
        %1342 = vmatpush.msra.mxu0 0.0
        %1343 = vmatpush.msra.mxu0 0.0
        %1344 = vmatpush.msra.mxu0 %v1311
        %1345 = vmatpush.msra.mxu0 %v1309
        %1346 = vmatpush.msra.mxu0 %v1307
        %1347 = vmatpush.msra.mxu0 %v1305
        %1348 = vmatpush.msra.mxu0 %v1303
        %1349 = vmatpush.msra.mxu0 %v1301
        %1350 = vmatpush.msra.mxu0 %v1299
        %1351 = vmatpush.msra.mxu0 %v1297
        %1352 = vmatmul.f32.gmra.mxu0 %v1334
        %v1353 = vpop.f32.mrf.mxu0
        %v1354 = vadd.f32 0.0, %v1353
        %1355 = vdwg.mxu0
        %v1356 = vrcp.pop %v1332
        %v1357 = vmul.f32 %v1354, %v1356
        %s1358 = scalar_lea.vmem %s6, 16
        %v1359 = vld [vmem:[%s1358] sm:$0xf]
        %1360 = vset.pattern.permute.xlu0 4
        %1361 = vperm.xlu0 %1360, %v430
        %v1362 = vpop.permute.xlu0 %1361
        %v1365 = vsel %vm529, %v1359, 0
        %v1368 = vsel %vm533, %v1357, 0
        %1370 = vmatpush.msra.mxu0 0.0
        %1371 = vmatpush.msra.mxu0 0.0
        %1372 = vmatpush.msra.mxu0 0.0
        %1373 = vmatpush.msra.mxu0 0.0
        %1374 = vmatpush.msra.mxu0 0.0
        %1375 = vmatpush.msra.mxu0 0.0
        %1376 = vmatpush.msra.mxu0 0.0
        %1377 = vmatpush.msra.mxu0 0.0
        %1378 = vmatpush.msra.mxu0 0.0
        %1379 = vmatpush.msra.mxu0 0.0
        %1380 = vmatpush.msra.mxu0 0.0
        %1381 = vmatpush.msra.mxu0 0.0
        %1382 = vmatpush.msra.mxu0 0.0
        %1383 = vmatpush.msra.mxu0 0.0
        %1384 = vmatpush.msra.mxu0 0.0
        %1385 = vmatpush.msra.mxu0 %v1368
        %1386 = vmatmul.f32.gmra.mxu0 %v1365
        %v1387 = vpop.f32.mrf.mxu0
        %v1388 = vadd.f32 %v1362, %v1387
        %1389 = vdwg.mxu0
        %v1390 = vadd.f32 %v1388, %v1164
        %v1391 = vsel %vm510, %v1390, 0.0
        %v1392 = vrot.slane %v1391, 4
        %v1393 = vadd.f32 %v1391, %v1392
        %v1394 = vrot.slane %v1393, 2
        %v1395 = vadd.f32 %v1393, %v1394
        %v1396 = vrot.slane %v1395, 1
        %v1397 = vadd.f32 %v1395, %v1396
        %v1398 = vrcp.pop 4.0
        %v1399 = vmul.f32 4.0, %v1398
        %v1400 = vsub.f32 1.0, %v1399
        %v1401 = vmul.f32 %v1398, %v1400
        %v1402 = vadd.f32 %v1398, %v1401
        %vm1403 = vweird.f32 %v1398
        %v1404 = vsel %vm1403, %v1398, %v1402
        %v1405 = vmul.f32 %v1397, %v1404
        %v1406 = vsub.f32 %v1390, %v1405
        %v1407 = vmul.f32 %v1406, %v1406
        %v1408 = vsel %vm510, %v1407, 0.0
        %v1409 = vrot.slane %v1408, 4
        %v1410 = vadd.f32 %v1408, %v1409
        %v1411 = vrot.slane %v1410, 2
        %v1412 = vadd.f32 %v1410, %v1411
        %v1413 = vrot.slane %v1412, 1
        %v1414 = vadd.f32 %v1412, %v1413
        %v1415 = vmul.f32 %v1414, %v1404
        %v1416 = vadd.f32 %v1415, 1e-05
        %v1417 = vrsqrt.pop %v1416
        %v1418 = vmul.f32 %v1417, %v1416
        %v1419 = vmul.f32 %v1418, %v1417
        %v1420 = vmul.f32 0.5, %v1419
        %v1421 = vsub.f32 1.5, %v1420
        %v1422 = vmul.f32 %v1417, %v1421
        %vm1423 = vweird.f32 %v1416
        %vm1424 = vweird.f32 %v1417
        %vm1425 = vmor %vm1423, %vm1424
        %v1426 = vsel %vm1425, %v1417, %v1422
        %v1427 = vmul.f32 %v1406, %v1426
        %1428 = vset.pattern.permute.xlu0 14
        %1429 = vperm.xlu0 %1428, %v430
        %v1430 = vpop.permute.xlu0 %1429
        %v1432 = vmul.f32 %v1427, %v1430
        %1433 = vset.pattern.permute.xlu0 15
        %1434 = vperm.xlu0 %1433, %v430
        %v1435 = vpop.permute.xlu0 %1434
        %v1437 = vadd.f32 %v1432, %v1435
        %v1438 = vld [vmem:[#allocation7] sm:$0xff]
        %v1439 = vld [vmem:[#allocation7 + $0x8] sm:$0xff]
        %v1440 = vld [vmem:[#allocation7 + $0x10] sm:$0xff]
        %v1441 = vld [vmem:[#allocation7 + $0x18] sm:$0xff]
        %v1442 = vld [vmem:[#allocation7 + $0x20] sm:$0xff]
        %v1443 = vld [vmem:[#allocation7 + $0x28] sm:$0xff]
        %v1444 = vld [vmem:[#allocation7 + $0x30] sm:$0xff]
        %v1445 = vld [vmem:[#allocation7 + $0x38] sm:$0xff]
        %v1446 = vld [vmem:[#allocation7 + $0x40] sm:$0xff]
        %v1447 = vld [vmem:[#allocation7 + $0x48] sm:$0xff]
        %v1448 = vld [vmem:[#allocation7 + $0x50] sm:$0xff]
        %v1449 = vld [vmem:[#allocation7 + $0x58] sm:$0xff]
        %v1450 = vld [vmem:[#allocation7 + $0x60] sm:$0xff]
        %v1451 = vld [vmem:[#allocation7 + $0x68] sm:$0xff]
        %v1452 = vld [vmem:[#allocation7 + $0x70] sm:$0xff]
        %v1453 = vld [vmem:[#allocation7 + $0x78] sm:$0xff]
        %v1455 = vsel %vm647, %v1437, 0
        %1457 = vmatpush.msra.mxu0 0.0
        %1458 = vmatpush.msra.mxu0 0.0
        %1459 = vmatpush.msra.mxu0 0.0
        %1460 = vmatpush.msra.mxu0 0.0
        %1461 = vmatpush.msra.mxu0 0.0
        %1462 = vmatpush.msra.mxu0 0.0
        %1463 = vmatpush.msra.mxu0 0.0
        %1464 = vmatpush.msra.mxu0 0.0
        %1465 = vmatpush.msra.mxu0 %v1452
        %1466 = vmatpush.msra.mxu0 %v1450
        %1467 = vmatpush.msra.mxu0 %v1448
        %1468 = vmatpush.msra.mxu0 %v1446
        %1469 = vmatpush.msra.mxu0 %v1444
        %1470 = vmatpush.msra.mxu0 %v1442
        %1471 = vmatpush.msra.mxu0 %v1440
        %1472 = vmatpush.msra.mxu0 %v1438
        %1473 = vmatmul.f32.gmra.mxu0 %v1455
        %v1474 = vpop.f32.mrf.mxu0
        %v1475 = vadd.f32 0.0, %v1474
        %1476 = vdwg.mxu0
        %1477 = vmatpush.msra.mxu0 0.0
        %1478 = vmatpush.msra.mxu0 0.0
        %1479 = vmatpush.msra.mxu0 0.0
        %1480 = vmatpush.msra.mxu0 0.0
        %1481 = vmatpush.msra.mxu0 0.0
        %1482 = vmatpush.msra.mxu0 0.0
        %1483 = vmatpush.msra.mxu0 0.0
        %1484 = vmatpush.msra.mxu0 0.0
        %1485 = vmatpush.msra.mxu0 %v1453
        %1486 = vmatpush.msra.mxu0 %v1451
        %1487 = vmatpush.msra.mxu0 %v1449
        %1488 = vmatpush.msra.mxu0 %v1447
        %1489 = vmatpush.msra.mxu0 %v1445
        %1490 = vmatpush.msra.mxu0 %v1443
        %1491 = vmatpush.msra.mxu0 %v1441
        %1492 = vmatpush.msra.mxu0 %v1439
        %1493 = vmatmul.f32.gmra.mxu0 %v1455
        %v1494 = vpop.f32.mrf.mxu0
        %v1495 = vadd.f32 0.0, %v1494
        %1496 = vdwg.mxu0
        %v1497 = vld [vmem:[#allocation6] sm:$0xff]
        %v1498 = vld [vmem:[#allocation6 + $0x8] sm:$0xff]
        %v1499 = vld [vmem:[#allocation6 + $0x10] sm:$0xff]
        %v1500 = vld [vmem:[#allocation6 + $0x18] sm:$0xff]
        %v1501 = vld [vmem:[#allocation6 + $0x20] sm:$0xff]
        %v1502 = vld [vmem:[#allocation6 + $0x28] sm:$0xff]
        %v1503 = vld [vmem:[#allocation6 + $0x30] sm:$0xff]
        %v1504 = vld [vmem:[#allocation6 + $0x38] sm:$0xff]
        %v1505 = vld [vmem:[#allocation6 + $0x40] sm:$0xff]
        %v1506 = vld [vmem:[#allocation6 + $0x48] sm:$0xff]
        %v1507 = vld [vmem:[#allocation6 + $0x50] sm:$0xff]
        %v1508 = vld [vmem:[#allocation6 + $0x58] sm:$0xff]
        %v1509 = vld [vmem:[#allocation6 + $0x60] sm:$0xff]
        %v1510 = vld [vmem:[#allocation6 + $0x68] sm:$0xff]
        %v1511 = vld [vmem:[#allocation6 + $0x70] sm:$0xff]
        %v1512 = vld [vmem:[#allocation6 + $0x78] sm:$0xff]
        %v1513 = vld [vmem:[#allocation6 + $0x80] sm:$0xff]
        %v1514 = vld [vmem:[#allocation6 + $0x88] sm:$0xff]
        %v1515 = vld [vmem:[#allocation6 + $0x90] sm:$0xff]
        %v1516 = vld [vmem:[#allocation6 + $0x98] sm:$0xff]
        %v1517 = vld [vmem:[#allocation6 + $0xa0] sm:$0xff]
        %v1518 = vld [vmem:[#allocation6 + $0xa8] sm:$0xff]
        %v1519 = vld [vmem:[#allocation6 + $0xb0] sm:$0xff]
        %v1520 = vld [vmem:[#allocation6 + $0xb8] sm:$0xff]
        %v1521 = vld [vmem:[#allocation6 + $0xc0] sm:$0xff]
        %v1522 = vld [vmem:[#allocation6 + $0xc8] sm:$0xff]
        %v1523 = vld [vmem:[#allocation6 + $0xd0] sm:$0xff]
        %v1524 = vld [vmem:[#allocation6 + $0xd8] sm:$0xff]
        %v1525 = vld [vmem:[#allocation6 + $0xe0] sm:$0xff]
        %v1526 = vld [vmem:[#allocation6 + $0xe8] sm:$0xff]
        %v1527 = vld [vmem:[#allocation6 + $0xf0] sm:$0xff]
        %v1528 = vld [vmem:[#allocation6 + $0xf8] sm:$0xff]
        %v1529 = vld [vmem:[#allocation6 + $0x100] sm:$0xff]
        %v1530 = vld [vmem:[#allocation6 + $0x108] sm:$0xff]
        %v1531 = vld [vmem:[#allocation6 + $0x110] sm:$0xff]
        %v1532 = vld [vmem:[#allocation6 + $0x118] sm:$0xff]
        %v1533 = vld [vmem:[#allocation6 + $0x120] sm:$0xff]
        %v1534 = vld [vmem:[#allocation6 + $0x128] sm:$0xff]
        %v1535 = vld [vmem:[#allocation6 + $0x130] sm:$0xff]
        %v1536 = vld [vmem:[#allocation6 + $0x138] sm:$0xff]
        %v1537 = vld [vmem:[#allocation6 + $0x140] sm:$0xff]
        %v1538 = vld [vmem:[#allocation6 + $0x148] sm:$0xff]
        %v1539 = vld [vmem:[#allocation6 + $0x150] sm:$0xff]
        %v1540 = vld [vmem:[#allocation6 + $0x158] sm:$0xff]
        %v1541 = vld [vmem:[#allocation6 + $0x160] sm:$0xff]
        %v1542 = vld [vmem:[#allocation6 + $0x168] sm:$0xff]
        %v1543 = vld [vmem:[#allocation6 + $0x170] sm:$0xff]
        %v1544 = vld [vmem:[#allocation6 + $0x178] sm:$0xff]
        %v1545 = vld [vmem:[#allocation6 + $0x180] sm:$0xff]
        %v1546 = vld [vmem:[#allocation6 + $0x188] sm:$0xff]
        %v1547 = vld [vmem:[#allocation6 + $0x190] sm:$0xff]
        %v1548 = vld [vmem:[#allocation6 + $0x198] sm:$0xff]
        %v1549 = vld [vmem:[#allocation6 + $0x1a0] sm:$0xff]
        %v1550 = vld [vmem:[#allocation6 + $0x1a8] sm:$0xff]
        %v1551 = vld [vmem:[#allocation6 + $0x1b0] sm:$0xff]
        %v1552 = vld [vmem:[#allocation6 + $0x1b8] sm:$0xff]
        %v1553 = vld [vmem:[#allocation6 + $0x1c0] sm:$0xff]
        %v1554 = vld [vmem:[#allocation6 + $0x1c8] sm:$0xff]
        %v1555 = vld [vmem:[#allocation6 + $0x1d0] sm:$0xff]
        %v1556 = vld [vmem:[#allocation6 + $0x1d8] sm:$0xff]
        %v1557 = vld [vmem:[#allocation6 + $0x1e0] sm:$0xff]
        %v1558 = vld [vmem:[#allocation6 + $0x1e8] sm:$0xff]
        %v1559 = vld [vmem:[#allocation6 + $0x1f0] sm:$0xff]
        %v1560 = vld [vmem:[#allocation6 + $0x1f8] sm:$0xff]
        %1561 = vmatpush.msra.mxu0 %v1527
        %1562 = vmatpush.msra.mxu0 %v1525
        %1563 = vmatpush.msra.mxu0 %v1523
        %1564 = vmatpush.msra.mxu0 %v1521
        %1565 = vmatpush.msra.mxu0 %v1519
        %1566 = vmatpush.msra.mxu0 %v1517
        %1567 = vmatpush.msra.mxu0 %v1515
        %1568 = vmatpush.msra.mxu0 %v1513
        %1569 = vmatpush.msra.mxu0 %v1511
        %1570 = vmatpush.msra.mxu0 %v1509
        %1571 = vmatpush.msra.mxu0 %v1507
        %1572 = vmatpush.msra.mxu0 %v1505
        %1573 = vmatpush.msra.mxu0 %v1503
        %1574 = vmatpush.msra.mxu0 %v1501
        %1575 = vmatpush.msra.mxu0 %v1499
        %1576 = vmatpush.msra.mxu0 %v1497
        %1577 = vmatmul.f32.gmra.mxu0 %v1475
        %v1578 = vpop.f32.mrf.mxu0
        %v1579 = vadd.f32 0.0, %v1578
        %1580 = vdwg.mxu0
        %1581 = vmatpush.msra.mxu0 %v1559
        %1582 = vmatpush.msra.mxu0 %v1557
        %1583 = vmatpush.msra.mxu0 %v1555
        %1584 = vmatpush.msra.mxu0 %v1553
        %1585 = vmatpush.msra.mxu0 %v1551
        %1586 = vmatpush.msra.mxu0 %v1549
        %1587 = vmatpush.msra.mxu0 %v1547
        %1588 = vmatpush.msra.mxu0 %v1545
        %1589 = vmatpush.msra.mxu0 %v1543
        %1590 = vmatpush.msra.mxu0 %v1541
        %1591 = vmatpush.msra.mxu0 %v1539
        %1592 = vmatpush.msra.mxu0 %v1537
        %1593 = vmatpush.msra.mxu0 %v1535
        %1594 = vmatpush.msra.mxu0 %v1533
        %1595 = vmatpush.msra.mxu0 %v1531
        %1596 = vmatpush.msra.mxu0 %v1529
        %1597 = vmatmul.f32.gmra.mxu0 %v1495
        %v1598 = vpop.f32.mrf.mxu0
        %v1599 = vadd.f32 %v1579, %v1598
        %1600 = vdwg.mxu0
        %1601 = vmatpush.msra.mxu0 %v1528
        %1602 = vmatpush.msra.mxu0 %v1526
        %1603 = vmatpush.msra.mxu0 %v1524
        %1604 = vmatpush.msra.mxu0 %v1522
        %1605 = vmatpush.msra.mxu0 %v1520
        %1606 = vmatpush.msra.mxu0 %v1518
        %1607 = vmatpush.msra.mxu0 %v1516
        %1608 = vmatpush.msra.mxu0 %v1514
        %1609 = vmatpush.msra.mxu0 %v1512
        %1610 = vmatpush.msra.mxu0 %v1510
        %1611 = vmatpush.msra.mxu0 %v1508
        %1612 = vmatpush.msra.mxu0 %v1506
        %1613 = vmatpush.msra.mxu0 %v1504
        %1614 = vmatpush.msra.mxu0 %v1502
        %1615 = vmatpush.msra.mxu0 %v1500
        %1616 = vmatpush.msra.mxu0 %v1498
        %1617 = vmatmul.f32.gmra.mxu0 %v1475
        %v1618 = vpop.f32.mrf.mxu0
        %v1619 = vadd.f32 0.0, %v1618
        %1620 = vdwg.mxu0
        %1621 = vmatpush.msra.mxu0 %v1560
        %1622 = vmatpush.msra.mxu0 %v1558
        %1623 = vmatpush.msra.mxu0 %v1556
        %1624 = vmatpush.msra.mxu0 %v1554
        %1625 = vmatpush.msra.mxu0 %v1552
        %1626 = vmatpush.msra.mxu0 %v1550
        %1627 = vmatpush.msra.mxu0 %v1548
        %1628 = vmatpush.msra.mxu0 %v1546
        %1629 = vmatpush.msra.mxu0 %v1544
        %1630 = vmatpush.msra.mxu0 %v1542
        %1631 = vmatpush.msra.mxu0 %v1540
        %1632 = vmatpush.msra.mxu0 %v1538
        %1633 = vmatpush.msra.mxu0 %v1536
        %1634 = vmatpush.msra.mxu0 %v1534
        %1635 = vmatpush.msra.mxu0 %v1532
        %1636 = vmatpush.msra.mxu0 %v1530
        %1637 = vmatmul.f32.gmra.mxu0 %v1495
        %v1638 = vpop.f32.mrf.mxu0
        %v1639 = vadd.f32 %v1619, %v1638
        %1640 = vdwg.mxu0
        %1641 = vset.pattern.permute.xlu0 10
        %1642 = vperm.xlu0 %1641, %v431
        %v1643 = vpop.permute.xlu0 %1642
        %v1645 = vmul.f32 %v1643, %v1599
        %v1646 = vmul.f32 %v1643, %v1639
        %s1647 = scalar_lea.vmem [#allocation6], 512
        %v1648 = vld [vmem:[%s1647] sm:$0xff]
        %v1649 = vld [vmem:[%s1647 + $0x8] sm:$0xff]
        %v1650 = vld [vmem:[%s1647 + $0x10] sm:$0xff]
        %v1651 = vld [vmem:[%s1647 + $0x18] sm:$0xff]
        %v1652 = vld [vmem:[%s1647 + $0x20] sm:$0xff]
        %v1653 = vld [vmem:[%s1647 + $0x28] sm:$0xff]
        %v1654 = vld [vmem:[%s1647 + $0x30] sm:$0xff]
        %v1655 = vld [vmem:[%s1647 + $0x38] sm:$0xff]
        %v1656 = vld [vmem:[%s1647 + $0x40] sm:$0xff]
        %v1657 = vld [vmem:[%s1647 + $0x48] sm:$0xff]
        %v1658 = vld [vmem:[%s1647 + $0x50] sm:$0xff]
        %v1659 = vld [vmem:[%s1647 + $0x58] sm:$0xff]
        %v1660 = vld [vmem:[%s1647 + $0x60] sm:$0xff]
        %v1661 = vld [vmem:[%s1647 + $0x68] sm:$0xff]
        %v1662 = vld [vmem:[%s1647 + $0x70] sm:$0xff]
        %v1663 = vld [vmem:[%s1647 + $0x78] sm:$0xff]
        %v1664 = vld [vmem:[%s1647 + $0x80] sm:$0xff]
        %v1665 = vld [vmem:[%s1647 + $0x88] sm:$0xff]
        %v1666 = vld [vmem:[%s1647 + $0x90] sm:$0xff]
        %v1667 = vld [vmem:[%s1647 + $0x98] sm:$0xff]
        %v1668 = vld [vmem:[%s1647 + $0xa0] sm:$0xff]
        %v1669 = vld [vmem:[%s1647 + $0xa8] sm:$0xff]
        %v1670 = vld [vmem:[%s1647 + $0xb0] sm:$0xff]
        %v1671 = vld [vmem:[%s1647 + $0xb8] sm:$0xff]
        %v1672 = vld [vmem:[%s1647 + $0xc0] sm:$0xff]
        %v1673 = vld [vmem:[%s1647 + $0xc8] sm:$0xff]
        %v1674 = vld [vmem:[%s1647 + $0xd0] sm:$0xff]
        %v1675 = vld [vmem:[%s1647 + $0xd8] sm:$0xff]
        %v1676 = vld [vmem:[%s1647 + $0xe0] sm:$0xff]
        %v1677 = vld [vmem:[%s1647 + $0xe8] sm:$0xff]
        %v1678 = vld [vmem:[%s1647 + $0xf0] sm:$0xff]
        %v1679 = vld [vmem:[%s1647 + $0xf8] sm:$0xff]
        %v1680 = vld [vmem:[%s1647 + $0x100] sm:$0xff]
        %v1681 = vld [vmem:[%s1647 + $0x108] sm:$0xff]
        %v1682 = vld [vmem:[%s1647 + $0x110] sm:$0xff]
        %v1683 = vld [vmem:[%s1647 + $0x118] sm:$0xff]
        %v1684 = vld [vmem:[%s1647 + $0x120] sm:$0xff]
        %v1685 = vld [vmem:[%s1647 + $0x128] sm:$0xff]
        %v1686 = vld [vmem:[%s1647 + $0x130] sm:$0xff]
        %v1687 = vld [vmem:[%s1647 + $0x138] sm:$0xff]
        %v1688 = vld [vmem:[%s1647 + $0x140] sm:$0xff]
        %v1689 = vld [vmem:[%s1647 + $0x148] sm:$0xff]
        %v1690 = vld [vmem:[%s1647 + $0x150] sm:$0xff]
        %v1691 = vld [vmem:[%s1647 + $0x158] sm:$0xff]
        %v1692 = vld [vmem:[%s1647 + $0x160] sm:$0xff]
        %v1693 = vld [vmem:[%s1647 + $0x168] sm:$0xff]
        %v1694 = vld [vmem:[%s1647 + $0x170] sm:$0xff]
        %v1695 = vld [vmem:[%s1647 + $0x178] sm:$0xff]
        %v1696 = vld [vmem:[%s1647 + $0x180] sm:$0xff]
        %v1697 = vld [vmem:[%s1647 + $0x188] sm:$0xff]
        %v1698 = vld [vmem:[%s1647 + $0x190] sm:$0xff]
        %v1699 = vld [vmem:[%s1647 + $0x198] sm:$0xff]
        %v1700 = vld [vmem:[%s1647 + $0x1a0] sm:$0xff]
        %v1701 = vld [vmem:[%s1647 + $0x1a8] sm:$0xff]
        %v1702 = vld [vmem:[%s1647 + $0x1b0] sm:$0xff]
        %v1703 = vld [vmem:[%s1647 + $0x1b8] sm:$0xff]
        %v1704 = vld [vmem:[%s1647 + $0x1c0] sm:$0xff]
        %v1705 = vld [vmem:[%s1647 + $0x1c8] sm:$0xff]
        %v1706 = vld [vmem:[%s1647 + $0x1d0] sm:$0xff]
        %v1707 = vld [vmem:[%s1647 + $0x1d8] sm:$0xff]
        %v1708 = vld [vmem:[%s1647 + $0x1e0] sm:$0xff]
        %v1709 = vld [vmem:[%s1647 + $0x1e8] sm:$0xff]
        %v1710 = vld [vmem:[%s1647 + $0x1f0] sm:$0xff]
        %v1711 = vld [vmem:[%s1647 + $0x1f8] sm:$0xff]
        %1712 = vmatpush.msra.mxu0 %v1678
        %1713 = vmatpush.msra.mxu0 %v1676
        %1714 = vmatpush.msra.mxu0 %v1674
        %1715 = vmatpush.msra.mxu0 %v1672
        %1716 = vmatpush.msra.mxu0 %v1670
        %1717 = vmatpush.msra.mxu0 %v1668
        %1718 = vmatpush.msra.mxu0 %v1666
        %1719 = vmatpush.msra.mxu0 %v1664
        %1720 = vmatpush.msra.mxu0 %v1662
        %1721 = vmatpush.msra.mxu0 %v1660
        %1722 = vmatpush.msra.mxu0 %v1658
        %1723 = vmatpush.msra.mxu0 %v1656
        %1724 = vmatpush.msra.mxu0 %v1654
        %1725 = vmatpush.msra.mxu0 %v1652
        %1726 = vmatpush.msra.mxu0 %v1650
        %1727 = vmatpush.msra.mxu0 %v1648
        %1728 = vmatmul.f32.gmra.mxu0 %v1475
        %v1729 = vpop.f32.mrf.mxu0
        %v1730 = vadd.f32 0.0, %v1729
        %1731 = vdwg.mxu0
        %1732 = vmatpush.msra.mxu0 %v1710
        %1733 = vmatpush.msra.mxu0 %v1708
        %1734 = vmatpush.msra.mxu0 %v1706
        %1735 = vmatpush.msra.mxu0 %v1704
        %1736 = vmatpush.msra.mxu0 %v1702
        %1737 = vmatpush.msra.mxu0 %v1700
        %1738 = vmatpush.msra.mxu0 %v1698
        %1739 = vmatpush.msra.mxu0 %v1696
        %1740 = vmatpush.msra.mxu0 %v1694
        %1741 = vmatpush.msra.mxu0 %v1692
        %1742 = vmatpush.msra.mxu0 %v1690
        %1743 = vmatpush.msra.mxu0 %v1688
        %1744 = vmatpush.msra.mxu0 %v1686
        %1745 = vmatpush.msra.mxu0 %v1684
        %1746 = vmatpush.msra.mxu0 %v1682
        %1747 = vmatpush.msra.mxu0 %v1680
        %1748 = vmatmul.f32.gmra.mxu0 %v1495
        %v1749 = vpop.f32.mrf.mxu0
        %v1750 = vadd.f32 %v1730, %v1749
        %1751 = vdwg.mxu0
        %1752 = vmatpush.msra.mxu0 %v1679
        %1753 = vmatpush.msra.mxu0 %v1677
        %1754 = vmatpush.msra.mxu0 %v1675
        %1755 = vmatpush.msra.mxu0 %v1673
        %1756 = vmatpush.msra.mxu0 %v1671
        %1757 = vmatpush.msra.mxu0 %v1669
        %1758 = vmatpush.msra.mxu0 %v1667
        %1759 = vmatpush.msra.mxu0 %v1665
        %1760 = vmatpush.msra.mxu0 %v1663
        %1761 = vmatpush.msra.mxu0 %v1661
        %1762 = vmatpush.msra.mxu0 %v1659
        %1763 = vmatpush.msra.mxu0 %v1657
        %1764 = vmatpush.msra.mxu0 %v1655
        %1765 = vmatpush.msra.mxu0 %v1653
        %1766 = vmatpush.msra.mxu0 %v1651
        %1767 = vmatpush.msra.mxu0 %v1649
        %1768 = vmatmul.f32.gmra.mxu0 %v1475
        %v1769 = vpop.f32.mrf.mxu0
        %v1770 = vadd.f32 0.0, %v1769
        %1771 = vdwg.mxu0
        %1772 = vmatpush.msra.mxu0 %v1711
        %1773 = vmatpush.msra.mxu0 %v1709
        %1774 = vmatpush.msra.mxu0 %v1707
        %1775 = vmatpush.msra.mxu0 %v1705
        %1776 = vmatpush.msra.mxu0 %v1703
        %1777 = vmatpush.msra.mxu0 %v1701
        %1778 = vmatpush.msra.mxu0 %v1699
        %1779 = vmatpush.msra.mxu0 %v1697
        %1780 = vmatpush.msra.mxu0 %v1695
        %1781 = vmatpush.msra.mxu0 %v1693
        %1782 = vmatpush.msra.mxu0 %v1691
        %1783 = vmatpush.msra.mxu0 %v1689
        %1784 = vmatpush.msra.mxu0 %v1687
        %1785 = vmatpush.msra.mxu0 %v1685
        %1786 = vmatpush.msra.mxu0 %v1683
        %1787 = vmatpush.msra.mxu0 %v1681
        %1788 = vmatmul.f32.gmra.mxu0 %v1495
        %v1789 = vpop.f32.mrf.mxu0
        %v1790 = vadd.f32 %v1770, %v1789
        %1791 = vdwg.mxu0
        %1792 = vset.pattern.permute.xlu0 11
        %1793 = vperm.xlu0 %1792, %v431
        %v1794 = vpop.permute.xlu0 %1793
        %v1796 = vmul.f32 %v1794, %v1750
        %v1797 = vmul.f32 %v1794, %v1790
        %v1798 = vadd.f32 %v1645, %v1796
        %v1799 = vadd.f32 %v1646, %v1797
        %s1800 = scalar_lea.vmem [#allocation6], 1024
        %v1801 = vld [vmem:[%s1800] sm:$0xff]
        %v1802 = vld [vmem:[%s1800 + $0x8] sm:$0xff]
        %v1803 = vld [vmem:[%s1800 + $0x10] sm:$0xff]
        %v1804 = vld [vmem:[%s1800 + $0x18] sm:$0xff]
        %v1805 = vld [vmem:[%s1800 + $0x20] sm:$0xff]
        %v1806 = vld [vmem:[%s1800 + $0x28] sm:$0xff]
        %v1807 = vld [vmem:[%s1800 + $0x30] sm:$0xff]
        %v1808 = vld [vmem:[%s1800 + $0x38] sm:$0xff]
        %v1809 = vld [vmem:[%s1800 + $0x40] sm:$0xff]
        %v1810 = vld [vmem:[%s1800 + $0x48] sm:$0xff]
        %v1811 = vld [vmem:[%s1800 + $0x50] sm:$0xff]
        %v1812 = vld [vmem:[%s1800 + $0x58] sm:$0xff]
        %v1813 = vld [vmem:[%s1800 + $0x60] sm:$0xff]
        %v1814 = vld [vmem:[%s1800 + $0x68] sm:$0xff]
        %v1815 = vld [vmem:[%s1800 + $0x70] sm:$0xff]
        %v1816 = vld [vmem:[%s1800 + $0x78] sm:$0xff]
        %v1817 = vld [vmem:[%s1800 + $0x80] sm:$0xff]
        %v1818 = vld [vmem:[%s1800 + $0x88] sm:$0xff]
        %v1819 = vld [vmem:[%s1800 + $0x90] sm:$0xff]
        %v1820 = vld [vmem:[%s1800 + $0x98] sm:$0xff]
        %v1821 = vld [vmem:[%s1800 + $0xa0] sm:$0xff]
        %v1822 = vld [vmem:[%s1800 + $0xa8] sm:$0xff]
        %v1823 = vld [vmem:[%s1800 + $0xb0] sm:$0xff]
        %v1824 = vld [vmem:[%s1800 + $0xb8] sm:$0xff]
        %v1825 = vld [vmem:[%s1800 + $0xc0] sm:$0xff]
        %v1826 = vld [vmem:[%s1800 + $0xc8] sm:$0xff]
        %v1827 = vld [vmem:[%s1800 + $0xd0] sm:$0xff]
        %v1828 = vld [vmem:[%s1800 + $0xd8] sm:$0xff]
        %v1829 = vld [vmem:[%s1800 + $0xe0] sm:$0xff]
        %v1830 = vld [vmem:[%s1800 + $0xe8] sm:$0xff]
        %v1831 = vld [vmem:[%s1800 + $0xf0] sm:$0xff]
        %v1832 = vld [vmem:[%s1800 + $0xf8] sm:$0xff]
        %v1833 = vld [vmem:[%s1800 + $0x100] sm:$0xff]
        %v1834 = vld [vmem:[%s1800 + $0x108] sm:$0xff]
        %v1835 = vld [vmem:[%s1800 + $0x110] sm:$0xff]
        %v1836 = vld [vmem:[%s1800 + $0x118] sm:$0xff]
        %v1837 = vld [vmem:[%s1800 + $0x120] sm:$0xff]
        %v1838 = vld [vmem:[%s1800 + $0x128] sm:$0xff]
        %v1839 = vld [vmem:[%s1800 + $0x130] sm:$0xff]
        %v1840 = vld [vmem:[%s1800 + $0x138] sm:$0xff]
        %v1841 = vld [vmem:[%s1800 + $0x140] sm:$0xff]
        %v1842 = vld [vmem:[%s1800 + $0x148] sm:$0xff]
        %v1843 = vld [vmem:[%s1800 + $0x150] sm:$0xff]
        %v1844 = vld [vmem:[%s1800 + $0x158] sm:$0xff]
        %v1845 = vld [vmem:[%s1800 + $0x160] sm:$0xff]
        %v1846 = vld [vmem:[%s1800 + $0x168] sm:$0xff]
        %v1847 = vld [vmem:[%s1800 + $0x170] sm:$0xff]
        %v1848 = vld [vmem:[%s1800 + $0x178] sm:$0xff]
        %v1849 = vld [vmem:[%s1800 + $0x180] sm:$0xff]
        %v1850 = vld [vmem:[%s1800 + $0x188] sm:$0xff]
        %v1851 = vld [vmem:[%s1800 + $0x190] sm:$0xff]
        %v1852 = vld [vmem:[%s1800 + $0x198] sm:$0xff]
        %v1853 = vld [vmem:[%s1800 + $0x1a0] sm:$0xff]
        %v1854 = vld [vmem:[%s1800 + $0x1a8] sm:$0xff]
        %v1855 = vld [vmem:[%s1800 + $0x1b0] sm:$0xff]
        %v1856 = vld [vmem:[%s1800 + $0x1b8] sm:$0xff]
        %v1857 = vld [vmem:[%s1800 + $0x1c0] sm:$0xff]
        %v1858 = vld [vmem:[%s1800 + $0x1c8] sm:$0xff]
        %v1859 = vld [vmem:[%s1800 + $0x1d0] sm:$0xff]
        %v1860 = vld [vmem:[%s1800 + $0x1d8] sm:$0xff]
        %v1861 = vld [vmem:[%s1800 + $0x1e0] sm:$0xff]
        %v1862 = vld [vmem:[%s1800 + $0x1e8] sm:$0xff]
        %v1863 = vld [vmem:[%s1800 + $0x1f0] sm:$0xff]
        %v1864 = vld [vmem:[%s1800 + $0x1f8] sm:$0xff]
        %1865 = vmatpush.msra.mxu0 %v1831
        %1866 = vmatpush.msra.mxu0 %v1829
        %1867 = vmatpush.msra.mxu0 %v1827
        %1868 = vmatpush.msra.mxu0 %v1825
        %1869 = vmatpush.msra.mxu0 %v1823
        %1870 = vmatpush.msra.mxu0 %v1821
        %1871 = vmatpush.msra.mxu0 %v1819
        %1872 = vmatpush.msra.mxu0 %v1817
        %1873 = vmatpush.msra.mxu0 %v1815
        %1874 = vmatpush.msra.mxu0 %v1813
        %1875 = vmatpush.msra.mxu0 %v1811
        %1876 = vmatpush.msra.mxu0 %v1809
        %1877 = vmatpush.msra.mxu0 %v1807
        %1878 = vmatpush.msra.mxu0 %v1805
        %1879 = vmatpush.msra.mxu0 %v1803
        %1880 = vmatpush.msra.mxu0 %v1801
        %1881 = vmatmul.f32.gmra.mxu0 %v1475
        %v1882 = vpop.f32.mrf.mxu0
        %v1883 = vadd.f32 0.0, %v1882
        %1884 = vdwg.mxu0
        %1885 = vmatpush.msra.mxu0 %v1863
        %1886 = vmatpush.msra.mxu0 %v1861
        %1887 = vmatpush.msra.mxu0 %v1859
        %1888 = vmatpush.msra.mxu0 %v1857
        %1889 = vmatpush.msra.mxu0 %v1855
        %1890 = vmatpush.msra.mxu0 %v1853
        %1891 = vmatpush.msra.mxu0 %v1851
        %1892 = vmatpush.msra.mxu0 %v1849
        %1893 = vmatpush.msra.mxu0 %v1847
        %1894 = vmatpush.msra.mxu0 %v1845
        %1895 = vmatpush.msra.mxu0 %v1843
        %1896 = vmatpush.msra.mxu0 %v1841
        %1897 = vmatpush.msra.mxu0 %v1839
        %1898 = vmatpush.msra.mxu0 %v1837
        %1899 = vmatpush.msra.mxu0 %v1835
        %1900 = vmatpush.msra.mxu0 %v1833
        %1901 = vmatmul.f32.gmra.mxu0 %v1495
        %v1902 = vpop.f32.mrf.mxu0
        %v1903 = vadd.f32 %v1883, %v1902
        %1904 = vdwg.mxu0
        %1905 = vmatpush.msra.mxu0 %v1832
        %1906 = vmatpush.msra.mxu0 %v1830
        %1907 = vmatpush.msra.mxu0 %v1828
        %1908 = vmatpush.msra.mxu0 %v1826
        %1909 = vmatpush.msra.mxu0 %v1824
        %1910 = vmatpush.msra.mxu0 %v1822
        %1911 = vmatpush.msra.mxu0 %v1820
        %1912 = vmatpush.msra.mxu0 %v1818
        %1913 = vmatpush.msra.mxu0 %v1816
        %1914 = vmatpush.msra.mxu0 %v1814
        %1915 = vmatpush.msra.mxu0 %v1812
        %1916 = vmatpush.msra.mxu0 %v1810
        %1917 = vmatpush.msra.mxu0 %v1808
        %1918 = vmatpush.msra.mxu0 %v1806
        %1919 = vmatpush.msra.mxu0 %v1804
        %1920 = vmatpush.msra.mxu0 %v1802
        %1921 = vmatmul.f32.gmra.mxu0 %v1475
        %v1922 = vpop.f32.mrf.mxu0
        %v1923 = vadd.f32 0.0, %v1922
        %1924 = vdwg.mxu0
        %1925 = vmatpush.msra.mxu0 %v1864
        %1926 = vmatpush.msra.mxu0 %v1862
        %1927 = vmatpush.msra.mxu0 %v1860
        %1928 = vmatpush.msra.mxu0 %v1858
        %1929 = vmatpush.msra.mxu0 %v1856
        %1930 = vmatpush.msra.mxu0 %v1854
        %1931 = vmatpush.msra.mxu0 %v1852
        %1932 = vmatpush.msra.mxu0 %v1850
        %1933 = vmatpush.msra.mxu0 %v1848
        %1934 = vmatpush.msra.mxu0 %v1846
        %1935 = vmatpush.msra.mxu0 %v1844
        %1936 = vmatpush.msra.mxu0 %v1842
        %1937 = vmatpush.msra.mxu0 %v1840
        %1938 = vmatpush.msra.mxu0 %v1838
        %1939 = vmatpush.msra.mxu0 %v1836
        %1940 = vmatpush.msra.mxu0 %v1834
        %1941 = vmatmul.f32.gmra.mxu0 %v1495
        %v1942 = vpop.f32.mrf.mxu0
        %v1943 = vadd.f32 %v1923, %v1942
        %1944 = vdwg.mxu0
        %1945 = vset.pattern.permute.xlu0 12
        %1946 = vperm.xlu0 %1945, %v431
        %v1947 = vpop.permute.xlu0 %1946
        %v1949 = vmul.f32 %v1947, %v1903
        %v1950 = vmul.f32 %v1947, %v1943
        %v1951 = vadd.f32 %v1798, %v1949
        %v1952 = vadd.f32 %v1799, %v1950
        %s1953 = scalar_lea.vmem [#allocation6], 1536
        %v1954 = vld [vmem:[%s1953] sm:$0xff]
        %v1955 = vld [vmem:[%s1953 + $0x8] sm:$0xff]
        %v1956 = vld [vmem:[%s1953 + $0x10] sm:$0xff]
        %v1957 = vld [vmem:[%s1953 + $0x18] sm:$0xff]
        %v1958 = vld [vmem:[%s1953 + $0x20] sm:$0xff]
        %v1959 = vld [vmem:[%s1953 + $0x28] sm:$0xff]
        %v1960 = vld [vmem:[%s1953 + $0x30] sm:$0xff]
        %v1961 = vld [vmem:[%s1953 + $0x38] sm:$0xff]
        %v1962 = vld [vmem:[%s1953 + $0x40] sm:$0xff]
        %v1963 = vld [vmem:[%s1953 + $0x48] sm:$0xff]
        %v1964 = vld [vmem:[%s1953 + $0x50] sm:$0xff]
        %v1965 = vld [vmem:[%s1953 + $0x58] sm:$0xff]
        %v1966 = vld [vmem:[%s1953 + $0x60] sm:$0xff]
        %v1967 = vld [vmem:[%s1953 + $0x68] sm:$0xff]
        %v1968 = vld [vmem:[%s1953 + $0x70] sm:$0xff]
        %v1969 = vld [vmem:[%s1953 + $0x78] sm:$0xff]
        %v1970 = vld [vmem:[%s1953 + $0x80] sm:$0xff]
        %v1971 = vld [vmem:[%s1953 + $0x88] sm:$0xff]
        %v1972 = vld [vmem:[%s1953 + $0x90] sm:$0xff]
        %v1973 = vld [vmem:[%s1953 + $0x98] sm:$0xff]
        %v1974 = vld [vmem:[%s1953 + $0xa0] sm:$0xff]
        %v1975 = vld [vmem:[%s1953 + $0xa8] sm:$0xff]
        %v1976 = vld [vmem:[%s1953 + $0xb0] sm:$0xff]
        %v1977 = vld [vmem:[%s1953 + $0xb8] sm:$0xff]
        %v1978 = vld [vmem:[%s1953 + $0xc0] sm:$0xff]
        %v1979 = vld [vmem:[%s1953 + $0xc8] sm:$0xff]
        %v1980 = vld [vmem:[%s1953 + $0xd0] sm:$0xff]
        %v1981 = vld [vmem:[%s1953 + $0xd8] sm:$0xff]
        %v1982 = vld [vmem:[%s1953 + $0xe0] sm:$0xff]
        %v1983 = vld [vmem:[%s1953 + $0xe8] sm:$0xff]
        %v1984 = vld [vmem:[%s1953 + $0xf0] sm:$0xff]
        %v1985 = vld [vmem:[%s1953 + $0xf8] sm:$0xff]
        %v1986 = vld [vmem:[%s1953 + $0x100] sm:$0xff]
        %v1987 = vld [vmem:[%s1953 + $0x108] sm:$0xff]
        %v1988 = vld [vmem:[%s1953 + $0x110] sm:$0xff]
        %v1989 = vld [vmem:[%s1953 + $0x118] sm:$0xff]
        %v1990 = vld [vmem:[%s1953 + $0x120] sm:$0xff]
        %v1991 = vld [vmem:[%s1953 + $0x128] sm:$0xff]
        %v1992 = vld [vmem:[%s1953 + $0x130] sm:$0xff]
        %v1993 = vld [vmem:[%s1953 + $0x138] sm:$0xff]
        %v1994 = vld [vmem:[%s1953 + $0x140] sm:$0xff]
        %v1995 = vld [vmem:[%s1953 + $0x148] sm:$0xff]
        %v1996 = vld [vmem:[%s1953 + $0x150] sm:$0xff]
        %v1997 = vld [vmem:[%s1953 + $0x158] sm:$0xff]
        %v1998 = vld [vmem:[%s1953 + $0x160] sm:$0xff]
        %v1999 = vld [vmem:[%s1953 + $0x168] sm:$0xff]
        %v2000 = vld [vmem:[%s1953 + $0x170] sm:$0xff]
        %v2001 = vld [vmem:[%s1953 + $0x178] sm:$0xff]
        %v2002 = vld [vmem:[%s1953 + $0x180] sm:$0xff]
        %v2003 = vld [vmem:[%s1953 + $0x188] sm:$0xff]
        %v2004 = vld [vmem:[%s1953 + $0x190] sm:$0xff]
        %v2005 = vld [vmem:[%s1953 + $0x198] sm:$0xff]
        %v2006 = vld [vmem:[%s1953 + $0x1a0] sm:$0xff]
        %v2007 = vld [vmem:[%s1953 + $0x1a8] sm:$0xff]
        %v2008 = vld [vmem:[%s1953 + $0x1b0] sm:$0xff]
        %v2009 = vld [vmem:[%s1953 + $0x1b8] sm:$0xff]
        %v2010 = vld [vmem:[%s1953 + $0x1c0] sm:$0xff]
        %v2011 = vld [vmem:[%s1953 + $0x1c8] sm:$0xff]
        %v2012 = vld [vmem:[%s1953 + $0x1d0] sm:$0xff]
        %v2013 = vld [vmem:[%s1953 + $0x1d8] sm:$0xff]
        %v2014 = vld [vmem:[%s1953 + $0x1e0] sm:$0xff]
        %v2015 = vld [vmem:[%s1953 + $0x1e8] sm:$0xff]
        %v2016 = vld [vmem:[%s1953 + $0x1f0] sm:$0xff]
        %v2017 = vld [vmem:[%s1953 + $0x1f8] sm:$0xff]
        %2018 = vmatpush.msra.mxu0 %v1984
        %2019 = vmatpush.msra.mxu0 %v1982
        %2020 = vmatpush.msra.mxu0 %v1980
        %2021 = vmatpush.msra.mxu0 %v1978
        %2022 = vmatpush.msra.mxu0 %v1976
        %2023 = vmatpush.msra.mxu0 %v1974
        %2024 = vmatpush.msra.mxu0 %v1972
        %2025 = vmatpush.msra.mxu0 %v1970
        %2026 = vmatpush.msra.mxu0 %v1968
        %2027 = vmatpush.msra.mxu0 %v1966
        %2028 = vmatpush.msra.mxu0 %v1964
        %2029 = vmatpush.msra.mxu0 %v1962
        %2030 = vmatpush.msra.mxu0 %v1960
        %2031 = vmatpush.msra.mxu0 %v1958
        %2032 = vmatpush.msra.mxu0 %v1956
        %2033 = vmatpush.msra.mxu0 %v1954
        %2034 = vmatmul.f32.gmra.mxu0 %v1475
        %v2035 = vpop.f32.mrf.mxu0
        %v2036 = vadd.f32 0.0, %v2035
        %2037 = vdwg.mxu0
        %2038 = vmatpush.msra.mxu0 %v2016
        %2039 = vmatpush.msra.mxu0 %v2014
        %2040 = vmatpush.msra.mxu0 %v2012
        %2041 = vmatpush.msra.mxu0 %v2010
        %2042 = vmatpush.msra.mxu0 %v2008
        %2043 = vmatpush.msra.mxu0 %v2006
        %2044 = vmatpush.msra.mxu0 %v2004
        %2045 = vmatpush.msra.mxu0 %v2002
        %2046 = vmatpush.msra.mxu0 %v2000
        %2047 = vmatpush.msra.mxu0 %v1998
        %2048 = vmatpush.msra.mxu0 %v1996
        %2049 = vmatpush.msra.mxu0 %v1994
        %2050 = vmatpush.msra.mxu0 %v1992
        %2051 = vmatpush.msra.mxu0 %v1990
        %2052 = vmatpush.msra.mxu0 %v1988
        %2053 = vmatpush.msra.mxu0 %v1986
        %2054 = vmatmul.f32.gmra.mxu0 %v1495
        %v2055 = vpop.f32.mrf.mxu0
        %v2056 = vadd.f32 %v2036, %v2055
        %2057 = vdwg.mxu0
        %2058 = vmatpush.msra.mxu0 %v1985
        %2059 = vmatpush.msra.mxu0 %v1983
        %2060 = vmatpush.msra.mxu0 %v1981
        %2061 = vmatpush.msra.mxu0 %v1979
        %2062 = vmatpush.msra.mxu0 %v1977
        %2063 = vmatpush.msra.mxu0 %v1975
        %2064 = vmatpush.msra.mxu0 %v1973
        %2065 = vmatpush.msra.mxu0 %v1971
        %2066 = vmatpush.msra.mxu0 %v1969
        %2067 = vmatpush.msra.mxu0 %v1967
        %2068 = vmatpush.msra.mxu0 %v1965
        %2069 = vmatpush.msra.mxu0 %v1963
        %2070 = vmatpush.msra.mxu0 %v1961
        %2071 = vmatpush.msra.mxu0 %v1959
        %2072 = vmatpush.msra.mxu0 %v1957
        %2073 = vmatpush.msra.mxu0 %v1955
        %2074 = vmatmul.f32.gmra.mxu0 %v1475
        %v2075 = vpop.f32.mrf.mxu0
        %v2076 = vadd.f32 0.0, %v2075
        %2077 = vdwg.mxu0
        %2078 = vmatpush.msra.mxu0 %v2017
        %2079 = vmatpush.msra.mxu0 %v2015
        %2080 = vmatpush.msra.mxu0 %v2013
        %2081 = vmatpush.msra.mxu0 %v2011
        %2082 = vmatpush.msra.mxu0 %v2009
        %2083 = vmatpush.msra.mxu0 %v2007
        %2084 = vmatpush.msra.mxu0 %v2005
        %2085 = vmatpush.msra.mxu0 %v2003
        %2086 = vmatpush.msra.mxu0 %v2001
        %2087 = vmatpush.msra.mxu0 %v1999
        %2088 = vmatpush.msra.mxu0 %v1997
        %2089 = vmatpush.msra.mxu0 %v1995
        %2090 = vmatpush.msra.mxu0 %v1993
        %2091 = vmatpush.msra.mxu0 %v1991
        %2092 = vmatpush.msra.mxu0 %v1989
        %2093 = vmatpush.msra.mxu0 %v1987
        %2094 = vmatmul.f32.gmra.mxu0 %v1495
        %v2095 = vpop.f32.mrf.mxu0
        %v2096 = vadd.f32 %v2076, %v2095
        %2097 = vdwg.mxu0
        %2098 = vset.pattern.permute.xlu0 13
        %2099 = vperm.xlu0 %2098, %v431
        %v2100 = vpop.permute.xlu0 %2099
        %v2102 = vmul.f32 %v2100, %v2056
        %v2103 = vmul.f32 %v2100, %v2096
        %v2104 = vadd.f32 %v1951, %v2102
        %v2105 = vadd.f32 %v1952, %v2103
        %s2106 = scalar_lea.vmem [#allocation6], 2048
        %v2107 = vld [vmem:[%s2106] sm:$0xff]
        %v2108 = vld [vmem:[%s2106 + $0x8] sm:$0xff]
        %v2109 = vld [vmem:[%s2106 + $0x10] sm:$0xff]
        %v2110 = vld [vmem:[%s2106 + $0x18] sm:$0xff]
        %v2111 = vld [vmem:[%s2106 + $0x20] sm:$0xff]
        %v2112 = vld [vmem:[%s2106 + $0x28] sm:$0xff]
        %v2113 = vld [vmem:[%s2106 + $0x30] sm:$0xff]
        %v2114 = vld [vmem:[%s2106 + $0x38] sm:$0xff]
        %v2115 = vld [vmem:[%s2106 + $0x40] sm:$0xff]
        %v2116 = vld [vmem:[%s2106 + $0x48] sm:$0xff]
        %v2117 = vld [vmem:[%s2106 + $0x50] sm:$0xff]
        %v2118 = vld [vmem:[%s2106 + $0x58] sm:$0xff]
        %v2119 = vld [vmem:[%s2106 + $0x60] sm:$0xff]
        %v2120 = vld [vmem:[%s2106 + $0x68] sm:$0xff]
        %v2121 = vld [vmem:[%s2106 + $0x70] sm:$0xff]
        %v2122 = vld [vmem:[%s2106 + $0x78] sm:$0xff]
        %v2123 = vld [vmem:[%s2106 + $0x80] sm:$0xff]
        %v2124 = vld [vmem:[%s2106 + $0x88] sm:$0xff]
        %v2125 = vld [vmem:[%s2106 + $0x90] sm:$0xff]
        %v2126 = vld [vmem:[%s2106 + $0x98] sm:$0xff]
        %v2127 = vld [vmem:[%s2106 + $0xa0] sm:$0xff]
        %v2128 = vld [vmem:[%s2106 + $0xa8] sm:$0xff]
        %v2129 = vld [vmem:[%s2106 + $0xb0] sm:$0xff]
        %v2130 = vld [vmem:[%s2106 + $0xb8] sm:$0xff]
        %v2131 = vld [vmem:[%s2106 + $0xc0] sm:$0xff]
        %v2132 = vld [vmem:[%s2106 + $0xc8] sm:$0xff]
        %v2133 = vld [vmem:[%s2106 + $0xd0] sm:$0xff]
        %v2134 = vld [vmem:[%s2106 + $0xd8] sm:$0xff]
        %v2135 = vld [vmem:[%s2106 + $0xe0] sm:$0xff]
        %v2136 = vld [vmem:[%s2106 + $0xe8] sm:$0xff]
        %v2137 = vld [vmem:[%s2106 + $0xf0] sm:$0xff]
        %v2138 = vld [vmem:[%s2106 + $0xf8] sm:$0xff]
        %v2139 = vld [vmem:[%s2106 + $0x100] sm:$0xff]
        %v2140 = vld [vmem:[%s2106 + $0x108] sm:$0xff]
        %v2141 = vld [vmem:[%s2106 + $0x110] sm:$0xff]
        %v2142 = vld [vmem:[%s2106 + $0x118] sm:$0xff]
        %v2143 = vld [vmem:[%s2106 + $0x120] sm:$0xff]
        %v2144 = vld [vmem:[%s2106 + $0x128] sm:$0xff]
        %v2145 = vld [vmem:[%s2106 + $0x130] sm:$0xff]
        %v2146 = vld [vmem:[%s2106 + $0x138] sm:$0xff]
        %v2147 = vld [vmem:[%s2106 + $0x140] sm:$0xff]
        %v2148 = vld [vmem:[%s2106 + $0x148] sm:$0xff]
        %v2149 = vld [vmem:[%s2106 + $0x150] sm:$0xff]
        %v2150 = vld [vmem:[%s2106 + $0x158] sm:$0xff]
        %v2151 = vld [vmem:[%s2106 + $0x160] sm:$0xff]
        %v2152 = vld [vmem:[%s2106 + $0x168] sm:$0xff]
        %v2153 = vld [vmem:[%s2106 + $0x170] sm:$0xff]
        %v2154 = vld [vmem:[%s2106 + $0x178] sm:$0xff]
        %v2155 = vld [vmem:[%s2106 + $0x180] sm:$0xff]
        %v2156 = vld [vmem:[%s2106 + $0x188] sm:$0xff]
        %v2157 = vld [vmem:[%s2106 + $0x190] sm:$0xff]
        %v2158 = vld [vmem:[%s2106 + $0x198] sm:$0xff]
        %v2159 = vld [vmem:[%s2106 + $0x1a0] sm:$0xff]
        %v2160 = vld [vmem:[%s2106 + $0x1a8] sm:$0xff]
        %v2161 = vld [vmem:[%s2106 + $0x1b0] sm:$0xff]
        %v2162 = vld [vmem:[%s2106 + $0x1b8] sm:$0xff]
        %v2163 = vld [vmem:[%s2106 + $0x1c0] sm:$0xff]
        %v2164 = vld [vmem:[%s2106 + $0x1c8] sm:$0xff]
        %v2165 = vld [vmem:[%s2106 + $0x1d0] sm:$0xff]
        %v2166 = vld [vmem:[%s2106 + $0x1d8] sm:$0xff]
        %v2167 = vld [vmem:[%s2106 + $0x1e0] sm:$0xff]
        %v2168 = vld [vmem:[%s2106 + $0x1e8] sm:$0xff]
        %v2169 = vld [vmem:[%s2106 + $0x1f0] sm:$0xff]
        %v2170 = vld [vmem:[%s2106 + $0x1f8] sm:$0xff]
        %2171 = vmatpush.msra.mxu0 %v2137
        %2172 = vmatpush.msra.mxu0 %v2135
        %2173 = vmatpush.msra.mxu0 %v2133
        %2174 = vmatpush.msra.mxu0 %v2131
        %2175 = vmatpush.msra.mxu0 %v2129
        %2176 = vmatpush.msra.mxu0 %v2127
        %2177 = vmatpush.msra.mxu0 %v2125
        %2178 = vmatpush.msra.mxu0 %v2123
        %2179 = vmatpush.msra.mxu0 %v2121
        %2180 = vmatpush.msra.mxu0 %v2119
        %2181 = vmatpush.msra.mxu0 %v2117
        %2182 = vmatpush.msra.mxu0 %v2115
        %2183 = vmatpush.msra.mxu0 %v2113
        %2184 = vmatpush.msra.mxu0 %v2111
        %2185 = vmatpush.msra.mxu0 %v2109
        %2186 = vmatpush.msra.mxu0 %v2107
        %2187 = vmatmul.f32.gmra.mxu0 %v1475
        %v2188 = vpop.f32.mrf.mxu0
        %v2189 = vadd.f32 0.0, %v2188
        %2190 = vdwg.mxu0
        %2191 = vmatpush.msra.mxu0 %v2169
        %2192 = vmatpush.msra.mxu0 %v2167
        %2193 = vmatpush.msra.mxu0 %v2165
        %2194 = vmatpush.msra.mxu0 %v2163
        %2195 = vmatpush.msra.mxu0 %v2161
        %2196 = vmatpush.msra.mxu0 %v2159
        %2197 = vmatpush.msra.mxu0 %v2157
        %2198 = vmatpush.msra.mxu0 %v2155
        %2199 = vmatpush.msra.mxu0 %v2153
        %2200 = vmatpush.msra.mxu0 %v2151
        %2201 = vmatpush.msra.mxu0 %v2149
        %2202 = vmatpush.msra.mxu0 %v2147
        %2203 = vmatpush.msra.mxu0 %v2145
        %2204 = vmatpush.msra.mxu0 %v2143
        %2205 = vmatpush.msra.mxu0 %v2141
        %2206 = vmatpush.msra.mxu0 %v2139
        %2207 = vmatmul.f32.gmra.mxu0 %v1495
        %v2208 = vpop.f32.mrf.mxu0
        %v2209 = vadd.f32 %v2189, %v2208
        %2210 = vdwg.mxu0
        %2211 = vmatpush.msra.mxu0 %v2138
        %2212 = vmatpush.msra.mxu0 %v2136
        %2213 = vmatpush.msra.mxu0 %v2134
        %2214 = vmatpush.msra.mxu0 %v2132
        %2215 = vmatpush.msra.mxu0 %v2130
        %2216 = vmatpush.msra.mxu0 %v2128
        %2217 = vmatpush.msra.mxu0 %v2126
        %2218 = vmatpush.msra.mxu0 %v2124
        %2219 = vmatpush.msra.mxu0 %v2122
        %2220 = vmatpush.msra.mxu0 %v2120
        %2221 = vmatpush.msra.mxu0 %v2118
        %2222 = vmatpush.msra.mxu0 %v2116
        %2223 = vmatpush.msra.mxu0 %v2114
        %2224 = vmatpush.msra.mxu0 %v2112
        %2225 = vmatpush.msra.mxu0 %v2110
        %2226 = vmatpush.msra.mxu0 %v2108
        %2227 = vmatmul.f32.gmra.mxu0 %v1475
        %v2228 = vpop.f32.mrf.mxu0
        %v2229 = vadd.f32 0.0, %v2228
        %2230 = vdwg.mxu0
        %2231 = vmatpush.msra.mxu0 %v2170
        %2232 = vmatpush.msra.mxu0 %v2168
        %2233 = vmatpush.msra.mxu0 %v2166
        %2234 = vmatpush.msra.mxu0 %v2164
        %2235 = vmatpush.msra.mxu0 %v2162
        %2236 = vmatpush.msra.mxu0 %v2160
        %2237 = vmatpush.msra.mxu0 %v2158
        %2238 = vmatpush.msra.mxu0 %v2156
        %2239 = vmatpush.msra.mxu0 %v2154
        %2240 = vmatpush.msra.mxu0 %v2152
        %2241 = vmatpush.msra.mxu0 %v2150
        %2242 = vmatpush.msra.mxu0 %v2148
        %2243 = vmatpush.msra.mxu0 %v2146
        %2244 = vmatpush.msra.mxu0 %v2144
        %2245 = vmatpush.msra.mxu0 %v2142
        %2246 = vmatpush.msra.mxu0 %v2140
        %2247 = vmatmul.f32.gmra.mxu0 %v1495
        %v2248 = vpop.f32.mrf.mxu0
        %v2249 = vadd.f32 %v2229, %v2248
        %2250 = vdwg.mxu0
        %2251 = vset.pattern.permute.xlu0 14
        %2252 = vperm.xlu0 %2251, %v431
        %v2253 = vpop.permute.xlu0 %2252
        %v2255 = vmul.f32 %v2253, %v2209
        %v2256 = vmul.f32 %v2253, %v2249
        %v2257 = vadd.f32 %v2104, %v2255
        %v2258 = vadd.f32 %v2105, %v2256
        %s2259 = scalar_lea.vmem [#allocation6], 2560
        %v2260 = vld [vmem:[%s2259] sm:$0xff]
        %v2261 = vld [vmem:[%s2259 + $0x8] sm:$0xff]
        %v2262 = vld [vmem:[%s2259 + $0x10] sm:$0xff]
        %v2263 = vld [vmem:[%s2259 + $0x18] sm:$0xff]
        %v2264 = vld [vmem:[%s2259 + $0x20] sm:$0xff]
        %v2265 = vld [vmem:[%s2259 + $0x28] sm:$0xff]
        %v2266 = vld [vmem:[%s2259 + $0x30] sm:$0xff]
        %v2267 = vld [vmem:[%s2259 + $0x38] sm:$0xff]
        %v2268 = vld [vmem:[%s2259 + $0x40] sm:$0xff]
        %v2269 = vld [vmem:[%s2259 + $0x48] sm:$0xff]
        %v2270 = vld [vmem:[%s2259 + $0x50] sm:$0xff]
        %v2271 = vld [vmem:[%s2259 + $0x58] sm:$0xff]
        %v2272 = vld [vmem:[%s2259 + $0x60] sm:$0xff]
        %v2273 = vld [vmem:[%s2259 + $0x68] sm:$0xff]
        %v2274 = vld [vmem:[%s2259 + $0x70] sm:$0xff]
        %v2275 = vld [vmem:[%s2259 + $0x78] sm:$0xff]
        %v2276 = vld [vmem:[%s2259 + $0x80] sm:$0xff]
        %v2277 = vld [vmem:[%s2259 + $0x88] sm:$0xff]
        %v2278 = vld [vmem:[%s2259 + $0x90] sm:$0xff]
        %v2279 = vld [vmem:[%s2259 + $0x98] sm:$0xff]
        %v2280 = vld [vmem:[%s2259 + $0xa0] sm:$0xff]
        %v2281 = vld [vmem:[%s2259 + $0xa8] sm:$0xff]
        %v2282 = vld [vmem:[%s2259 + $0xb0] sm:$0xff]
        %v2283 = vld [vmem:[%s2259 + $0xb8] sm:$0xff]
        %v2284 = vld [vmem:[%s2259 + $0xc0] sm:$0xff]
        %v2285 = vld [vmem:[%s2259 + $0xc8] sm:$0xff]
        %v2286 = vld [vmem:[%s2259 + $0xd0] sm:$0xff]
        %v2287 = vld [vmem:[%s2259 + $0xd8] sm:$0xff]
        %v2288 = vld [vmem:[%s2259 + $0xe0] sm:$0xff]
        %v2289 = vld [vmem:[%s2259 + $0xe8] sm:$0xff]
        %v2290 = vld [vmem:[%s2259 + $0xf0] sm:$0xff]
        %v2291 = vld [vmem:[%s2259 + $0xf8] sm:$0xff]
        %v2292 = vld [vmem:[%s2259 + $0x100] sm:$0xff]
        %v2293 = vld [vmem:[%s2259 + $0x108] sm:$0xff]
        %v2294 = vld [vmem:[%s2259 + $0x110] sm:$0xff]
        %v2295 = vld [vmem:[%s2259 + $0x118] sm:$0xff]
        %v2296 = vld [vmem:[%s2259 + $0x120] sm:$0xff]
        %v2297 = vld [vmem:[%s2259 + $0x128] sm:$0xff]
        %v2298 = vld [vmem:[%s2259 + $0x130] sm:$0xff]
        %v2299 = vld [vmem:[%s2259 + $0x138] sm:$0xff]
        %v2300 = vld [vmem:[%s2259 + $0x140] sm:$0xff]
        %v2301 = vld [vmem:[%s2259 + $0x148] sm:$0xff]
        %v2302 = vld [vmem:[%s2259 + $0x150] sm:$0xff]
        %v2303 = vld [vmem:[%s2259 + $0x158] sm:$0xff]
        %v2304 = vld [vmem:[%s2259 + $0x160] sm:$0xff]
        %v2305 = vld [vmem:[%s2259 + $0x168] sm:$0xff]
        %v2306 = vld [vmem:[%s2259 + $0x170] sm:$0xff]
        %v2307 = vld [vmem:[%s2259 + $0x178] sm:$0xff]
        %v2308 = vld [vmem:[%s2259 + $0x180] sm:$0xff]
        %v2309 = vld [vmem:[%s2259 + $0x188] sm:$0xff]
        %v2310 = vld [vmem:[%s2259 + $0x190] sm:$0xff]
        %v2311 = vld [vmem:[%s2259 + $0x198] sm:$0xff]
        %v2312 = vld [vmem:[%s2259 + $0x1a0] sm:$0xff]
        %v2313 = vld [vmem:[%s2259 + $0x1a8] sm:$0xff]
        %v2314 = vld [vmem:[%s2259 + $0x1b0] sm:$0xff]
        %v2315 = vld [vmem:[%s2259 + $0x1b8] sm:$0xff]
        %v2316 = vld [vmem:[%s2259 + $0x1c0] sm:$0xff]
        %v2317 = vld [vmem:[%s2259 + $0x1c8] sm:$0xff]
        %v2318 = vld [vmem:[%s2259 + $0x1d0] sm:$0xff]
        %v2319 = vld [vmem:[%s2259 + $0x1d8] sm:$0xff]
        %v2320 = vld [vmem:[%s2259 + $0x1e0] sm:$0xff]
        %v2321 = vld [vmem:[%s2259 + $0x1e8] sm:$0xff]
        %v2322 = vld [vmem:[%s2259 + $0x1f0] sm:$0xff]
        %v2323 = vld [vmem:[%s2259 + $0x1f8] sm:$0xff]
        %2324 = vmatpush.msra.mxu0 %v2290
        %2325 = vmatpush.msra.mxu0 %v2288
        %2326 = vmatpush.msra.mxu0 %v2286
        %2327 = vmatpush.msra.mxu0 %v2284
        %2328 = vmatpush.msra.mxu0 %v2282
        %2329 = vmatpush.msra.mxu0 %v2280
        %2330 = vmatpush.msra.mxu0 %v2278
        %2331 = vmatpush.msra.mxu0 %v2276
        %2332 = vmatpush.msra.mxu0 %v2274
        %2333 = vmatpush.msra.mxu0 %v2272
        %2334 = vmatpush.msra.mxu0 %v2270
        %2335 = vmatpush.msra.mxu0 %v2268
        %2336 = vmatpush.msra.mxu0 %v2266
        %2337 = vmatpush.msra.mxu0 %v2264
        %2338 = vmatpush.msra.mxu0 %v2262
        %2339 = vmatpush.msra.mxu0 %v2260
        %2340 = vmatmul.f32.gmra.mxu0 %v1475
        %v2341 = vpop.f32.mrf.mxu0
        %v2342 = vadd.f32 0.0, %v2341
        %2343 = vdwg.mxu0
        %2344 = vmatpush.msra.mxu0 %v2322
        %2345 = vmatpush.msra.mxu0 %v2320
        %2346 = vmatpush.msra.mxu0 %v2318
        %2347 = vmatpush.msra.mxu0 %v2316
        %2348 = vmatpush.msra.mxu0 %v2314
        %2349 = vmatpush.msra.mxu0 %v2312
        %2350 = vmatpush.msra.mxu0 %v2310
        %2351 = vmatpush.msra.mxu0 %v2308
        %2352 = vmatpush.msra.mxu0 %v2306
        %2353 = vmatpush.msra.mxu0 %v2304
        %2354 = vmatpush.msra.mxu0 %v2302
        %2355 = vmatpush.msra.mxu0 %v2300
        %2356 = vmatpush.msra.mxu0 %v2298
        %2357 = vmatpush.msra.mxu0 %v2296
        %2358 = vmatpush.msra.mxu0 %v2294
        %2359 = vmatpush.msra.mxu0 %v2292
        %2360 = vmatmul.f32.gmra.mxu0 %v1495
        %v2361 = vpop.f32.mrf.mxu0
        %v2362 = vadd.f32 %v2342, %v2361
        %2363 = vdwg.mxu0
        %2364 = vmatpush.msra.mxu0 %v2291
        %2365 = vmatpush.msra.mxu0 %v2289
        %2366 = vmatpush.msra.mxu0 %v2287
        %2367 = vmatpush.msra.mxu0 %v2285
        %2368 = vmatpush.msra.mxu0 %v2283
        %2369 = vmatpush.msra.mxu0 %v2281
        %2370 = vmatpush.msra.mxu0 %v2279
        %2371 = vmatpush.msra.mxu0 %v2277
        %2372 = vmatpush.msra.mxu0 %v2275
        %2373 = vmatpush.msra.mxu0 %v2273
        %2374 = vmatpush.msra.mxu0 %v2271
        %2375 = vmatpush.msra.mxu0 %v2269
        %2376 = vmatpush.msra.mxu0 %v2267
        %2377 = vmatpush.msra.mxu0 %v2265
        %2378 = vmatpush.msra.mxu0 %v2263
        %2379 = vmatpush.msra.mxu0 %v2261
        %2380 = vmatmul.f32.gmra.mxu0 %v1475
        %v2381 = vpop.f32.mrf.mxu0
        %v2382 = vadd.f32 0.0, %v2381
        %2383 = vdwg.mxu0
        %2384 = vmatpush.msra.mxu0 %v2323
        %2385 = vmatpush.msra.mxu0 %v2321
        %2386 = vmatpush.msra.mxu0 %v2319
        %2387 = vmatpush.msra.mxu0 %v2317
        %2388 = vmatpush.msra.mxu0 %v2315
        %2389 = vmatpush.msra.mxu0 %v2313
        %2390 = vmatpush.msra.mxu0 %v2311
        %2391 = vmatpush.msra.mxu0 %v2309
        %2392 = vmatpush.msra.mxu0 %v2307
        %2393 = vmatpush.msra.mxu0 %v2305
        %2394 = vmatpush.msra.mxu0 %v2303
        %2395 = vmatpush.msra.mxu0 %v2301
        %2396 = vmatpush.msra.mxu0 %v2299
        %2397 = vmatpush.msra.mxu0 %v2297
        %2398 = vmatpush.msra.mxu0 %v2295
        %2399 = vmatpush.msra.mxu0 %v2293
        %2400 = vmatmul.f32.gmra.mxu0 %v1495
        %v2401 = vpop.f32.mrf.mxu0
        %v2402 = vadd.f32 %v2382, %v2401
        %2403 = vdwg.mxu0
        %2404 = vset.pattern.permute.xlu0 15
        %2405 = vperm.xlu0 %2404, %v431
        %v2406 = vpop.permute.xlu0 %2405
        %v2408 = vmul.f32 %v2406, %v2362
        %v2409 = vmul.f32 %v2406, %v2402
        %v2410 = vadd.f32 %v2257, %v2408
        %v2411 = vadd.f32 %v2258, %v2409
        %s2412 = scalar_lea.vmem [#allocation6], 3072
        %v2413 = vld [vmem:[%s2412] sm:$0xff]
        %v2414 = vld [vmem:[%s2412 + $0x8] sm:$0xff]
        %v2415 = vld [vmem:[%s2412 + $0x10] sm:$0xff]
        %v2416 = vld [vmem:[%s2412 + $0x18] sm:$0xff]
        %v2417 = vld [vmem:[%s2412 + $0x20] sm:$0xff]
        %v2418 = vld [vmem:[%s2412 + $0x28] sm:$0xff]
        %v2419 = vld [vmem:[%s2412 + $0x30] sm:$0xff]
        %v2420 = vld [vmem:[%s2412 + $0x38] sm:$0xff]
        %v2421 = vld [vmem:[%s2412 + $0x40] sm:$0xff]
        %v2422 = vld [vmem:[%s2412 + $0x48] sm:$0xff]
        %v2423 = vld [vmem:[%s2412 + $0x50] sm:$0xff]
        %v2424 = vld [vmem:[%s2412 + $0x58] sm:$0xff]
        %v2425 = vld [vmem:[%s2412 + $0x60] sm:$0xff]
        %v2426 = vld [vmem:[%s2412 + $0x68] sm:$0xff]
        %v2427 = vld [vmem:[%s2412 + $0x70] sm:$0xff]
        %v2428 = vld [vmem:[%s2412 + $0x78] sm:$0xff]
        %v2429 = vld [vmem:[%s2412 + $0x80] sm:$0xff]
        %v2430 = vld [vmem:[%s2412 + $0x88] sm:$0xff]
        %v2431 = vld [vmem:[%s2412 + $0x90] sm:$0xff]
        %v2432 = vld [vmem:[%s2412 + $0x98] sm:$0xff]
        %v2433 = vld [vmem:[%s2412 + $0xa0] sm:$0xff]
        %v2434 = vld [vmem:[%s2412 + $0xa8] sm:$0xff]
        %v2435 = vld [vmem:[%s2412 + $0xb0] sm:$0xff]
        %v2436 = vld [vmem:[%s2412 + $0xb8] sm:$0xff]
        %v2437 = vld [vmem:[%s2412 + $0xc0] sm:$0xff]
        %v2438 = vld [vmem:[%s2412 + $0xc8] sm:$0xff]
        %v2439 = vld [vmem:[%s2412 + $0xd0] sm:$0xff]
        %v2440 = vld [vmem:[%s2412 + $0xd8] sm:$0xff]
        %v2441 = vld [vmem:[%s2412 + $0xe0] sm:$0xff]
        %v2442 = vld [vmem:[%s2412 + $0xe8] sm:$0xff]
        %v2443 = vld [vmem:[%s2412 + $0xf0] sm:$0xff]
        %v2444 = vld [vmem:[%s2412 + $0xf8] sm:$0xff]
        %v2445 = vld [vmem:[%s2412 + $0x100] sm:$0xff]
        %v2446 = vld [vmem:[%s2412 + $0x108] sm:$0xff]
        %v2447 = vld [vmem:[%s2412 + $0x110] sm:$0xff]
        %v2448 = vld [vmem:[%s2412 + $0x118] sm:$0xff]
        %v2449 = vld [vmem:[%s2412 + $0x120] sm:$0xff]
        %v2450 = vld [vmem:[%s2412 + $0x128] sm:$0xff]
        %v2451 = vld [vmem:[%s2412 + $0x130] sm:$0xff]
        %v2452 = vld [vmem:[%s2412 + $0x138] sm:$0xff]
        %v2453 = vld [vmem:[%s2412 + $0x140] sm:$0xff]
        %v2454 = vld [vmem:[%s2412 + $0x148] sm:$0xff]
        %v2455 = vld [vmem:[%s2412 + $0x150] sm:$0xff]
        %v2456 = vld [vmem:[%s2412 + $0x158] sm:$0xff]
        %v2457 = vld [vmem:[%s2412 + $0x160] sm:$0xff]
        %v2458 = vld [vmem:[%s2412 + $0x168] sm:$0xff]
        %v2459 = vld [vmem:[%s2412 + $0x170] sm:$0xff]
        %v2460 = vld [vmem:[%s2412 + $0x178] sm:$0xff]
        %v2461 = vld [vmem:[%s2412 + $0x180] sm:$0xff]
        %v2462 = vld [vmem:[%s2412 + $0x188] sm:$0xff]
        %v2463 = vld [vmem:[%s2412 + $0x190] sm:$0xff]
        %v2464 = vld [vmem:[%s2412 + $0x198] sm:$0xff]
        %v2465 = vld [vmem:[%s2412 + $0x1a0] sm:$0xff]
        %v2466 = vld [vmem:[%s2412 + $0x1a8] sm:$0xff]
        %v2467 = vld [vmem:[%s2412 + $0x1b0] sm:$0xff]
        %v2468 = vld [vmem:[%s2412 + $0x1b8] sm:$0xff]
        %v2469 = vld [vmem:[%s2412 + $0x1c0] sm:$0xff]
        %v2470 = vld [vmem:[%s2412 + $0x1c8] sm:$0xff]
        %v2471 = vld [vmem:[%s2412 + $0x1d0] sm:$0xff]
        %v2472 = vld [vmem:[%s2412 + $0x1d8] sm:$0xff]
        %v2473 = vld [vmem:[%s2412 + $0x1e0] sm:$0xff]
        %v2474 = vld [vmem:[%s2412 + $0x1e8] sm:$0xff]
        %v2475 = vld [vmem:[%s2412 + $0x1f0] sm:$0xff]
        %v2476 = vld [vmem:[%s2412 + $0x1f8] sm:$0xff]
        %2477 = vmatpush.msra.mxu0 %v2443
        %2478 = vmatpush.msra.mxu0 %v2441
        %2479 = vmatpush.msra.mxu0 %v2439
        %2480 = vmatpush.msra.mxu0 %v2437
        %2481 = vmatpush.msra.mxu0 %v2435
        %2482 = vmatpush.msra.mxu0 %v2433
        %2483 = vmatpush.msra.mxu0 %v2431
        %2484 = vmatpush.msra.mxu0 %v2429
        %2485 = vmatpush.msra.mxu0 %v2427
        %2486 = vmatpush.msra.mxu0 %v2425
        %2487 = vmatpush.msra.mxu0 %v2423
        %2488 = vmatpush.msra.mxu0 %v2421
        %2489 = vmatpush.msra.mxu0 %v2419
        %2490 = vmatpush.msra.mxu0 %v2417
        %2491 = vmatpush.msra.mxu0 %v2415
        %2492 = vmatpush.msra.mxu0 %v2413
        %2493 = vmatmul.f32.gmra.mxu0 %v1475
        %v2494 = vpop.f32.mrf.mxu0
        %v2495 = vadd.f32 0.0, %v2494
        %2496 = vdwg.mxu0
        %2497 = vmatpush.msra.mxu0 %v2475
        %2498 = vmatpush.msra.mxu0 %v2473
        %2499 = vmatpush.msra.mxu0 %v2471
        %2500 = vmatpush.msra.mxu0 %v2469
        %2501 = vmatpush.msra.mxu0 %v2467
        %2502 = vmatpush.msra.mxu0 %v2465
        %2503 = vmatpush.msra.mxu0 %v2463
        %2504 = vmatpush.msra.mxu0 %v2461
        %2505 = vmatpush.msra.mxu0 %v2459
        %2506 = vmatpush.msra.mxu0 %v2457
        %2507 = vmatpush.msra.mxu0 %v2455
        %2508 = vmatpush.msra.mxu0 %v2453
        %2509 = vmatpush.msra.mxu0 %v2451
        %2510 = vmatpush.msra.mxu0 %v2449
        %2511 = vmatpush.msra.mxu0 %v2447
        %2512 = vmatpush.msra.mxu0 %v2445
        %2513 = vmatmul.f32.gmra.mxu0 %v1495
        %v2514 = vpop.f32.mrf.mxu0
        %v2515 = vadd.f32 %v2495, %v2514
        %2516 = vdwg.mxu0
        %2517 = vmatpush.msra.mxu0 %v2444
        %2518 = vmatpush.msra.mxu0 %v2442
        %2519 = vmatpush.msra.mxu0 %v2440
        %2520 = vmatpush.msra.mxu0 %v2438
        %2521 = vmatpush.msra.mxu0 %v2436
        %2522 = vmatpush.msra.mxu0 %v2434
        %2523 = vmatpush.msra.mxu0 %v2432
        %2524 = vmatpush.msra.mxu0 %v2430
        %2525 = vmatpush.msra.mxu0 %v2428
        %2526 = vmatpush.msra.mxu0 %v2426
        %2527 = vmatpush.msra.mxu0 %v2424
        %2528 = vmatpush.msra.mxu0 %v2422
        %2529 = vmatpush.msra.mxu0 %v2420
        %2530 = vmatpush.msra.mxu0 %v2418
        %2531 = vmatpush.msra.mxu0 %v2416
        %2532 = vmatpush.msra.mxu0 %v2414
        %2533 = vmatmul.f32.gmra.mxu0 %v1475
        %v2534 = vpop.f32.mrf.mxu0
        %v2535 = vadd.f32 0.0, %v2534
        %2536 = vdwg.mxu0
        %2537 = vmatpush.msra.mxu0 %v2476
        %2538 = vmatpush.msra.mxu0 %v2474
        %2539 = vmatpush.msra.mxu0 %v2472
        %2540 = vmatpush.msra.mxu0 %v2470
        %2541 = vmatpush.msra.mxu0 %v2468
        %2542 = vmatpush.msra.mxu0 %v2466
        %2543 = vmatpush.msra.mxu0 %v2464
        %2544 = vmatpush.msra.mxu0 %v2462
        %2545 = vmatpush.msra.mxu0 %v2460
        %2546 = vmatpush.msra.mxu0 %v2458
        %2547 = vmatpush.msra.mxu0 %v2456
        %2548 = vmatpush.msra.mxu0 %v2454
        %2549 = vmatpush.msra.mxu0 %v2452
        %2550 = vmatpush.msra.mxu0 %v2450
        %2551 = vmatpush.msra.mxu0 %v2448
        %2552 = vmatpush.msra.mxu0 %v2446
        %2553 = vmatmul.f32.gmra.mxu0 %v1495
        %v2554 = vpop.f32.mrf.mxu0
        %v2555 = vadd.f32 %v2535, %v2554
        %2556 = vdwg.mxu0
        %2557 = vset.pattern.permute.xlu0 16
        %2558 = vperm.xlu0 %2557, %v431
        %v2559 = vpop.permute.xlu0 %2558
        %v2561 = vmul.f32 %v2559, %v2515
        %v2562 = vmul.f32 %v2559, %v2555
        %v2563 = vadd.f32 %v2410, %v2561
        %v2564 = vadd.f32 %v2411, %v2562
        %s2565 = scalar_lea.vmem [#allocation6], 3584
        %v2566 = vld [vmem:[%s2565] sm:$0xff]
        %v2567 = vld [vmem:[%s2565 + $0x8] sm:$0xff]
        %v2568 = vld [vmem:[%s2565 + $0x10] sm:$0xff]
        %v2569 = vld [vmem:[%s2565 + $0x18] sm:$0xff]
        %v2570 = vld [vmem:[%s2565 + $0x20] sm:$0xff]
        %v2571 = vld [vmem:[%s2565 + $0x28] sm:$0xff]
        %v2572 = vld [vmem:[%s2565 + $0x30] sm:$0xff]
        %v2573 = vld [vmem:[%s2565 + $0x38] sm:$0xff]
        %v2574 = vld [vmem:[%s2565 + $0x40] sm:$0xff]
        %v2575 = vld [vmem:[%s2565 + $0x48] sm:$0xff]
        %v2576 = vld [vmem:[%s2565 + $0x50] sm:$0xff]
        %v2577 = vld [vmem:[%s2565 + $0x58] sm:$0xff]
        %v2578 = vld [vmem:[%s2565 + $0x60] sm:$0xff]
        %v2579 = vld [vmem:[%s2565 + $0x68] sm:$0xff]
        %v2580 = vld [vmem:[%s2565 + $0x70] sm:$0xff]
        %v2581 = vld [vmem:[%s2565 + $0x78] sm:$0xff]
        %v2582 = vld [vmem:[%s2565 + $0x80] sm:$0xff]
        %v2583 = vld [vmem:[%s2565 + $0x88] sm:$0xff]
        %v2584 = vld [vmem:[%s2565 + $0x90] sm:$0xff]
        %v2585 = vld [vmem:[%s2565 + $0x98] sm:$0xff]
        %v2586 = vld [vmem:[%s2565 + $0xa0] sm:$0xff]
        %v2587 = vld [vmem:[%s2565 + $0xa8] sm:$0xff]
        %v2588 = vld [vmem:[%s2565 + $0xb0] sm:$0xff]
        %v2589 = vld [vmem:[%s2565 + $0xb8] sm:$0xff]
        %v2590 = vld [vmem:[%s2565 + $0xc0] sm:$0xff]
        %v2591 = vld [vmem:[%s2565 + $0xc8] sm:$0xff]
        %v2592 = vld [vmem:[%s2565 + $0xd0] sm:$0xff]
        %v2593 = vld [vmem:[%s2565 + $0xd8] sm:$0xff]
        %v2594 = vld [vmem:[%s2565 + $0xe0] sm:$0xff]
        %v2595 = vld [vmem:[%s2565 + $0xe8] sm:$0xff]
        %v2596 = vld [vmem:[%s2565 + $0xf0] sm:$0xff]
        %v2597 = vld [vmem:[%s2565 + $0xf8] sm:$0xff]
        %v2598 = vld [vmem:[%s2565 + $0x100] sm:$0xff]
        %v2599 = vld [vmem:[%s2565 + $0x108] sm:$0xff]
        %v2600 = vld [vmem:[%s2565 + $0x110] sm:$0xff]
        %v2601 = vld [vmem:[%s2565 + $0x118] sm:$0xff]
        %v2602 = vld [vmem:[%s2565 + $0x120] sm:$0xff]
        %v2603 = vld [vmem:[%s2565 + $0x128] sm:$0xff]
        %v2604 = vld [vmem:[%s2565 + $0x130] sm:$0xff]
        %v2605 = vld [vmem:[%s2565 + $0x138] sm:$0xff]
        %v2606 = vld [vmem:[%s2565 + $0x140] sm:$0xff]
        %v2607 = vld [vmem:[%s2565 + $0x148] sm:$0xff]
        %v2608 = vld [vmem:[%s2565 + $0x150] sm:$0xff]
        %v2609 = vld [vmem:[%s2565 + $0x158] sm:$0xff]
        %v2610 = vld [vmem:[%s2565 + $0x160] sm:$0xff]
        %v2611 = vld [vmem:[%s2565 + $0x168] sm:$0xff]
        %v2612 = vld [vmem:[%s2565 + $0x170] sm:$0xff]
        %v2613 = vld [vmem:[%s2565 + $0x178] sm:$0xff]
        %v2614 = vld [vmem:[%s2565 + $0x180] sm:$0xff]
        %v2615 = vld [vmem:[%s2565 + $0x188] sm:$0xff]
        %v2616 = vld [vmem:[%s2565 + $0x190] sm:$0xff]
        %v2617 = vld [vmem:[%s2565 + $0x198] sm:$0xff]
        %v2618 = vld [vmem:[%s2565 + $0x1a0] sm:$0xff]
        %v2619 = vld [vmem:[%s2565 + $0x1a8] sm:$0xff]
        %v2620 = vld [vmem:[%s2565 + $0x1b0] sm:$0xff]
        %v2621 = vld [vmem:[%s2565 + $0x1b8] sm:$0xff]
        %v2622 = vld [vmem:[%s2565 + $0x1c0] sm:$0xff]
        %v2623 = vld [vmem:[%s2565 + $0x1c8] sm:$0xff]
        %v2624 = vld [vmem:[%s2565 + $0x1d0] sm:$0xff]
        %v2625 = vld [vmem:[%s2565 + $0x1d8] sm:$0xff]
        %v2626 = vld [vmem:[%s2565 + $0x1e0] sm:$0xff]
        %v2627 = vld [vmem:[%s2565 + $0x1e8] sm:$0xff]
        %v2628 = vld [vmem:[%s2565 + $0x1f0] sm:$0xff]
        %v2629 = vld [vmem:[%s2565 + $0x1f8] sm:$0xff]
        %2630 = vmatpush.msra.mxu0 %v2596
        %2631 = vmatpush.msra.mxu0 %v2594
        %2632 = vmatpush.msra.mxu0 %v2592
        %2633 = vmatpush.msra.mxu0 %v2590
        %2634 = vmatpush.msra.mxu0 %v2588
        %2635 = vmatpush.msra.mxu0 %v2586
        %2636 = vmatpush.msra.mxu0 %v2584
        %2637 = vmatpush.msra.mxu0 %v2582
        %2638 = vmatpush.msra.mxu0 %v2580
        %2639 = vmatpush.msra.mxu0 %v2578
        %2640 = vmatpush.msra.mxu0 %v2576
        %2641 = vmatpush.msra.mxu0 %v2574
        %2642 = vmatpush.msra.mxu0 %v2572
        %2643 = vmatpush.msra.mxu0 %v2570
        %2644 = vmatpush.msra.mxu0 %v2568
        %2645 = vmatpush.msra.mxu0 %v2566
        %2646 = vmatmul.f32.gmra.mxu0 %v1475
        %v2647 = vpop.f32.mrf.mxu0
        %v2648 = vadd.f32 0.0, %v2647
        %2649 = vdwg.mxu0
        %2650 = vmatpush.msra.mxu0 %v2628
        %2651 = vmatpush.msra.mxu0 %v2626
        %2652 = vmatpush.msra.mxu0 %v2624
        %2653 = vmatpush.msra.mxu0 %v2622
        %2654 = vmatpush.msra.mxu0 %v2620
        %2655 = vmatpush.msra.mxu0 %v2618
        %2656 = vmatpush.msra.mxu0 %v2616
        %2657 = vmatpush.msra.mxu0 %v2614
        %2658 = vmatpush.msra.mxu0 %v2612
        %2659 = vmatpush.msra.mxu0 %v2610
        %2660 = vmatpush.msra.mxu0 %v2608
        %2661 = vmatpush.msra.mxu0 %v2606
        %2662 = vmatpush.msra.mxu0 %v2604
        %2663 = vmatpush.msra.mxu0 %v2602
        %2664 = vmatpush.msra.mxu0 %v2600
        %2665 = vmatpush.msra.mxu0 %v2598
        %2666 = vmatmul.f32.gmra.mxu0 %v1495
        %v2667 = vpop.f32.mrf.mxu0
        %v2668 = vadd.f32 %v2648, %v2667
        %2669 = vdwg.mxu0
        %2670 = vmatpush.msra.mxu0 %v2597
        %2671 = vmatpush.msra.mxu0 %v2595
        %2672 = vmatpush.msra.mxu0 %v2593
        %2673 = vmatpush.msra.mxu0 %v2591
        %2674 = vmatpush.msra.mxu0 %v2589
        %2675 = vmatpush.msra.mxu0 %v2587
        %2676 = vmatpush.msra.mxu0 %v2585
        %2677 = vmatpush.msra.mxu0 %v2583
        %2678 = vmatpush.msra.mxu0 %v2581
        %2679 = vmatpush.msra.mxu0 %v2579
        %2680 = vmatpush.msra.mxu0 %v2577
        %2681 = vmatpush.msra.mxu0 %v2575
        %2682 = vmatpush.msra.mxu0 %v2573
        %2683 = vmatpush.msra.mxu0 %v2571
        %2684 = vmatpush.msra.mxu0 %v2569
        %2685 = vmatpush.msra.mxu0 %v2567
        %2686 = vmatmul.f32.gmra.mxu0 %v1475
        %v2687 = vpop.f32.mrf.mxu0
        %v2688 = vadd.f32 0.0, %v2687
        %2689 = vdwg.mxu0
        %2690 = vmatpush.msra.mxu0 %v2629
        %2691 = vmatpush.msra.mxu0 %v2627
        %2692 = vmatpush.msra.mxu0 %v2625
        %2693 = vmatpush.msra.mxu0 %v2623
        %2694 = vmatpush.msra.mxu0 %v2621
        %2695 = vmatpush.msra.mxu0 %v2619
        %2696 = vmatpush.msra.mxu0 %v2617
        %2697 = vmatpush.msra.mxu0 %v2615
        %2698 = vmatpush.msra.mxu0 %v2613
        %2699 = vmatpush.msra.mxu0 %v2611
        %2700 = vmatpush.msra.mxu0 %v2609
        %2701 = vmatpush.msra.mxu0 %v2607
        %2702 = vmatpush.msra.mxu0 %v2605
        %2703 = vmatpush.msra.mxu0 %v2603
        %2704 = vmatpush.msra.mxu0 %v2601
        %2705 = vmatpush.msra.mxu0 %v2599
        %2706 = vmatmul.f32.gmra.mxu0 %v1495
        %v2707 = vpop.f32.mrf.mxu0
        %v2708 = vadd.f32 %v2688, %v2707
        %2709 = vdwg.mxu0
        %2710 = vset.pattern.permute.xlu0 17
        %2711 = vperm.xlu0 %2710, %v431
        %v2712 = vpop.permute.xlu0 %2711
        %v2714 = vmul.f32 %v2712, %v2668
        %v2715 = vmul.f32 %v2712, %v2708
        %v2716 = vadd.f32 %v2563, %v2714
        %v2717 = vadd.f32 %v2564, %v2715
        %s2718 = scalar_lea.vmem [#allocation6], 4096
        %v2719 = vld [vmem:[%s2718] sm:$0xff]
        %v2720 = vld [vmem:[%s2718 + $0x8] sm:$0xff]
        %v2721 = vld [vmem:[%s2718 + $0x10] sm:$0xff]
        %v2722 = vld [vmem:[%s2718 + $0x18] sm:$0xff]
        %v2723 = vld [vmem:[%s2718 + $0x20] sm:$0xff]
        %v2724 = vld [vmem:[%s2718 + $0x28] sm:$0xff]
        %v2725 = vld [vmem:[%s2718 + $0x30] sm:$0xff]
        %v2726 = vld [vmem:[%s2718 + $0x38] sm:$0xff]
        %v2727 = vld [vmem:[%s2718 + $0x40] sm:$0xff]
        %v2728 = vld [vmem:[%s2718 + $0x48] sm:$0xff]
        %v2729 = vld [vmem:[%s2718 + $0x50] sm:$0xff]
        %v2730 = vld [vmem:[%s2718 + $0x58] sm:$0xff]
        %v2731 = vld [vmem:[%s2718 + $0x60] sm:$0xff]
        %v2732 = vld [vmem:[%s2718 + $0x68] sm:$0xff]
        %v2733 = vld [vmem:[%s2718 + $0x70] sm:$0xff]
        %v2734 = vld [vmem:[%s2718 + $0x78] sm:$0xff]
        %v2735 = vld [vmem:[%s2718 + $0x80] sm:$0xff]
        %v2736 = vld [vmem:[%s2718 + $0x88] sm:$0xff]
        %v2737 = vld [vmem:[%s2718 + $0x90] sm:$0xff]
        %v2738 = vld [vmem:[%s2718 + $0x98] sm:$0xff]
        %v2739 = vld [vmem:[%s2718 + $0xa0] sm:$0xff]
        %v2740 = vld [vmem:[%s2718 + $0xa8] sm:$0xff]
        %v2741 = vld [vmem:[%s2718 + $0xb0] sm:$0xff]
        %v2742 = vld [vmem:[%s2718 + $0xb8] sm:$0xff]
        %v2743 = vld [vmem:[%s2718 + $0xc0] sm:$0xff]
        %v2744 = vld [vmem:[%s2718 + $0xc8] sm:$0xff]
        %v2745 = vld [vmem:[%s2718 + $0xd0] sm:$0xff]
        %v2746 = vld [vmem:[%s2718 + $0xd8] sm:$0xff]
        %v2747 = vld [vmem:[%s2718 + $0xe0] sm:$0xff]
        %v2748 = vld [vmem:[%s2718 + $0xe8] sm:$0xff]
        %v2749 = vld [vmem:[%s2718 + $0xf0] sm:$0xff]
        %v2750 = vld [vmem:[%s2718 + $0xf8] sm:$0xff]
        %v2751 = vld [vmem:[%s2718 + $0x100] sm:$0xff]
        %v2752 = vld [vmem:[%s2718 + $0x108] sm:$0xff]
        %v2753 = vld [vmem:[%s2718 + $0x110] sm:$0xff]
        %v2754 = vld [vmem:[%s2718 + $0x118] sm:$0xff]
        %v2755 = vld [vmem:[%s2718 + $0x120] sm:$0xff]
        %v2756 = vld [vmem:[%s2718 + $0x128] sm:$0xff]
        %v2757 = vld [vmem:[%s2718 + $0x130] sm:$0xff]
        %v2758 = vld [vmem:[%s2718 + $0x138] sm:$0xff]
        %v2759 = vld [vmem:[%s2718 + $0x140] sm:$0xff]
        %v2760 = vld [vmem:[%s2718 + $0x148] sm:$0xff]
        %v2761 = vld [vmem:[%s2718 + $0x150] sm:$0xff]
        %v2762 = vld [vmem:[%s2718 + $0x158] sm:$0xff]
        %v2763 = vld [vmem:[%s2718 + $0x160] sm:$0xff]
        %v2764 = vld [vmem:[%s2718 + $0x168] sm:$0xff]
        %v2765 = vld [vmem:[%s2718 + $0x170] sm:$0xff]
        %v2766 = vld [vmem:[%s2718 + $0x178] sm:$0xff]
        %v2767 = vld [vmem:[%s2718 + $0x180] sm:$0xff]
        %v2768 = vld [vmem:[%s2718 + $0x188] sm:$0xff]
        %v2769 = vld [vmem:[%s2718 + $0x190] sm:$0xff]
        %v2770 = vld [vmem:[%s2718 + $0x198] sm:$0xff]
        %v2771 = vld [vmem:[%s2718 + $0x1a0] sm:$0xff]
        %v2772 = vld [vmem:[%s2718 + $0x1a8] sm:$0xff]
        %v2773 = vld [vmem:[%s2718 + $0x1b0] sm:$0xff]
        %v2774 = vld [vmem:[%s2718 + $0x1b8] sm:$0xff]
        %v2775 = vld [vmem:[%s2718 + $0x1c0] sm:$0xff]
        %v2776 = vld [vmem:[%s2718 + $0x1c8] sm:$0xff]
        %v2777 = vld [vmem:[%s2718 + $0x1d0] sm:$0xff]
        %v2778 = vld [vmem:[%s2718 + $0x1d8] sm:$0xff]
        %v2779 = vld [vmem:[%s2718 + $0x1e0] sm:$0xff]
        %v2780 = vld [vmem:[%s2718 + $0x1e8] sm:$0xff]
        %v2781 = vld [vmem:[%s2718 + $0x1f0] sm:$0xff]
        %v2782 = vld [vmem:[%s2718 + $0x1f8] sm:$0xff]
        %2783 = vmatpush.msra.mxu0 %v2749
        %2784 = vmatpush.msra.mxu0 %v2747
        %2785 = vmatpush.msra.mxu0 %v2745
        %2786 = vmatpush.msra.mxu0 %v2743
        %2787 = vmatpush.msra.mxu0 %v2741
        %2788 = vmatpush.msra.mxu0 %v2739
        %2789 = vmatpush.msra.mxu0 %v2737
        %2790 = vmatpush.msra.mxu0 %v2735
        %2791 = vmatpush.msra.mxu0 %v2733
        %2792 = vmatpush.msra.mxu0 %v2731
        %2793 = vmatpush.msra.mxu0 %v2729
        %2794 = vmatpush.msra.mxu0 %v2727
        %2795 = vmatpush.msra.mxu0 %v2725
        %2796 = vmatpush.msra.mxu0 %v2723
        %2797 = vmatpush.msra.mxu0 %v2721
        %2798 = vmatpush.msra.mxu0 %v2719
        %2799 = vmatmul.f32.gmra.mxu0 %v1475
        %v2800 = vpop.f32.mrf.mxu0
        %v2801 = vadd.f32 0.0, %v2800
        %2802 = vdwg.mxu0
        %2803 = vmatpush.msra.mxu0 %v2781
        %2804 = vmatpush.msra.mxu0 %v2779
        %2805 = vmatpush.msra.mxu0 %v2777
        %2806 = vmatpush.msra.mxu0 %v2775
        %2807 = vmatpush.msra.mxu0 %v2773
        %2808 = vmatpush.msra.mxu0 %v2771
        %2809 = vmatpush.msra.mxu0 %v2769
        %2810 = vmatpush.msra.mxu0 %v2767
        %2811 = vmatpush.msra.mxu0 %v2765
        %2812 = vmatpush.msra.mxu0 %v2763
        %2813 = vmatpush.msra.mxu0 %v2761
        %2814 = vmatpush.msra.mxu0 %v2759
        %2815 = vmatpush.msra.mxu0 %v2757
        %2816 = vmatpush.msra.mxu0 %v2755
        %2817 = vmatpush.msra.mxu0 %v2753
        %2818 = vmatpush.msra.mxu0 %v2751
        %2819 = vmatmul.f32.gmra.mxu0 %v1495
        %v2820 = vpop.f32.mrf.mxu0
        %v2821 = vadd.f32 %v2801, %v2820
        %2822 = vdwg.mxu0
        %2823 = vmatpush.msra.mxu0 %v2750
        %2824 = vmatpush.msra.mxu0 %v2748
        %2825 = vmatpush.msra.mxu0 %v2746
        %2826 = vmatpush.msra.mxu0 %v2744
        %2827 = vmatpush.msra.mxu0 %v2742
        %2828 = vmatpush.msra.mxu0 %v2740
        %2829 = vmatpush.msra.mxu0 %v2738
        %2830 = vmatpush.msra.mxu0 %v2736
        %2831 = vmatpush.msra.mxu0 %v2734
        %2832 = vmatpush.msra.mxu0 %v2732
        %2833 = vmatpush.msra.mxu0 %v2730
        %2834 = vmatpush.msra.mxu0 %v2728
        %2835 = vmatpush.msra.mxu0 %v2726
        %2836 = vmatpush.msra.mxu0 %v2724
        %2837 = vmatpush.msra.mxu0 %v2722
        %2838 = vmatpush.msra.mxu0 %v2720
        %2839 = vmatmul.f32.gmra.mxu0 %v1475
        %v2840 = vpop.f32.mrf.mxu0
        %v2841 = vadd.f32 0.0, %v2840
        %2842 = vdwg.mxu0
        %2843 = vmatpush.msra.mxu0 %v2782
        %2844 = vmatpush.msra.mxu0 %v2780
        %2845 = vmatpush.msra.mxu0 %v2778
        %2846 = vmatpush.msra.mxu0 %v2776
        %2847 = vmatpush.msra.mxu0 %v2774
        %2848 = vmatpush.msra.mxu0 %v2772
        %2849 = vmatpush.msra.mxu0 %v2770
        %2850 = vmatpush.msra.mxu0 %v2768
        %2851 = vmatpush.msra.mxu0 %v2766
        %2852 = vmatpush.msra.mxu0 %v2764
        %2853 = vmatpush.msra.mxu0 %v2762
        %2854 = vmatpush.msra.mxu0 %v2760
        %2855 = vmatpush.msra.mxu0 %v2758
        %2856 = vmatpush.msra.mxu0 %v2756
        %2857 = vmatpush.msra.mxu0 %v2754
        %2858 = vmatpush.msra.mxu0 %v2752
        %2859 = vmatmul.f32.gmra.mxu0 %v1495
        %v2860 = vpop.f32.mrf.mxu0
        %v2861 = vadd.f32 %v2841, %v2860
        %2862 = vdwg.mxu0
        %2863 = vset.pattern.permute.xlu0 18
        %2864 = vperm.xlu0 %2863, %v431
        %v2865 = vpop.permute.xlu0 %2864
        %v2867 = vmul.f32 %v2865, %v2821
        %v2868 = vmul.f32 %v2865, %v2861
        %v2869 = vadd.f32 %v2716, %v2867
        %v2870 = vadd.f32 %v2717, %v2868
        %2871 = vset.pattern.permute.xlu0 16
        %2872 = vperm.xlu0 %2871, %v430
        %v2873 = vpop.permute.xlu0 %2872
        %v2875 = vadd.f32 %v2869, %v2873
        %v2876 = vadd.f32 %v2870, %v2873
        %v2877 = vmul.f32 %v2875, 0.5
        %v2878 = vmul.f32 %v2876, 0.5
        %v2879 = vmul.f32 %v2875, 0.044715
        %v2880 = vmul.f32 %v2876, 0.044715
        %v2881 = vmul.f32 %v2879, %v2875
        %v2882 = vmul.f32 %v2880, %v2876
        %v2883 = vmul.f32 %v2881, %v2875
        %v2884 = vmul.f32 %v2882, %v2876
        %v2885 = vadd.f32 %v2875, %v2883
        %v2886 = vadd.f32 %v2876, %v2884
        %v2887 = vmul.f32 %v2885, 0.7978846
        %v2888 = vmul.f32 %v2886, 0.7978846
        %v2889 = vtanh.pop %v2887
        %v2890 = vtanh.pop %v2888
        %v2891 = vadd.f32 %v2889, 1.0
        %v2892 = vadd.f32 %v2890, 1.0
        %v2893 = vmul.f32 %v2877, %v2891
        %v2894 = vmul.f32 %v2878, %v2892
        %s2895 = scalar_lea.vmem %s6, 32
        %v2896 = vld [vmem:[%s2895] sm:$0xf]
        %2897 = vset.pattern.permute.xlu0 17
        %2898 = vperm.xlu0 %2897, %v430
        %v2899 = vpop.permute.xlu0 %2898
        %v2902 = vsel %vm529, %v2896, 0
        %v2905 = vsel %vm533, %v2893, 0
        %v2908 = vsel %vm533, %v2894, 0
        %2910 = vmatpush.msra.mxu0 0.0
        %2911 = vmatpush.msra.mxu0 0.0
        %2912 = vmatpush.msra.mxu0 0.0
        %2913 = vmatpush.msra.mxu0 0.0
        %2914 = vmatpush.msra.mxu0 0.0
        %2915 = vmatpush.msra.mxu0 0.0
        %2916 = vmatpush.msra.mxu0 0.0
        %2917 = vmatpush.msra.mxu0 0.0
        %2918 = vmatpush.msra.mxu0 0.0
        %2919 = vmatpush.msra.mxu0 0.0
        %2920 = vmatpush.msra.mxu0 0.0
        %2921 = vmatpush.msra.mxu0 0.0
        %2922 = vmatpush.msra.mxu0 0.0
        %2923 = vmatpush.msra.mxu0 0.0
        %2924 = vmatpush.msra.mxu0 0.0
        %2925 = vmatpush.msra.mxu0 %v2905
        %2926 = vmatmul.f32.gmra.mxu0 %v2902
        %v2927 = vpop.f32.mrf.mxu0
        %v2928 = vadd.f32 %v2899, %v2927
        %2929 = vdwg.mxu0
        %2930 = vmatpush.msra.mxu0 0.0
        %2931 = vmatpush.msra.mxu0 0.0
        %2932 = vmatpush.msra.mxu0 0.0
        %2933 = vmatpush.msra.mxu0 0.0
        %2934 = vmatpush.msra.mxu0 0.0
        %2935 = vmatpush.msra.mxu0 0.0
        %2936 = vmatpush.msra.mxu0 0.0
        %2937 = vmatpush.msra.mxu0 0.0
        %2938 = vmatpush.msra.mxu0 0.0
        %2939 = vmatpush.msra.mxu0 0.0
        %2940 = vmatpush.msra.mxu0 0.0
        %2941 = vmatpush.msra.mxu0 0.0
        %2942 = vmatpush.msra.mxu0 0.0
        %2943 = vmatpush.msra.mxu0 0.0
        %2944 = vmatpush.msra.mxu0 0.0
        %2945 = vmatpush.msra.mxu0 %v2908
        %2946 = vmatmul.f32.gmra.mxu0 %v2902
        %v2947 = vpop.f32.mrf.mxu0
        %v2948 = vadd.f32 %v2899, %v2947
        %2949 = vdwg.mxu0
        %2950 = vset.pattern.permute.xlu0 18
        %2951 = vperm.xlu0 %2950, %v430
        %v2952 = vpop.permute.xlu0 %2951
        %v2954 = vmul.f32 %v2928, %v2952
        %v2955 = vmul.f32 %v2948, %v2952
        %2956 = vset.pattern.permute.xlu0 19
        %2957 = vperm.xlu0 %2956, %v430
        %v2958 = vpop.permute.xlu0 %2957
        %v2960 = vadd.f32 %v2954, %v2958
        %v2961 = vadd.f32 %v2955, %v2958
        %v2962 = vadd.f32 %v2960, %v1475
        %v2963 = vadd.f32 %v2961, %v1495
        %v2966 = vrot.slane %v2963, 4
        %v2967 = vsel %vm533, %v2962, %v2966
        %2969 = vst [vmem:[%s428] sm:$0xff] %v2967
        %p2970 = scmp.lt.s32.totalorder %s24, 1
        %s2971 = scalar_select %p2970, %s24, 1
        %s2972 = smul.addr %s2971, 2
        %s2973 = smul.addr %s2972, 4
        %s2974 = scalar_lea.vmem %s9, %s2973
        // Predicated region
        $region81: #{cpgm_forward.1} parent=55 // pred_check
          %p2975 = pneg %p236
        $region82: #{cpgm_forward.1} parent=55 // pred_check_branch
          %2977 = sbr.rel (%p2975) target = $region84
        $region83: #{cpgm_forward.1} parent=55 // pred_region
          _
        $region84: #{cpgm_forward.1} parent=55 // pred_fallthru
          _
      $region56: #{cpgm_forward.1} parent=5 // pred_fallthru
        _
      %p2978 = scmp.le.s32.totalorder 2, %s19
      // Predicated region
      $region85: #{cpgm_forward.1} parent=5 // pred_check
        %p2979 = pneg %p2978
      $region86: #{cpgm_forward.1} parent=5 // pred_check_branch
        %2981 = sbr.rel (%p2979) target = $region88
      $region87: #{cpgm_forward.1} parent=5 // pred_region
        %s2982 = ssub.s32 %s19, 2
        // Predicated region
        $region89: #{cpgm_forward.1} parent=87 // pred_check
          %p2983 = pneg %p242
        $region90: #{cpgm_forward.1} parent=87 // pred_check_branch
          %2985 = sbr.rel (%p2983) target = $region92
        $region91: #{cpgm_forward.1} parent=87 // pred_region
          %p2986 = scmp.lt.s32.totalorder %s25, 1
          %s2987 = scalar_select %p2986, %s25, 1
          %s2988 = smul.addr %s2987, 2
          %s2989 = smul.addr %s2988, 4
          %s2990 = scalar_lea.vmem %s9, %s2989
        $region92: #{cpgm_forward.1} parent=87 // pred_fallthru
          _
      $region88: #{cpgm_forward.1} parent=5 // pred_fallthru
        _
    $region6: #{cpgm_forward.1} parent=1 // loop_footer
      %s23 = sadd.s32 1, %s19
    $region7: #{cpgm_forward.1} parent=1 // loop_footer_branch
      %18 = sbr.rel target = $region3
    $region8: #{cpgm_forward.1} parent=1 // loop_exit
      _
    %2991 = vsyncpa [#allocation3], 1
    %s2992 = scalar_lea.sflag [#allocation3], 1
    %2993 = vsyncpa %s2992, 1
    %2994 = vsyncpa [#allocation5], 1
    %2995 = vsyncpa [#allocation8], 1
    %2996 = vsyncpa [#allocation11], 1

</llo_original>
